<compile_context>
chip_gen: v7x
topology: tpu7x:2x2x1
jax: 0.10.0
libtpu: 0.0.40
codegen_flags: <defaults>
</compile_context>

<pallas_src>
import math
import functools

import jax
import jax.numpy as jnp
from jax import lax
from jax.experimental import pallas as pl
from jax.experimental.pallas import tpu as pltpu


def _attn_kernel(x_ref, wqkv_ref, bqkv_ref, wo_ref, bo_ref, out_ref,
                 *, n_heads, d_keys, mask_flag, compute_dtype):
    """One grid step = BN_TILE independent temporal sequences.

    x_ref    : [BT, T, D]  activations for BT = BN_TILE (batch*node) sequences
    wqkv_ref : [D, 3D]     fused Wq|Wk|Wv (pre-transposed, [in, out])
    bqkv_ref : [1, 3D]     fused bias (f32)
    wo_ref   : [D, D]      output projection ([in, out])
    bo_ref   : [1, D]      output bias (f32)
    out_ref  : [BT, T, D]
    """
    BT, T, D = x_ref.shape
    H, dk = n_heads, d_keys
    R = BT * T
    cdt = compute_dtype

    # ---- fused QKV projection: one MXU pass over all BT*T rows --------------
    x2 = x_ref[...].reshape(R, D).astype(cdt)
    qkv = jnp.dot(x2, wqkv_ref[...], preferred_element_type=jnp.float32)
    qkv = qkv + bqkv_ref[...]                                  # [R, 3D], f32

    scale = 1.0 / math.sqrt(dk)

    # Causal mask (upper triangle masked), built once per grid step.
    row = lax.broadcasted_iota(jnp.int32, (T, T), 0)
    col = lax.broadcasted_iota(jnp.int32, (T, T), 1)
    keep = col <= row                                          # [T, T]

    wo = wo_ref[...]                                           # [D, D]
    y = jnp.zeros((R, D), jnp.float32)

    # Static per-head loop (small H); every step is batched over the BT
    # sequences via single-batch-dim einsums, and each head's output is folded
    # straight into the output projection — no lane-axis concat.
    for h in range(H):
        q_h = qkv[:, h * dk:(h + 1) * dk].reshape(BT, T, dk).astype(cdt)
        k_h = qkv[:, D + h * dk:D + (h + 1) * dk].reshape(BT, T, dk).astype(cdt)
        v_h = qkv[:, 2 * D + h * dk:2 * D + (h + 1) * dk].reshape(BT, T, dk).astype(cdt)

        s = jnp.einsum('bik,bjk->bij', q_h, k_h,
                       preferred_element_type=jnp.float32) * scale   # [BT,T,T]

        # -inf-free masked softmax (mask the exponentials, not the scores).
        m = jnp.max(s, axis=-1, keepdims=True)
        e = jnp.exp(s - m)
        if mask_flag:
            e = jnp.where(keep[None], e, 0.0)
        p = e / jnp.sum(e, axis=-1, keepdims=True)                    # f32

        o_h = jnp.einsum('bij,bjk->bik', p.astype(cdt), v_h,
                         preferred_element_type=jnp.float32)          # [BT,T,dk]
        y = y + jnp.dot(o_h.reshape(R, dk).astype(cdt),
                        wo[h * dk:(h + 1) * dk, :],
                        preferred_element_type=jnp.float32)

    y = y + bo_ref[...]                                        # [R, D], f32
    out_ref[...] = y.reshape(BT, T, D).astype(out_ref.dtype)


def _choose_bn_tile(BN, T, D):
    """How many (batch*node) temporal sequences to process per grid step."""
    # Rough f32 VMEM estimate per sequence: double-buffered in+out blocks plus
    # live in-kernel values (fused qkv, one head's scores/probs, accumulator).
    bytes_per_seq = 4 * (2 * 2 * T * D + 3 * T * D + 2 * T * T + T * D)
    budget = 4 << 20            # stay far below the 32 MiB scoped default (and v7x's 64 MiB VMEM)
    bt = max(1, min(BN, budget // max(bytes_per_seq, 1)))
    # Keep >= 2 grid steps when possible so the "parallel" BN axis can shard
    # across v7x's two TensorCores.
    if BN >= 2:
        bt = min(bt, (BN + 1) // 2)
    return int(bt)


def temporal_cross_relation_attention(x, params, *, n_heads, mask_flag=True,
                                      compute_dtype=None, bn_tile=None):
    """Temporal masked full self-attention over T, applied per (batch, node).

    x      : [B, T, N, d_model]
    params : (Wq^T, bq, Wk^T, bk, Wv^T, bv, Wo^T, bo) — weights [in, out],
             biases [1, out] (nn.Linear weights pre-transposed).
    compute_dtype : e.g. jnp.bfloat16 for bf16 MXU operands on v6e/v7x
                    (accumulation and softmax stay f32). Default: x.dtype.
    Returns (out [B, T, N, d_model], None)   (output_attention=False).
    """
    B, T, N, D = x.shape
    H = n_heads
    dk = D // H
    BN = B * N
    out_dtype = x.dtype

    wq, bq, wk, bk, wv, bv, wo, bo = params
    # Host-side fusion of the three projections into one [D, 3D] matmul.
    wqkv = jnp.concatenate([wq, wk, wv], axis=1)
    bqkv = jnp.concatenate([bq, bk, bv], axis=1).astype(jnp.float32)
    bo32 = bo.astype(jnp.float32)

    if compute_dtype is None:
        compute_dtype = x.dtype
    wqkv = wqkv.astype(compute_dtype)
    wo_c = wo.astype(compute_dtype)

    # permute(0,2,1,3).reshape(-1, T, D): one temporal sequence per (batch, node).
    x_flat = jnp.transpose(x, (0, 2, 1, 3)).reshape(BN, T, D).astype(compute_dtype)

    bt = bn_tile if bn_tile is not None else _choose_bn_tile(BN, T, D)
    n_blocks = (BN + bt - 1) // bt
    BN_pad = n_blocks * bt
    if BN_pad != BN:
        x_flat = jnp.pad(x_flat, ((0, BN_pad - BN), (0, 0), (0, 0)))

    kernel = functools.partial(_attn_kernel, n_heads=H, d_keys=dk,
                               mask_flag=mask_flag, compute_dtype=compute_dtype)

    seq_spec = pl.BlockSpec((bt, T, D), lambda b: (b, 0, 0))

    out_flat = pl.pallas_call(
        kernel,
        out_shape=jax.ShapeDtypeStruct((BN_pad, T, D), out_dtype),
        grid_spec=pltpu.PrefetchScalarGridSpec(
            num_scalar_prefetch=0,
            grid=(n_blocks,),
            in_specs=[seq_spec,
                      pl.BlockSpec((D, 3 * D), lambda b: (0, 0)),
                      pl.BlockSpec((1, 3 * D), lambda b: (0, 0)),
                      pl.BlockSpec((D, D), lambda b: (0, 0)),
                      pl.BlockSpec((1, D), lambda b: (0, 0))],
            out_specs=seq_spec,
        ),
        compiler_params=pltpu.CompilerParams(
            dimension_semantics=("parallel",)),
    )(x_flat, wqkv, bqkv, wo_c, bo32)

    # reshape(B, N, T, D).permute(0, 2, 1, 3); drop any BN padding.
    out = jnp.transpose(out_flat[:BN].reshape(B, N, T, D), (0, 2, 1, 3))
    return out, None


def _reference(x, params, *, n_heads, mask_flag=True):
    """Pure-JAX reference mirroring the PyTorch forward (self-attention)."""
    B, T, N, D = x.shape
    H = n_heads
    dk = D // H
    wq, bq, wk, bk, wv, bv, wo, bo = params

    xf = jnp.transpose(x, (0, 2, 1, 3)).reshape(B * N, T, D)
    q = (xf @ wq + bq[0]).reshape(B * N, T, H, dk)
    k = (xf @ wk + bk[0]).reshape(B * N, T, H, dk)
    v = (xf @ wv + bv[0]).reshape(B * N, T, H, dk)
    scores = jnp.einsum("blhe,bshe->bhls", q, k)
    if mask_flag:
        causal = jnp.triu(jnp.ones((T, T), bool), k=1)
        scores = jnp.where(causal[None, None], -jnp.inf, scores)
    A = jax.nn.softmax(scores / math.sqrt(dk), axis=-1)
    out = jnp.einsum("bhls,bshd->blhd", A, v).reshape(B * N, T, H * dk)
    out = out @ wo + bo[0]
    return jnp.transpose(out.reshape(B, N, T, D), (0, 2, 1, 3))


if __name__ == "__main__":
    # Small shapes consistent with the module's forward.
    B, T, N, d_model, n_heads = 2, 8, 4, 32, 4

    key = jax.random.PRNGKey(0)
    ks = jax.random.split(key, 9)
    x = jax.random.normal(ks[0], (B, T, N, d_model), jnp.float32)

    # Deterministic parameter init (nn.Linear shapes, stored [in, out] + [1, out]).
    s = 1.0 / math.sqrt(d_model)
    params = (
        jax.random.uniform(ks[1], (d_model, d_model), jnp.float32, -s, s),   # Wq^T
        jax.random.uniform(ks[2], (1, d_model), jnp.float32, -s, s),         # bq
        jax.random.uniform(ks[3], (d_model, d_model), jnp.float32, -s, s),   # Wk^T
        jax.random.uniform(ks[4], (1, d_model), jnp.float32, -s, s),         # bk
        jax.random.uniform(ks[5], (d_model, d_model), jnp.float32, -s, s),   # Wv^T
        jax.random.uniform(ks[6], (1, d_model), jnp.float32, -s, s),         # bv
        jax.random.uniform(ks[7], (d_model, d_model), jnp.float32, -s, s),   # Wo^T
        jax.random.uniform(ks[8], (1, d_model), jnp.float32, -s, s),         # bo
    )

    ref = _reference(x, params, n_heads=n_heads, mask_flag=True)

    # f32 path (exact check).
    out, attn = temporal_cross_relation_attention(
        x, params, n_heads=n_heads, mask_flag=True)
    out = jax.block_until_ready(out)
    assert out.shape == (B, T, N, d_model)
    assert attn is None
    assert jnp.allclose(out, ref, atol=1e-4, rtol=1e-4), \
        f"f32 max err {jnp.max(jnp.abs(out - ref))}"

    # bf16 MXU-operand path (v6e/v7x optimization): f32 accumulation/softmax,
    # looser tolerance for the bf16 operand rounding.
    out_bf16, _ = temporal_cross_relation_attention(
        x, params, n_heads=n_heads, mask_flag=True, compute_dtype=jnp.bfloat16)
    out_bf16 = jax.block_until_ready(out_bf16)
    assert jnp.allclose(out_bf16.astype(jnp.float32), ref, atol=1e-1, rtol=1e-1), \
        f"bf16 max err {jnp.max(jnp.abs(out_bf16.astype(jnp.float32) - ref))}"

    print("KERNEL_OK")
</pallas_src>

<mosaic_0001>
module attributes {stable_mosaic.version = 11 : i64} {
  func.func @_attn_kernel(%arg0: i32, %arg1: memref<4x8x32xf32, #tpu.memory_space<vmem>>, %arg2: memref<32x96xf32, #tpu.memory_space<vmem>>, %arg3: memref<1x96xf32, #tpu.memory_space<vmem>>, %arg4: memref<32x32xf32, #tpu.memory_space<vmem>>, %arg5: memref<1x32xf32, #tpu.memory_space<vmem>>, %arg6: memref<4x8x32xf32, #tpu.memory_space<vmem>>) attributes {dimension_semantics = [#tpu.dimension_semantics<parallel>], iteration_bounds = array<i64: 2>, scalar_prefetch = 0 : i64, scratch_operands = 0 : i64, tpu.core_type = #tpu.core_type<tc>, window_params = [{transform_indices = @transform_0, window_bounds = array<i64: 4, 8, 32>}, {pipeline_mode = #tpu.pipeline_mode<synchronous>, transform_indices = @transform_1, window_bounds = array<i64: 32, 96>}, {pipeline_mode = #tpu.pipeline_mode<synchronous>, transform_indices = @transform_2, window_bounds = array<i64: 1, 96>}, {pipeline_mode = #tpu.pipeline_mode<synchronous>, transform_indices = @transform_3, window_bounds = array<i64: 32, 32>}, {pipeline_mode = #tpu.pipeline_mode<synchronous>, transform_indices = @transform_4, window_bounds = array<i64: 1, 32>}, {transform_indices = @transform_5, window_bounds = array<i64: 4, 8, 32>}]} {
    %c0 = arith.constant 0 : index
    %c0_0 = arith.constant 0 : index
    %c0_1 = arith.constant 0 : index
    %0 = vector.load %arg1[%c0, %c0_0, %c0_1] : memref<4x8x32xf32, #tpu.memory_space<vmem>>, vector<4x8x32xf32>
    %1 = vector.shape_cast %0 : vector<4x8x32xf32> to vector<32x32xf32>
    %c0_2 = arith.constant 0 : index
    %c0_3 = arith.constant 0 : index
    %2 = vector.load %arg2[%c0_2, %c0_3] : memref<32x96xf32, #tpu.memory_space<vmem>>, vector<32x96xf32>
    %cst = arith.constant dense<0.000000e+00> : vector<32x96xf32>
    %3 = tpu.matmul %1, %2, %cst {dimension_numbers = #tpu.dot_dimension_numbers<[1], [0], [0], [1], [0, 0, 1, 1], [], []>} : vector<32x32xf32>, vector<32x96xf32>, vector<32x96xf32> -> vector<32x96xf32>
    %c0_4 = arith.constant 0 : index
    %c0_5 = arith.constant 0 : index
    %4 = vector.load %arg3[%c0_4, %c0_5] : memref<1x96xf32, #tpu.memory_space<vmem>>, vector<1x96xf32>
    %5 = vector.broadcast %4 : vector<1x96xf32> to vector<32x96xf32>
    %6 = arith.addf %3, %5 : vector<32x96xf32>
    %7 = tpu.iota {dimensions = array<i32: 0>} : vector<8x8xi32>
    %8 = tpu.iota {dimensions = array<i32: 1>} : vector<8x8xi32>
    %9 = arith.cmpi sle, %8, %7 : vector<8x8xi32>
    %c0_6 = arith.constant 0 : index
    %c0_7 = arith.constant 0 : index
    %10 = vector.load %arg4[%c0_6, %c0_7] : memref<32x32xf32, #tpu.memory_space<vmem>>, vector<32x32xf32>
    %cst_8 = arith.constant 0.000000e+00 : f32
    %11 = vector.broadcast %cst_8 : f32 to vector<32x32xf32>
    %12 = vector.extract_strided_slice %6 {offsets = [0, 0], sizes = [32, 8], strides = [1, 1]} : vector<32x96xf32> to vector<32x8xf32>
    %13 = vector.shape_cast %12 : vector<32x8xf32> to vector<4x8x8xf32>
    %14 = vector.extract_strided_slice %6 {offsets = [0, 32], sizes = [32, 8], strides = [1, 1]} : vector<32x96xf32> to vector<32x8xf32>
    %15 = vector.shape_cast %14 : vector<32x8xf32> to vector<4x8x8xf32>
    %16 = vector.extract_strided_slice %6 {offsets = [0, 64], sizes = [32, 8], strides = [1, 1]} : vector<32x96xf32> to vector<32x8xf32>
    %17 = vector.shape_cast %16 : vector<32x8xf32> to vector<4x8x8xf32>
    "tpu.trace_start"() <{level = 10 : i32, message = "bik,bjk->bij"}> : () -> ()
    %cst_9 = arith.constant dense<0.000000e+00> : vector<4x8x8xf32>
    %18 = tpu.matmul %13, %15, %cst_9 {dimension_numbers = #tpu.dot_dimension_numbers<[2], [2], [1], [1], [0, 0, 0, 1, 1, 1], [0], [0]>} : vector<4x8x8xf32>, vector<4x8x8xf32>, vector<4x8x8xf32> -> vector<4x8x8xf32>
    "tpu.trace_stop"() : () -> ()
    %cst_10 = arith.constant 0.353553385 : f32
    %19 = vector.broadcast %cst_10 : f32 to vector<4x8x8xf32>
    %20 = arith.mulf %18, %19 : vector<4x8x8xf32>
    %cst_11 = arith.constant dense<0xFF800000> : vector<4x8xf32>
    %21 = vector.multi_reduction <maximumf>, %20, %cst_11 [2] : vector<4x8x8xf32> to vector<4x8xf32>
    %22 = vector.shape_cast %21 : vector<4x8xf32> to vector<4x8x1xf32>
    %23 = vector.broadcast %22 : vector<4x8x1xf32> to vector<4x8x8xf32>
    %24 = arith.subf %20, %23 : vector<4x8x8xf32>
    %25 = math.exp %24 : vector<4x8x8xf32>
    %26 = vector.shape_cast %9 : vector<8x8xi1> to vector<1x8x8xi1>
    %cst_12 = arith.constant 0.000000e+00 : f32
    %27 = vector.shape_cast %26 : vector<1x8x8xi1> to vector<1x8x8xi1>
    %28 = vector.broadcast %27 : vector<1x8x8xi1> to vector<4x8x8xi1>
    %29 = vector.broadcast %cst_12 : f32 to vector<4x8x8xf32>
    %30 = arith.select %28, %25, %29 : vector<4x8x8xi1>, vector<4x8x8xf32>
    %cst_13 = arith.constant dense<0.000000e+00> : vector<4x8xf32>
    %31 = vector.multi_reduction <add>, %30, %cst_13 [2] : vector<4x8x8xf32> to vector<4x8xf32>
    %32 = vector.shape_cast %31 : vector<4x8xf32> to vector<4x8x1xf32>
    %33 = vector.broadcast %32 : vector<4x8x1xf32> to vector<4x8x8xf32>
    %34 = arith.divf %30, %33 : vector<4x8x8xf32>
    "tpu.trace_start"() <{level = 10 : i32, message = "bij,bjk->bik"}> : () -> ()
    %cst_14 = arith.constant dense<0.000000e+00> : vector<4x8x8xf32>
    %35 = tpu.matmul %34, %17, %cst_14 {dimension_numbers = #tpu.dot_dimension_numbers<[2], [1], [1], [2], [0, 0, 0, 1, 1, 2], [0], [0]>} : vector<4x8x8xf32>, vector<4x8x8xf32>, vector<4x8x8xf32> -> vector<4x8x8xf32>
    "tpu.trace_stop"() : () -> ()
    %36 = vector.shape_cast %35 : vector<4x8x8xf32> to vector<32x8xf32>
    %37 = vector.extract_strided_slice %10 {offsets = [0, 0], sizes = [8, 32], strides = [1, 1]} : vector<32x32xf32> to vector<8x32xf32>
    %cst_15 = arith.constant dense<0.000000e+00> : vector<32x32xf32>
    %38 = tpu.matmul %36, %37, %cst_15 {dimension_numbers = #tpu.dot_dimension_numbers<[1], [0], [0], [1], [0, 0, 1, 1], [], []>} : vector<32x8xf32>, vector<8x32xf32>, vector<32x32xf32> -> vector<32x32xf32>
    %39 = arith.addf %11, %38 : vector<32x32xf32>
    %40 = vector.extract_strided_slice %6 {offsets = [0, 8], sizes = [32, 8], strides = [1, 1]} : vector<32x96xf32> to vector<32x8xf32>
    %41 = vector.shape_cast %40 : vector<32x8xf32> to vector<4x8x8xf32>
    %42 = vector.extract_strided_slice %6 {offsets = [0, 40], sizes = [32, 8], strides = [1, 1]} : vector<32x96xf32> to vector<32x8xf32>
    %43 = vector.shape_cast %42 : vector<32x8xf32> to vector<4x8x8xf32>
    %44 = vector.extract_strided_slice %6 {offsets = [0, 72], sizes = [32, 8], strides = [1, 1]} : vector<32x96xf32> to vector<32x8xf32>
    %45 = vector.shape_cast %44 : vector<32x8xf32> to vector<4x8x8xf32>
    "tpu.trace_start"() <{level = 10 : i32, message = "bik,bjk->bij"}> : () -> ()
    %cst_16 = arith.constant dense<0.000000e+00> : vector<4x8x8xf32>
    %46 = tpu.matmul %41, %43, %cst_16 {dimension_numbers = #tpu.dot_dimension_numbers<[2], [2], [1], [1], [0, 0, 0, 1, 1, 1], [0], [0]>} : vector<4x8x8xf32>, vector<4x8x8xf32>, vector<4x8x8xf32> -> vector<4x8x8xf32>
    "tpu.trace_stop"() : () -> ()
    %cst_17 = arith.constant 0.353553385 : f32
    %47 = vector.broadcast %cst_17 : f32 to vector<4x8x8xf32>
    %48 = arith.mulf %46, %47 : vector<4x8x8xf32>
    %cst_18 = arith.constant dense<0xFF800000> : vector<4x8xf32>
    %49 = vector.multi_reduction <maximumf>, %48, %cst_18 [2] : vector<4x8x8xf32> to vector<4x8xf32>
    %50 = vector.shape_cast %49 : vector<4x8xf32> to vector<4x8x1xf32>
    %51 = vector.broadcast %50 : vector<4x8x1xf32> to vector<4x8x8xf32>
    %52 = arith.subf %48, %51 : vector<4x8x8xf32>
    %53 = math.exp %52 : vector<4x8x8xf32>
    %54 = vector.shape_cast %9 : vector<8x8xi1> to vector<1x8x8xi1>
    %cst_19 = arith.constant 0.000000e+00 : f32
    %55 = vector.shape_cast %54 : vector<1x8x8xi1> to vector<1x8x8xi1>
    %56 = vector.broadcast %55 : vector<1x8x8xi1> to vector<4x8x8xi1>
    %57 = vector.broadcast %cst_19 : f32 to vector<4x8x8xf32>
    %58 = arith.select %56, %53, %57 : vector<4x8x8xi1>, vector<4x8x8xf32>
    %cst_20 = arith.constant dense<0.000000e+00> : vector<4x8xf32>
    %59 = vector.multi_reduction <add>, %58, %cst_20 [2] : vector<4x8x8xf32> to vector<4x8xf32>
    %60 = vector.shape_cast %59 : vector<4x8xf32> to vector<4x8x1xf32>
    %61 = vector.broadcast %60 : vector<4x8x1xf32> to vector<4x8x8xf32>
    %62 = arith.divf %58, %61 : vector<4x8x8xf32>
    "tpu.trace_start"() <{level = 10 : i32, message = "bij,bjk->bik"}> : () -> ()
    %cst_21 = arith.constant dense<0.000000e+00> : vector<4x8x8xf32>
    %63 = tpu.matmul %62, %45, %cst_21 {dimension_numbers = #tpu.dot_dimension_numbers<[2], [1], [1], [2], [0, 0, 0, 1, 1, 2], [0], [0]>} : vector<4x8x8xf32>, vector<4x8x8xf32>, vector<4x8x8xf32> -> vector<4x8x8xf32>
    "tpu.trace_stop"() : () -> ()
    %64 = vector.shape_cast %63 : vector<4x8x8xf32> to vector<32x8xf32>
    %65 = vector.extract_strided_slice %10 {offsets = [8, 0], sizes = [8, 32], strides = [1, 1]} : vector<32x32xf32> to vector<8x32xf32>
    %cst_22 = arith.constant dense<0.000000e+00> : vector<32x32xf32>
    %66 = tpu.matmul %64, %65, %cst_22 {dimension_numbers = #tpu.dot_dimension_numbers<[1], [0], [0], [1], [0, 0, 1, 1], [], []>} : vector<32x8xf32>, vector<8x32xf32>, vector<32x32xf32> -> vector<32x32xf32>
    %67 = arith.addf %39, %66 : vector<32x32xf32>
    %68 = vector.extract_strided_slice %6 {offsets = [0, 16], sizes = [32, 8], strides = [1, 1]} : vector<32x96xf32> to vector<32x8xf32>
    %69 = vector.shape_cast %68 : vector<32x8xf32> to vector<4x8x8xf32>
    %70 = vector.extract_strided_slice %6 {offsets = [0, 48], sizes = [32, 8], strides = [1, 1]} : vector<32x96xf32> to vector<32x8xf32>
    %71 = vector.shape_cast %70 : vector<32x8xf32> to vector<4x8x8xf32>
    %72 = vector.extract_strided_slice %6 {offsets = [0, 80], sizes = [32, 8], strides = [1, 1]} : vector<32x96xf32> to vector<32x8xf32>
    %73 = vector.shape_cast %72 : vector<32x8xf32> to vector<4x8x8xf32>
    "tpu.trace_start"() <{level = 10 : i32, message = "bik,bjk->bij"}> : () -> ()
    %cst_23 = arith.constant dense<0.000000e+00> : vector<4x8x8xf32>
    %74 = tpu.matmul %69, %71, %cst_23 {dimension_numbers = #tpu.dot_dimension_numbers<[2], [2], [1], [1], [0, 0, 0, 1, 1, 1], [0], [0]>} : vector<4x8x8xf32>, vector<4x8x8xf32>, vector<4x8x8xf32> -> vector<4x8x8xf32>
    "tpu.trace_stop"() : () -> ()
    %cst_24 = arith.constant 0.353553385 : f32
    %75 = vector.broadcast %cst_24 : f32 to vector<4x8x8xf32>
    %76 = arith.mulf %74, %75 : vector<4x8x8xf32>
    %cst_25 = arith.constant dense<0xFF800000> : vector<4x8xf32>
    %77 = vector.multi_reduction <maximumf>, %76, %cst_25 [2] : vector<4x8x8xf32> to vector<4x8xf32>
    %78 = vector.shape_cast %77 : vector<4x8xf32> to vector<4x8x1xf32>
    %79 = vector.broadcast %78 : vector<4x8x1xf32> to vector<4x8x8xf32>
    %80 = arith.subf %76, %79 : vector<4x8x8xf32>
    %81 = math.exp %80 : vector<4x8x8xf32>
    %82 = vector.shape_cast %9 : vector<8x8xi1> to vector<1x8x8xi1>
    %cst_26 = arith.constant 0.000000e+00 : f32
    %83 = vector.shape_cast %82 : vector<1x8x8xi1> to vector<1x8x8xi1>
    %84 = vector.broadcast %83 : vector<1x8x8xi1> to vector<4x8x8xi1>
    %85 = vector.broadcast %cst_26 : f32 to vector<4x8x8xf32>
    %86 = arith.select %84, %81, %85 : vector<4x8x8xi1>, vector<4x8x8xf32>
    %cst_27 = arith.constant dense<0.000000e+00> : vector<4x8xf32>
    %87 = vector.multi_reduction <add>, %86, %cst_27 [2] : vector<4x8x8xf32> to vector<4x8xf32>
    %88 = vector.shape_cast %87 : vector<4x8xf32> to vector<4x8x1xf32>
    %89 = vector.broadcast %88 : vector<4x8x1xf32> to vector<4x8x8xf32>
    %90 = arith.divf %86, %89 : vector<4x8x8xf32>
    "tpu.trace_start"() <{level = 10 : i32, message = "bij,bjk->bik"}> : () -> ()
    %cst_28 = arith.constant dense<0.000000e+00> : vector<4x8x8xf32>
    %91 = tpu.matmul %90, %73, %cst_28 {dimension_numbers = #tpu.dot_dimension_numbers<[2], [1], [1], [2], [0, 0, 0, 1, 1, 2], [0], [0]>} : vector<4x8x8xf32>, vector<4x8x8xf32>, vector<4x8x8xf32> -> vector<4x8x8xf32>
    "tpu.trace_stop"() : () -> ()
    %92 = vector.shape_cast %91 : vector<4x8x8xf32> to vector<32x8xf32>
    %93 = vector.extract_strided_slice %10 {offsets = [16, 0], sizes = [8, 32], strides = [1, 1]} : vector<32x32xf32> to vector<8x32xf32>
    %cst_29 = arith.constant dense<0.000000e+00> : vector<32x32xf32>
    %94 = tpu.matmul %92, %93, %cst_29 {dimension_numbers = #tpu.dot_dimension_numbers<[1], [0], [0], [1], [0, 0, 1, 1], [], []>} : vector<32x8xf32>, vector<8x32xf32>, vector<32x32xf32> -> vector<32x32xf32>
    %95 = arith.addf %67, %94 : vector<32x32xf32>
    %96 = vector.extract_strided_slice %6 {offsets = [0, 24], sizes = [32, 8], strides = [1, 1]} : vector<32x96xf32> to vector<32x8xf32>
    %97 = vector.shape_cast %96 : vector<32x8xf32> to vector<4x8x8xf32>
    %98 = vector.extract_strided_slice %6 {offsets = [0, 56], sizes = [32, 8], strides = [1, 1]} : vector<32x96xf32> to vector<32x8xf32>
    %99 = vector.shape_cast %98 : vector<32x8xf32> to vector<4x8x8xf32>
    %100 = vector.extract_strided_slice %6 {offsets = [0, 88], sizes = [32, 8], strides = [1, 1]} : vector<32x96xf32> to vector<32x8xf32>
    %101 = vector.shape_cast %100 : vector<32x8xf32> to vector<4x8x8xf32>
    "tpu.trace_start"() <{level = 10 : i32, message = "bik,bjk->bij"}> : () -> ()
    %cst_30 = arith.constant dense<0.000000e+00> : vector<4x8x8xf32>
    %102 = tpu.matmul %97, %99, %cst_30 {dimension_numbers = #tpu.dot_dimension_numbers<[2], [2], [1], [1], [0, 0, 0, 1, 1, 1], [0], [0]>} : vector<4x8x8xf32>, vector<4x8x8xf32>, vector<4x8x8xf32> -> vector<4x8x8xf32>
    "tpu.trace_stop"() : () -> ()
    %cst_31 = arith.constant 0.353553385 : f32
    %103 = vector.broadcast %cst_31 : f32 to vector<4x8x8xf32>
    %104 = arith.mulf %102, %103 : vector<4x8x8xf32>
    %cst_32 = arith.constant dense<0xFF800000> : vector<4x8xf32>
    %105 = vector.multi_reduction <maximumf>, %104, %cst_32 [2] : vector<4x8x8xf32> to vector<4x8xf32>
    %106 = vector.shape_cast %105 : vector<4x8xf32> to vector<4x8x1xf32>
    %107 = vector.broadcast %106 : vector<4x8x1xf32> to vector<4x8x8xf32>
    %108 = arith.subf %104, %107 : vector<4x8x8xf32>
    %109 = math.exp %108 : vector<4x8x8xf32>
    %110 = vector.shape_cast %9 : vector<8x8xi1> to vector<1x8x8xi1>
    %cst_33 = arith.constant 0.000000e+00 : f32
    %111 = vector.shape_cast %110 : vector<1x8x8xi1> to vector<1x8x8xi1>
    %112 = vector.broadcast %111 : vector<1x8x8xi1> to vector<4x8x8xi1>
    %113 = vector.broadcast %cst_33 : f32 to vector<4x8x8xf32>
    %114 = arith.select %112, %109, %113 : vector<4x8x8xi1>, vector<4x8x8xf32>
    %cst_34 = arith.constant dense<0.000000e+00> : vector<4x8xf32>
    %115 = vector.multi_reduction <add>, %114, %cst_34 [2] : vector<4x8x8xf32> to vector<4x8xf32>
    %116 = vector.shape_cast %115 : vector<4x8xf32> to vector<4x8x1xf32>
    %117 = vector.broadcast %116 : vector<4x8x1xf32> to vector<4x8x8xf32>
    %118 = arith.divf %114, %117 : vector<4x8x8xf32>
    "tpu.trace_start"() <{level = 10 : i32, message = "bij,bjk->bik"}> : () -> ()
    %cst_35 = arith.constant dense<0.000000e+00> : vector<4x8x8xf32>
    %119 = tpu.matmul %118, %101, %cst_35 {dimension_numbers = #tpu.dot_dimension_numbers<[2], [1], [1], [2], [0, 0, 0, 1, 1, 2], [0], [0]>} : vector<4x8x8xf32>, vector<4x8x8xf32>, vector<4x8x8xf32> -> vector<4x8x8xf32>
    "tpu.trace_stop"() : () -> ()
    %120 = vector.shape_cast %119 : vector<4x8x8xf32> to vector<32x8xf32>
    %121 = vector.extract_strided_slice %10 {offsets = [24, 0], sizes = [8, 32], strides = [1, 1]} : vector<32x32xf32> to vector<8x32xf32>
    %cst_36 = arith.constant dense<0.000000e+00> : vector<32x32xf32>
    %122 = tpu.matmul %120, %121, %cst_36 {dimension_numbers = #tpu.dot_dimension_numbers<[1], [0], [0], [1], [0, 0, 1, 1], [], []>} : vector<32x8xf32>, vector<8x32xf32>, vector<32x32xf32> -> vector<32x32xf32>
    %123 = arith.addf %95, %122 : vector<32x32xf32>
    %c0_37 = arith.constant 0 : index
    %c0_38 = arith.constant 0 : index
    %124 = vector.load %arg5[%c0_37, %c0_38] : memref<1x32xf32, #tpu.memory_space<vmem>>, vector<1x32xf32>
    %125 = vector.broadcast %124 : vector<1x32xf32> to vector<32x32xf32>
    %126 = arith.addf %123, %125 : vector<32x32xf32>
    %127 = vector.shape_cast %126 : vector<32x32xf32> to vector<4x8x32xf32>
    %c0_39 = arith.constant 0 : index
    %c0_40 = arith.constant 0 : index
    %c0_41 = arith.constant 0 : index
    %128 = vector.load %arg6[%c0_39, %c0_40, %c0_41] : memref<4x8x32xf32, #tpu.memory_space<vmem>>, vector<4x8x32xf32>
    tpu.vector_store %arg6[%c0_39, %c0_40, %c0_41], %127 {strides = array<i32>} : memref<4x8x32xf32, #tpu.memory_space<vmem>>, vector<4x8x32xf32>,
    return
  }
  func.func @transform_0(%arg0: i32) -> (i32, i32, i32) {
    %c0_i32 = arith.constant 0 : i32
    %c0_i32_0 = arith.constant 0 : i32
    %c0_i32_1 = arith.constant 0 : i32
    return %arg0, %c0_i32, %c0_i32_0 : i32, i32, i32
  }
  func.func @transform_1(%arg0: i32) -> (i32, i32) {
    %c0_i32 = arith.constant 0 : i32
    %c0_i32_0 = arith.constant 0 : i32
    %c0_i32_1 = arith.constant 0 : i32
    return %c0_i32, %c0_i32_0 : i32, i32
  }
  func.func @transform_2(%arg0: i32) -> (i32, i32) {
    %c0_i32 = arith.constant 0 : i32
    %c0_i32_0 = arith.constant 0 : i32
    %c0_i32_1 = arith.constant 0 : i32
    return %c0_i32, %c0_i32_0 : i32, i32
  }
  func.func @transform_3(%arg0: i32) -> (i32, i32) {
    %c0_i32 = arith.constant 0 : i32
    %c0_i32_0 = arith.constant 0 : i32
    %c0_i32_1 = arith.constant 0 : i32
    return %c0_i32, %c0_i32_0 : i32, i32
  }
  func.func @transform_4(%arg0: i32) -> (i32, i32) {
    %c0_i32 = arith.constant 0 : i32
    %c0_i32_0 = arith.constant 0 : i32
    %c0_i32_1 = arith.constant 0 : i32
    return %c0_i32, %c0_i32_0 : i32, i32
  }
  func.func @transform_5(%arg0: i32) -> (i32, i32, i32) {
    %c0_i32 = arith.constant 0 : i32
    %c0_i32_0 = arith.constant 0 : i32
    %c0_i32_1 = arith.constant 0 : i32
    return %arg0, %c0_i32, %c0_i32_0 : i32, i32, i32
  }
}

</mosaic_0001>

<llo_original>
// kernel: tpu_custom_call.1
$region0: #{tpu_custom_call.1}
  #allocation0 [shape = 'u32[]', space=smem, size = 0x4, offset = 0x4, fixed_abs, tag = 'smem constant byte address 0x4 - core index']
  #allocation1 [shape = 'u32[144,128]{1,0:T(1,128)}', space=vmem, size = 0x12000, scoped, tag = 'internal scratch']
  %s0 = inlined_call_operand.hbm [shape: f32[8,8,32], index: 0, kind: input, shape index: {}]
  %s1 = inlined_call_operand.hbm [shape: f32[32,96], index: 1, kind: input, shape index: {}]
  %s2 = inlined_call_operand.vmem [shape: f32[1,96], index: 2, kind: input, shape index: {}]
  %s3 = inlined_call_operand.hbm [shape: f32[32,32], index: 3, kind: input, shape index: {}]
  %s4 = inlined_call_operand.vmem [shape: f32[1,32], index: 4, kind: input, shape index: {}]
  %s5 = inlined_call_operand.hbm [shape: f32[8,8,32], index: 5, kind: output, shape index: {}]
  %s6 = sld [smem:[#allocation0]]
  $region65: #{tpu_custom_call.1} parent=0
    _
  %s8 = ssub.s32 1, %s6
  %s9 = scalar_select 0, %s8, %s6
  $region1: #{tpu_custom_call.1} parent=0
    #allocation2 [shape = 'u8[32768]{0}', space=vmem, size = 0x8000, scoped, tag = 'input window, operand 0']
    #allocation3 [shape = 's32[2]{0}', space=sflag, size = 0x8, scoped, tag = 'scoped memory for tpu_custom_call.1']
    #allocation4 [shape = 's32[2]{0}', space=sflag, size = 0x8, scoped, tag = 'scoped memory for tpu_custom_call.1']
    #allocation5 [shape = 'u8[16384]{0}', space=vmem, size = 0x4000, scoped, tag = 'input window, operand 1, single buffered']
    #allocation6 [shape = 's32[1]{0}', space=sflag, size = 0x4, scoped, tag = 'scoped memory for tpu_custom_call.1']
    #allocation7 [shape = 'u8[16384]{0}', space=vmem, size = 0x4000, scoped, tag = 'input window, operand 3, single buffered']
    #allocation8 [shape = 'u8[32768]{0}', space=vmem, size = 0x8000, scoped, tag = 'output window, operand 0']
    %10 = vsyncpa [#allocation3], 0
    %s11 = scalar_lea.sflag [#allocation3], 1
    %12 = vsyncpa %s11, 0
    %13 = vsyncpa [#allocation6], 0
    %14 = vsyncpa [#allocation4], 0
    %s15 = scalar_lea.sflag [#allocation4], 1
    %16 = vsyncpa %s15, 0
    loop: start=0, step=1, limit=4
    $region2: #{tpu_custom_call.1} parent=1 // loop_pre_header
      _
    $region3: #{tpu_custom_call.1} parent=1 // loop_header
      %s18 = sphi 0, %s22
      %p19 = scmp.ge.s32.totalorder %s18, 4
      %s28 = sphi 0, %s30
      %s31 = sphi 0, %s28
      %s32 = sphi 0, %s31
      %s48 = sphi 0, %s32
      %s52 = sphi 0, %s52
      %s54 = sphi 0, %s52
      %s55 = sphi 0, %s54
      %s69 = sphi 0, %s55
      %s73 = sphi 0, %s73
      %s75 = sphi 0, %s73
      %s76 = sphi 0, %s75
      %s90 = sphi 0, %s76
      %s94 = sphi 0, %s94
      %s96 = sphi 0, %s94
      %s97 = sphi 0, %s96
      %s111 = sphi 0, %s97
      %s115 = sphi 0, %s115
      %s117 = sphi 0, %s115
      %s118 = sphi 0, %s117
      %s132 = sphi 0, %s118
      %s138 = sphi 0, %s140
      %s141 = sphi 0, %s138
      %s142 = sphi 0, %s141
      %s158 = sphi 0, %s142
    $region4: #{tpu_custom_call.1} parent=1 // loop_header_branch
      %21 = sbr.rel (%p19) target = $region8
    $region5: #{tpu_custom_call.1} parent=1 // loop_body
      %s23 = ssub.s32 %s18, 1
      %s24 = ssub.s32 %s18, 2
      %s25 = sadd.s32 %s18, 1
      %s26 = ssub.s32 %s18, %s25
      %p27 = scmp.eq.s32.totalorder %s26, 0
      %s29 = sadd.s32 %s28, 1
      %s30 = scalar_select %p27, %s28, %s29
      %p33 = pneg %p27
      %p34 = scmp.eq.s32.totalorder %s18, 1
      %p35 = por %p33, %p34
      %p36 = scmp.ne.s32.totalorder %s28, %s31
      %p37 = scmp.eq.s32.totalorder %s18, 0
      %p38 = por %p36, %p37
      %p39 = scmp.ne.s32.totalorder %s28, %s31
      %p40 = scmp.eq.s32.totalorder %s23, 1
      %p41 = por %p39, %p40
      %p42 = scmp.ne.s32.totalorder %s31, %s32
      %p43 = scmp.eq.s32.totalorder %s23, 0
      %p44 = por %p42, %p43
      %p45 = scmp.ne.s32.totalorder %s31, %s32
      %p46 = scmp.eq.s32.totalorder %s24, 1
      %p47 = por %p45, %p46
      %p49 = scmp.ne.s32.totalorder %s32, %s48
      %p50 = scmp.eq.s32.totalorder %s24, 0
      %p51 = por %p49, %p50
      %s53 = sadd.s32 %s52, 1
      %p56 = scmp.eq.s32.totalorder %s18, 1
      %p57 = scmp.ne.s32.totalorder %s52, %s54
      %p58 = scmp.eq.s32.totalorder %s18, 0
      %p59 = por %p57, %p58
      %p60 = scmp.ne.s32.totalorder %s52, %s54
      %p61 = scmp.eq.s32.totalorder %s23, 1
      %p62 = por %p60, %p61
      %p63 = scmp.ne.s32.totalorder %s54, %s55
      %p64 = scmp.eq.s32.totalorder %s23, 0
      %p65 = por %p63, %p64
      %p66 = scmp.ne.s32.totalorder %s54, %s55
      %p67 = scmp.eq.s32.totalorder %s24, 1
      %p68 = por %p66, %p67
      %p70 = scmp.ne.s32.totalorder %s55, %s69
      %p71 = scmp.eq.s32.totalorder %s24, 0
      %p72 = por %p70, %p71
      %s74 = sadd.s32 %s73, 1
      %p77 = scmp.eq.s32.totalorder %s18, 1
      %p78 = scmp.ne.s32.totalorder %s73, %s75
      %p79 = scmp.eq.s32.totalorder %s18, 0
      %p80 = por %p78, %p79
      %p81 = scmp.ne.s32.totalorder %s73, %s75
      %p82 = scmp.eq.s32.totalorder %s23, 1
      %p83 = por %p81, %p82
      %p84 = scmp.ne.s32.totalorder %s75, %s76
      %p85 = scmp.eq.s32.totalorder %s23, 0
      %p86 = por %p84, %p85
      %p87 = scmp.ne.s32.totalorder %s75, %s76
      %p88 = scmp.eq.s32.totalorder %s24, 1
      %p89 = por %p87, %p88
      %p91 = scmp.ne.s32.totalorder %s76, %s90
      %p92 = scmp.eq.s32.totalorder %s24, 0
      %p93 = por %p91, %p92
      %s95 = sadd.s32 %s94, 1
      %p98 = scmp.eq.s32.totalorder %s18, 1
      %p99 = scmp.ne.s32.totalorder %s94, %s96
      %p100 = scmp.eq.s32.totalorder %s18, 0
      %p101 = por %p99, %p100
      %p102 = scmp.ne.s32.totalorder %s94, %s96
      %p103 = scmp.eq.s32.totalorder %s23, 1
      %p104 = por %p102, %p103
      %p105 = scmp.ne.s32.totalorder %s96, %s97
      %p106 = scmp.eq.s32.totalorder %s23, 0
      %p107 = por %p105, %p106
      %p108 = scmp.ne.s32.totalorder %s96, %s97
      %p109 = scmp.eq.s32.totalorder %s24, 1
      %p110 = por %p108, %p109
      %p112 = scmp.ne.s32.totalorder %s97, %s111
      %p113 = scmp.eq.s32.totalorder %s24, 0
      %p114 = por %p112, %p113
      %s116 = sadd.s32 %s115, 1
      %p119 = scmp.eq.s32.totalorder %s18, 1
      %p120 = scmp.ne.s32.totalorder %s115, %s117
      %p121 = scmp.eq.s32.totalorder %s18, 0
      %p122 = por %p120, %p121
      %p123 = scmp.ne.s32.totalorder %s115, %s117
      %p124 = scmp.eq.s32.totalorder %s23, 1
      %p125 = por %p123, %p124
      %p126 = scmp.ne.s32.totalorder %s117, %s118
      %p127 = scmp.eq.s32.totalorder %s23, 0
      %p128 = por %p126, %p127
      %p129 = scmp.ne.s32.totalorder %s117, %s118
      %p130 = scmp.eq.s32.totalorder %s24, 1
      %p131 = por %p129, %p130
      %p133 = scmp.ne.s32.totalorder %s118, %s132
      %p134 = scmp.eq.s32.totalorder %s24, 0
      %p135 = por %p133, %p134
      %s136 = ssub.s32 %s18, %s25
      %p137 = scmp.eq.s32.totalorder %s136, 0
      %s139 = sadd.s32 %s138, 1
      %s140 = scalar_select %p137, %s138, %s139
      %p143 = pneg %p137
      %p144 = scmp.eq.s32.totalorder %s18, 1
      %p145 = por %p143, %p144
      %p146 = scmp.ne.s32.totalorder %s138, %s141
      %p147 = scmp.eq.s32.totalorder %s18, 0
      %p148 = por %p146, %p147
      %p149 = scmp.ne.s32.totalorder %s138, %s141
      %p150 = scmp.eq.s32.totalorder %s23, 1
      %p151 = por %p149, %p150
      %p152 = scmp.ne.s32.totalorder %s141, %s142
      %p153 = scmp.eq.s32.totalorder %s23, 0
      %p154 = por %p152, %p153
      %p155 = scmp.ne.s32.totalorder %s141, %s142
      %p156 = scmp.eq.s32.totalorder %s24, 1
      %p157 = por %p155, %p156
      %p159 = scmp.ne.s32.totalorder %s142, %s158
      %p160 = scmp.eq.s32.totalorder %s24, 0
      %p161 = por %p159, %p160
      %p162 = scmp.le.s32.totalorder 1, %s18
      %p163 = scmp.lt.s32.totalorder %s18, 3
      %p164 = pnand %p162, %p163
      %p165 = pneg %p164
      // Predicated region
      $region9: #{tpu_custom_call.1} parent=5 // pred_check
        _
      $region10: #{tpu_custom_call.1} parent=5 // pred_check_branch
        %167 = sbr.rel (%p164) target = $region12
      $region11: #{tpu_custom_call.1} parent=5 // pred_region
        %s168 = ssub.s32 %s18, 1
        // Predicated region
        $region13: #{tpu_custom_call.1} parent=11 // pred_check
          %p169 = pneg %p65
        $region14: #{tpu_custom_call.1} parent=11 // pred_check_branch
          %171 = sbr.rel (%p169) target = $region16
        $region15: #{tpu_custom_call.1} parent=11 // pred_region
          %s173 = ssub.s32 512, 512
          %174 = vsyncadd [#allocation6], %s173
          %s175 = sshll.u32 [#allocation5], 4
          %s176 = int_to_ptr.vmem [resolvable:$true] %s175
          %181 = dma.hbm_to_vmem [thread:$0]  %s1, 512, %s176, [#allocation6], 128, 128, 8
        $region16: #{tpu_custom_call.1} parent=11 // pred_fallthru
          _
        // Predicated region
        $region17: #{tpu_custom_call.1} parent=11 // pred_check
          %p182 = pneg %p86
        $region18: #{tpu_custom_call.1} parent=11 // pred_check_branch
          %184 = sbr.rel (%p182) target = $region20
        $region19: #{tpu_custom_call.1} parent=11 // pred_region
          _
        $region20: #{tpu_custom_call.1} parent=11 // pred_fallthru
          _
        // Predicated region
        $region21: #{tpu_custom_call.1} parent=11 // pred_check
          %p185 = pneg %p107
        $region22: #{tpu_custom_call.1} parent=11 // pred_check_branch
          %187 = sbr.rel (%p185) target = $region24
        $region23: #{tpu_custom_call.1} parent=11 // pred_region
          %s189 = ssub.s32 512, 512
          %190 = vsyncadd [#allocation6], %s189
          %s191 = sshll.u32 [#allocation7], 4
          %s192 = int_to_ptr.vmem [resolvable:$true] %s191
          %197 = dma.hbm_to_vmem [thread:$0]  %s3, 512, %s192, [#allocation6], 128, 128, 8
        $region24: #{tpu_custom_call.1} parent=11 // pred_fallthru
          _
        // Predicated region
        $region25: #{tpu_custom_call.1} parent=11 // pred_check
          %p198 = pneg %p128
        $region26: #{tpu_custom_call.1} parent=11 // pred_check_branch
          %200 = sbr.rel (%p198) target = $region28
        $region27: #{tpu_custom_call.1} parent=11 // pred_region
          _
        $region28: #{tpu_custom_call.1} parent=11 // pred_fallthru
          _
      $region12: #{tpu_custom_call.1} parent=5 // pred_fallthru
        _
      %p201 = scmp.lt.s32.totalorder %s18, 2
      // Predicated region
      $region29: #{tpu_custom_call.1} parent=5 // pred_check
        %p202 = pneg %p201
      $region30: #{tpu_custom_call.1} parent=5 // pred_check_branch
        %204 = sbr.rel (%p202) target = $region32
      $region31: #{tpu_custom_call.1} parent=5 // pred_region
        // Predicated region
        $region33: #{tpu_custom_call.1} parent=31 // pred_check
          %p205 = pneg %p38
        $region34: #{tpu_custom_call.1} parent=31 // pred_check_branch
          %207 = sbr.rel (%p205) target = $region36
        $region35: #{tpu_custom_call.1} parent=31 // pred_region
          %s208 = sand.u32 %s28, 1
          %s209 = scalar_lea.sflag [#allocation3], %s208
          %s210 = sand.u32 %s28, 1
          %s211 = smul.addr %s210, 32
          %s212 = scalar_lea.vmem [#allocation2], %s211
          %s213 = smul.u32 4, %s18
          %s215 = ssub.s32 512, 512
          %216 = vsyncadd %s209, %s215
          %s217 = smul.addr %s213, 128
          %s218 = scalar_lea.hbm %s0, %s217
          %s219 = sshll.u32 %s212, 4
          %s220 = int_to_ptr.vmem [resolvable:$true] %s219
          %225 = dma.hbm_to_vmem [thread:$0]  %s218, 512, %s220, %s209, 128, 128, 8
        $region36: #{tpu_custom_call.1} parent=31 // pred_fallthru
          _
      $region32: #{tpu_custom_call.1} parent=5 // pred_fallthru
        _
      %p226 = scmp.le.s32.totalorder 1, %s18
      %p227 = scmp.lt.s32.totalorder %s18, 3
      %p228 = pnand %p226, %p227
      %p229 = pneg %p228
      // Predicated region
      $region37: #{tpu_custom_call.1} parent=5 // pred_check
        _
      $region38: #{tpu_custom_call.1} parent=5 // pred_check_branch
        %231 = sbr.rel (%p228) target = $region40
      $region39: #{tpu_custom_call.1} parent=5 // pred_region
        %s232 = ssub.s32 %s18, 1
        %s233 = sand.u32 %s31, 1
        %s234 = scalar_lea.sflag [#allocation3], %s233
        %s235 = sand.u32 %s31, 1
        %s236 = smul.addr %s235, 32
        %s237 = scalar_lea.vmem [#allocation2], %s236
        // Predicated region
        $region41: #{tpu_custom_call.1} parent=39 // pred_check
          %p238 = pneg %p44
        $region42: #{tpu_custom_call.1} parent=39 // pred_check_branch
          %240 = sbr.rel (%p238) target = $region44
        $region43: #{tpu_custom_call.1} parent=39 // pred_region
          %241 = dma.done %s234, 512
        $region44: #{tpu_custom_call.1} parent=39 // pred_fallthru
          _
        // Predicated region
        $region45: #{tpu_custom_call.1} parent=39 // pred_check
          %p242 = pneg %p65
        $region46: #{tpu_custom_call.1} parent=39 // pred_check_branch
          %244 = sbr.rel (%p242) target = $region48
        $region47: #{tpu_custom_call.1} parent=39 // pred_region
          %245 = dma.done [#allocation6], 512
        $region48: #{tpu_custom_call.1} parent=39 // pred_fallthru
          _
        // Predicated region
        $region49: #{tpu_custom_call.1} parent=39 // pred_check
          %p246 = pneg %p107
        $region50: #{tpu_custom_call.1} parent=39 // pred_check_branch
          %248 = sbr.rel (%p246) target = $region52
        $region51: #{tpu_custom_call.1} parent=39 // pred_region
          %249 = dma.done [#allocation6], 512
        $region52: #{tpu_custom_call.1} parent=39 // pred_fallthru
          _
        %s250 = sand.u32 %s31, 1
        %s251 = scalar_lea.sflag [#allocation3], %s250
        %s252 = sand.u32 %s31, 1
        %s253 = smul.addr %s252, 32
        %s254 = scalar_lea.vmem [#allocation2], %s253
        %p255 = pneg %p44
        %p256 = pneg %p41
        %p257 = pneg %p65
        %p258 = pneg %p62
        %p259 = pneg %p86
        %p260 = pneg %p83
        %p261 = pneg %p107
        %p262 = pneg %p104
        %p263 = pneg %p128
        %p264 = pneg %p125
        %p265 = pneg %p154
        %p266 = pneg %p151
        %s267 = sand.u32 %s141, 1
        %s268 = scalar_lea.sflag [#allocation4], %s267
        %s269 = sand.u32 %s141, 1
        %s270 = smul.addr %s269, 32
        %s271 = scalar_lea.vmem [#allocation8], %s270
        %s272 = smul.u32 4, %s23
        %s273 = smul.u32 4, %s23
        %v274 = vld [vmem:[%s237] sm:$0xff]
        %v275 = vld [vmem:[%s237 + $0x8] sm:$0xff]
        %v276 = vld [vmem:[%s237 + $0x10] sm:$0xff]
        %v277 = vld [vmem:[%s237 + $0x18] sm:$0xff]
        %v278 = vld [vmem:[#allocation5] sm:$0xff]
        %v279 = vld [vmem:[#allocation5 + $0x8] sm:$0xff]
        %v280 = vld [vmem:[#allocation5 + $0x10] sm:$0xff]
        %v281 = vld [vmem:[#allocation5 + $0x18] sm:$0xff]
        %v282 = vld [vmem:[%s2] sm:$0x1]
        %v284 = vlaneseq
        %v285 = vshrl.u32 %v284, 7
        %v286 = vsub.s32 0, %v285
        %v287 = vrot.slane %v282, %v286
        %vm289 = vcmask 261120
        %v291 = vsel %vm289, %v274, 0
        %v294 = vsel %vm289, %v275, 0
        %v297 = vsel %vm289, %v276, 0
        %v300 = vsel %vm289, %v277, 0
        %302 = vmatprep.subr.mxu0 0.0
        %303 = vmatpush1.msra.mxu0 %v278
        %304 = vmatprep.subr.mxu0 0.0
        %305 = vmatpush1.msra.mxu0 %v279
        %306 = vmatprep.subr.mxu0 0.0
        %307 = vmatpush1.msra.mxu0 %v280
        %308 = vmatprep.subr.mxu0 0.0
        %309 = vmatpush1.msra.mxu0 %v281
        %310 = vmatprep.subr.mxu0 0.0
        %311 = vmatpush1.msra.mxu0 0.0
        %312 = vmatprep.subr.mxu0 0.0
        %313 = vmatpush1.msra.mxu0 0.0
        %314 = vmatprep.subr.mxu0 0.0
        %315 = vmatpush1.msra.mxu0 0.0
        %316 = vmatprep.subr.mxu0 0.0
        %317 = vmatpush1.msra.mxu0 0.0
        %318 = vmatprep.subr.mxu0 0.0
        %319 = vmatpush1.msra.mxu0 0.0
        %320 = vmatprep.subr.mxu0 0.0
        %321 = vmatpush1.msra.mxu0 0.0
        %322 = vmatprep.subr.mxu0 0.0
        %323 = vmatpush1.msra.mxu0 0.0
        %324 = vmatprep.subr.mxu0 0.0
        %325 = vmatpush1.msra.mxu0 0.0
        %326 = vmatprep.subr.mxu0 0.0
        %327 = vmatpush1.msra.mxu0 0.0
        %328 = vmatprep.subr.mxu0 0.0
        %329 = vmatpush1.msra.mxu0 0.0
        %330 = vmatprep.subr.mxu0 0.0
        %331 = vmatpush1.msra.mxu0 0.0
        %332 = vmatprep.subr.mxu0 0.0
        %333 = vmatpush1.msra.mxu0 0.0
        %334 = vmatprep.subr.mxu0 0.0
        %335 = vmatpush1.msra.mxu0 0.0
        %336 = vmatprep.subr.mxu0 0.0
        %337 = vmatpush1.msra.mxu0 0.0
        %338 = vmatprep.subr.mxu0 0.0
        %339 = vmatpush1.msra.mxu0 0.0
        %340 = vmatprep.subr.mxu0 0.0
        %341 = vmatpush1.msra.mxu0 0.0
        %342 = vmatprep.subr.mxu0 0.0
        %343 = vmatpush1.msra.mxu0 0.0
        %344 = vmatprep.subr.mxu0 0.0
        %345 = vmatpush1.msra.mxu0 0.0
        %346 = vmatprep.subr.mxu0 0.0
        %347 = vmatpush1.msra.mxu0 0.0
        %348 = vmatprep.subr.mxu0 0.0
        %349 = vmatpush1.msra.mxu0 0.0
        %350 = vmatprep.subr.mxu0 0.0
        %351 = vmatpush1.msra.mxu0 0.0
        %352 = vmatprep.subr.mxu0 0.0
        %353 = vmatpush1.msra.mxu0 0.0
        %354 = vmatprep.subr.mxu0 0.0
        %355 = vmatpush1.msra.mxu0 0.0
        %356 = vmatprep.subr.mxu0 0.0
        %357 = vmatpush1.msra.mxu0 0.0
        %358 = vmatprep.subr.mxu0 0.0
        %359 = vmatpush1.msra.mxu0 0.0
        %360 = vmatprep.subr.mxu0 0.0
        %361 = vmatpush1.msra.mxu0 0.0
        %362 = vmatprep.subr.mxu0 0.0
        %363 = vmatpush1.msra.mxu0 0.0
        %364 = vmatprep.subr.mxu0 0.0
        %365 = vmatpush1.msra.mxu0 0.0
        %366 = vmatprep.mubr.f32.mxu0 0.0
        %367 = vmatmul.mubr.f32.gmra.mrb[0].mxu0 %v291
        %v368 = vpop.f32.mrb[0].mxu0
        %v369 = vadd.f32 %v287, %v368
        %v370 = vpop.f32.mrb[0].mxu0
        %371 = vmatprep.mubr.f32.mxu0 0.0
        %372 = vmatmul.mubr.f32.gmra.mrb[0].mxu0 %v294
        %v373 = vpop.f32.mrb[0].mxu0
        %v374 = vadd.f32 %v287, %v373
        %v375 = vpop.f32.mrb[0].mxu0
        %376 = vmatprep.mubr.f32.mxu0 0.0
        %377 = vmatmul.mubr.f32.gmra.mrb[0].mxu0 %v297
        %v378 = vpop.f32.mrb[0].mxu0
        %v379 = vadd.f32 %v287, %v378
        %v380 = vpop.f32.mrb[0].mxu0
        %381 = vmatprep.mubr.f32.mxu0 0.0
        %382 = vmatmul.mubr.f32.gmra.mrb[0].mxu0 %v300
        %v383 = vpop.f32.mrb[0].mxu0
        %v384 = vadd.f32 %v287, %v383
        %v385 = vpop.f32.mrb[0].mxu0
        %386 = vdwg.mxu0
        %v387 = vlaneseq
        %v388 = vshrl.u32 %v387, 7
        %v389 = vlaneseq
        %v390 = vand.u32 %v389, 127
        %vm391 = vcmp.le.s32.totalorder %v390, %v388
        %v392 = vld [vmem:[#allocation7] sm:$0xff]
        %v393 = vld [vmem:[#allocation7 + $0x8] sm:$0xff]
        %v394 = vld [vmem:[#allocation7 + $0x10] sm:$0xff]
        %v395 = vld [vmem:[#allocation7 + $0x18] sm:$0xff]
        %397 = vrot.lane.b32.xlu0 %v369, 96
        %v398 = vpop.permute.xlu0 %397
        %vm399 = vcmask 64512
        %v400 = vsel %vm399, %v369, 0
        %v402 = vsel %vm399, %v398, 0
        %404 = vmatprep.subr.mxu0 0.0
        %405 = vmatpush1.xpose.msra.mxu0 %v402
        %406 = vmatprep.subr.mxu0 0.0
        %407 = vmatpush1.xpose.msra.mxu0 0.0
        %408 = vmatprep.subr.mxu0 0.0
        %409 = vmatpush1.xpose.msra.mxu0 0.0
        %410 = vmatprep.subr.mxu0 0.0
        %411 = vmatpush1.xpose.msra.mxu0 0.0
        %412 = vmatprep.subr.mxu0 0.0
        %413 = vmatpush1.xpose.msra.mxu0 0.0
        %414 = vmatprep.subr.mxu0 0.0
        %415 = vmatpush1.xpose.msra.mxu0 0.0
        %416 = vmatprep.subr.mxu0 0.0
        %417 = vmatpush1.xpose.msra.mxu0 0.0
        %418 = vmatprep.subr.mxu0 0.0
        %419 = vmatpush1.xpose.msra.mxu0 0.0
        %420 = vmatprep.subr.mxu0 0.0
        %421 = vmatpush1.xpose.msra.mxu0 0.0
        %422 = vmatprep.subr.mxu0 0.0
        %423 = vmatpush1.xpose.msra.mxu0 0.0
        %424 = vmatprep.subr.mxu0 0.0
        %425 = vmatpush1.xpose.msra.mxu0 0.0
        %426 = vmatprep.subr.mxu0 0.0
        %427 = vmatpush1.xpose.msra.mxu0 0.0
        %428 = vmatprep.subr.mxu0 0.0
        %429 = vmatpush1.xpose.msra.mxu0 0.0
        %430 = vmatprep.subr.mxu0 0.0
        %431 = vmatpush1.xpose.msra.mxu0 0.0
        %432 = vmatprep.subr.mxu0 0.0
        %433 = vmatpush1.xpose.msra.mxu0 0.0
        %434 = vmatprep.subr.mxu0 0.0
        %435 = vmatpush1.xpose.msra.mxu0 0.0
        %436 = vmatprep.subr.mxu0 0.0
        %437 = vmatpush1.xpose.msra.mxu0 0.0
        %438 = vmatprep.subr.mxu0 0.0
        %439 = vmatpush1.xpose.msra.mxu0 0.0
        %440 = vmatprep.subr.mxu0 0.0
        %441 = vmatpush1.xpose.msra.mxu0 0.0
        %442 = vmatprep.subr.mxu0 0.0
        %443 = vmatpush1.xpose.msra.mxu0 0.0
        %444 = vmatprep.subr.mxu0 0.0
        %445 = vmatpush1.xpose.msra.mxu0 0.0
        %446 = vmatprep.subr.mxu0 0.0
        %447 = vmatpush1.xpose.msra.mxu0 0.0
        %448 = vmatprep.subr.mxu0 0.0
        %449 = vmatpush1.xpose.msra.mxu0 0.0
        %450 = vmatprep.subr.mxu0 0.0
        %451 = vmatpush1.xpose.msra.mxu0 0.0
        %452 = vmatprep.subr.mxu0 0.0
        %453 = vmatpush1.xpose.msra.mxu0 0.0
        %454 = vmatprep.subr.mxu0 0.0
        %455 = vmatpush1.xpose.msra.mxu0 0.0
        %456 = vmatprep.subr.mxu0 0.0
        %457 = vmatpush1.xpose.msra.mxu0 0.0
        %458 = vmatprep.subr.mxu0 0.0
        %459 = vmatpush1.xpose.msra.mxu0 0.0
        %460 = vmatprep.subr.mxu0 0.0
        %461 = vmatpush1.xpose.msra.mxu0 0.0
        %462 = vmatprep.subr.mxu0 0.0
        %463 = vmatpush1.xpose.msra.mxu0 0.0
        %464 = vmatprep.subr.mxu0 0.0
        %465 = vmatpush1.xpose.msra.mxu0 0.0
        %466 = vmatprep.subr.mxu0 0.0
        %467 = vmatpush1.xpose.msra.mxu0 0.0
        %468 = vmatprep.mubr.f32.mxu0 0.0
        %469 = vmatmul.mubr.f32.gmra.mrb[0].mxu0 %v400
        %v470 = vpop.f32.mrb[0].mxu0
        %v471 = vadd.f32 0.0, %v470
        %v472 = vpop.f32.mrb[0].mxu0
        %473 = vdwg.mxu0
        %475 = vrot.lane.b32.xlu0 %v374, 96
        %v476 = vpop.permute.xlu0 %475
        %v477 = vsel %vm399, %v374, 0
        %v479 = vsel %vm399, %v476, 0
        %481 = vmatprep.subr.mxu0 0.0
        %482 = vmatpush1.xpose.msra.mxu0 %v479
        %483 = vmatprep.subr.mxu0 0.0
        %484 = vmatpush1.xpose.msra.mxu0 0.0
        %485 = vmatprep.subr.mxu0 0.0
        %486 = vmatpush1.xpose.msra.mxu0 0.0
        %487 = vmatprep.subr.mxu0 0.0
        %488 = vmatpush1.xpose.msra.mxu0 0.0
        %489 = vmatprep.subr.mxu0 0.0
        %490 = vmatpush1.xpose.msra.mxu0 0.0
        %491 = vmatprep.subr.mxu0 0.0
        %492 = vmatpush1.xpose.msra.mxu0 0.0
        %493 = vmatprep.subr.mxu0 0.0
        %494 = vmatpush1.xpose.msra.mxu0 0.0
        %495 = vmatprep.subr.mxu0 0.0
        %496 = vmatpush1.xpose.msra.mxu0 0.0
        %497 = vmatprep.subr.mxu0 0.0
        %498 = vmatpush1.xpose.msra.mxu0 0.0
        %499 = vmatprep.subr.mxu0 0.0
        %500 = vmatpush1.xpose.msra.mxu0 0.0
        %501 = vmatprep.subr.mxu0 0.0
        %502 = vmatpush1.xpose.msra.mxu0 0.0
        %503 = vmatprep.subr.mxu0 0.0
        %504 = vmatpush1.xpose.msra.mxu0 0.0
        %505 = vmatprep.subr.mxu0 0.0
        %506 = vmatpush1.xpose.msra.mxu0 0.0
        %507 = vmatprep.subr.mxu0 0.0
        %508 = vmatpush1.xpose.msra.mxu0 0.0
        %509 = vmatprep.subr.mxu0 0.0
        %510 = vmatpush1.xpose.msra.mxu0 0.0
        %511 = vmatprep.subr.mxu0 0.0
        %512 = vmatpush1.xpose.msra.mxu0 0.0
        %513 = vmatprep.subr.mxu0 0.0
        %514 = vmatpush1.xpose.msra.mxu0 0.0
        %515 = vmatprep.subr.mxu0 0.0
        %516 = vmatpush1.xpose.msra.mxu0 0.0
        %517 = vmatprep.subr.mxu0 0.0
        %518 = vmatpush1.xpose.msra.mxu0 0.0
        %519 = vmatprep.subr.mxu0 0.0
        %520 = vmatpush1.xpose.msra.mxu0 0.0
        %521 = vmatprep.subr.mxu0 0.0
        %522 = vmatpush1.xpose.msra.mxu0 0.0
        %523 = vmatprep.subr.mxu0 0.0
        %524 = vmatpush1.xpose.msra.mxu0 0.0
        %525 = vmatprep.subr.mxu0 0.0
        %526 = vmatpush1.xpose.msra.mxu0 0.0
        %527 = vmatprep.subr.mxu0 0.0
        %528 = vmatpush1.xpose.msra.mxu0 0.0
        %529 = vmatprep.subr.mxu0 0.0
        %530 = vmatpush1.xpose.msra.mxu0 0.0
        %531 = vmatprep.subr.mxu0 0.0
        %532 = vmatpush1.xpose.msra.mxu0 0.0
        %533 = vmatprep.subr.mxu0 0.0
        %534 = vmatpush1.xpose.msra.mxu0 0.0
        %535 = vmatprep.subr.mxu0 0.0
        %536 = vmatpush1.xpose.msra.mxu0 0.0
        %537 = vmatprep.subr.mxu0 0.0
        %538 = vmatpush1.xpose.msra.mxu0 0.0
        %539 = vmatprep.subr.mxu0 0.0
        %540 = vmatpush1.xpose.msra.mxu0 0.0
        %541 = vmatprep.subr.mxu0 0.0
        %542 = vmatpush1.xpose.msra.mxu0 0.0
        %543 = vmatprep.subr.mxu0 0.0
        %544 = vmatpush1.xpose.msra.mxu0 0.0
        %545 = vmatprep.mubr.f32.mxu0 0.0
        %546 = vmatmul.mubr.f32.gmra.mrb[0].mxu0 %v477
        %v547 = vpop.f32.mrb[0].mxu0
        %v548 = vadd.f32 0.0, %v547
        %v549 = vpop.f32.mrb[0].mxu0
        %550 = vdwg.mxu0
        %552 = vrot.lane.b32.xlu0 %v379, 96
        %v553 = vpop.permute.xlu0 %552
        %v554 = vsel %vm399, %v379, 0
        %v556 = vsel %vm399, %v553, 0
        %558 = vmatprep.subr.mxu0 0.0
        %559 = vmatpush1.xpose.msra.mxu0 %v556
        %560 = vmatprep.subr.mxu0 0.0
        %561 = vmatpush1.xpose.msra.mxu0 0.0
        %562 = vmatprep.subr.mxu0 0.0
        %563 = vmatpush1.xpose.msra.mxu0 0.0
        %564 = vmatprep.subr.mxu0 0.0
        %565 = vmatpush1.xpose.msra.mxu0 0.0
        %566 = vmatprep.subr.mxu0 0.0
        %567 = vmatpush1.xpose.msra.mxu0 0.0
        %568 = vmatprep.subr.mxu0 0.0
        %569 = vmatpush1.xpose.msra.mxu0 0.0
        %570 = vmatprep.subr.mxu0 0.0
        %571 = vmatpush1.xpose.msra.mxu0 0.0
        %572 = vmatprep.subr.mxu0 0.0
        %573 = vmatpush1.xpose.msra.mxu0 0.0
        %574 = vmatprep.subr.mxu0 0.0
        %575 = vmatpush1.xpose.msra.mxu0 0.0
        %576 = vmatprep.subr.mxu0 0.0
        %577 = vmatpush1.xpose.msra.mxu0 0.0
        %578 = vmatprep.subr.mxu0 0.0
        %579 = vmatpush1.xpose.msra.mxu0 0.0
        %580 = vmatprep.subr.mxu0 0.0
        %581 = vmatpush1.xpose.msra.mxu0 0.0
        %582 = vmatprep.subr.mxu0 0.0
        %583 = vmatpush1.xpose.msra.mxu0 0.0
        %584 = vmatprep.subr.mxu0 0.0
        %585 = vmatpush1.xpose.msra.mxu0 0.0
        %586 = vmatprep.subr.mxu0 0.0
        %587 = vmatpush1.xpose.msra.mxu0 0.0
        %588 = vmatprep.subr.mxu0 0.0
        %589 = vmatpush1.xpose.msra.mxu0 0.0
        %590 = vmatprep.subr.mxu0 0.0
        %591 = vmatpush1.xpose.msra.mxu0 0.0
        %592 = vmatprep.subr.mxu0 0.0
        %593 = vmatpush1.xpose.msra.mxu0 0.0
        %594 = vmatprep.subr.mxu0 0.0
        %595 = vmatpush1.xpose.msra.mxu0 0.0
        %596 = vmatprep.subr.mxu0 0.0
        %597 = vmatpush1.xpose.msra.mxu0 0.0
        %598 = vmatprep.subr.mxu0 0.0
        %599 = vmatpush1.xpose.msra.mxu0 0.0
        %600 = vmatprep.subr.mxu0 0.0
        %601 = vmatpush1.xpose.msra.mxu0 0.0
        %602 = vmatprep.subr.mxu0 0.0
        %603 = vmatpush1.xpose.msra.mxu0 0.0
        %604 = vmatprep.subr.mxu0 0.0
        %605 = vmatpush1.xpose.msra.mxu0 0.0
        %606 = vmatprep.subr.mxu0 0.0
        %607 = vmatpush1.xpose.msra.mxu0 0.0
        %608 = vmatprep.subr.mxu0 0.0
        %609 = vmatpush1.xpose.msra.mxu0 0.0
        %610 = vmatprep.subr.mxu0 0.0
        %611 = vmatpush1.xpose.msra.mxu0 0.0
        %612 = vmatprep.subr.mxu0 0.0
        %613 = vmatpush1.xpose.msra.mxu0 0.0
        %614 = vmatprep.subr.mxu0 0.0
        %615 = vmatpush1.xpose.msra.mxu0 0.0
        %616 = vmatprep.subr.mxu0 0.0
        %617 = vmatpush1.xpose.msra.mxu0 0.0
        %618 = vmatprep.subr.mxu0 0.0
        %619 = vmatpush1.xpose.msra.mxu0 0.0
        %620 = vmatprep.subr.mxu0 0.0
        %621 = vmatpush1.xpose.msra.mxu0 0.0
        %622 = vmatprep.mubr.f32.mxu0 0.0
        %623 = vmatmul.mubr.f32.gmra.mrb[0].mxu0 %v554
        %v624 = vpop.f32.mrb[0].mxu0
        %v625 = vadd.f32 0.0, %v624
        %v626 = vpop.f32.mrb[0].mxu0
        %627 = vdwg.mxu0
        %629 = vrot.lane.b32.xlu0 %v384, 96
        %v630 = vpop.permute.xlu0 %629
        %v631 = vsel %vm399, %v384, 0
        %v633 = vsel %vm399, %v630, 0
        %635 = vmatprep.subr.mxu0 0.0
        %636 = vmatpush1.xpose.msra.mxu0 %v633
        %637 = vmatprep.subr.mxu0 0.0
        %638 = vmatpush1.xpose.msra.mxu0 0.0
        %639 = vmatprep.subr.mxu0 0.0
        %640 = vmatpush1.xpose.msra.mxu0 0.0
        %641 = vmatprep.subr.mxu0 0.0
        %642 = vmatpush1.xpose.msra.mxu0 0.0
        %643 = vmatprep.subr.mxu0 0.0
        %644 = vmatpush1.xpose.msra.mxu0 0.0
        %645 = vmatprep.subr.mxu0 0.0
        %646 = vmatpush1.xpose.msra.mxu0 0.0
        %647 = vmatprep.subr.mxu0 0.0
        %648 = vmatpush1.xpose.msra.mxu0 0.0
        %649 = vmatprep.subr.mxu0 0.0
        %650 = vmatpush1.xpose.msra.mxu0 0.0
        %651 = vmatprep.subr.mxu0 0.0
        %652 = vmatpush1.xpose.msra.mxu0 0.0
        %653 = vmatprep.subr.mxu0 0.0
        %654 = vmatpush1.xpose.msra.mxu0 0.0
        %655 = vmatprep.subr.mxu0 0.0
        %656 = vmatpush1.xpose.msra.mxu0 0.0
        %657 = vmatprep.subr.mxu0 0.0
        %658 = vmatpush1.xpose.msra.mxu0 0.0
        %659 = vmatprep.subr.mxu0 0.0
        %660 = vmatpush1.xpose.msra.mxu0 0.0
        %661 = vmatprep.subr.mxu0 0.0
        %662 = vmatpush1.xpose.msra.mxu0 0.0
        %663 = vmatprep.subr.mxu0 0.0
        %664 = vmatpush1.xpose.msra.mxu0 0.0
        %665 = vmatprep.subr.mxu0 0.0
        %666 = vmatpush1.xpose.msra.mxu0 0.0
        %667 = vmatprep.subr.mxu0 0.0
        %668 = vmatpush1.xpose.msra.mxu0 0.0
        %669 = vmatprep.subr.mxu0 0.0
        %670 = vmatpush1.xpose.msra.mxu0 0.0
        %671 = vmatprep.subr.mxu0 0.0
        %672 = vmatpush1.xpose.msra.mxu0 0.0
        %673 = vmatprep.subr.mxu0 0.0
        %674 = vmatpush1.xpose.msra.mxu0 0.0
        %675 = vmatprep.subr.mxu0 0.0
        %676 = vmatpush1.xpose.msra.mxu0 0.0
        %677 = vmatprep.subr.mxu0 0.0
        %678 = vmatpush1.xpose.msra.mxu0 0.0
        %679 = vmatprep.subr.mxu0 0.0
        %680 = vmatpush1.xpose.msra.mxu0 0.0
        %681 = vmatprep.subr.mxu0 0.0
        %682 = vmatpush1.xpose.msra.mxu0 0.0
        %683 = vmatprep.subr.mxu0 0.0
        %684 = vmatpush1.xpose.msra.mxu0 0.0
        %685 = vmatprep.subr.mxu0 0.0
        %686 = vmatpush1.xpose.msra.mxu0 0.0
        %687 = vmatprep.subr.mxu0 0.0
        %688 = vmatpush1.xpose.msra.mxu0 0.0
        %689 = vmatprep.subr.mxu0 0.0
        %690 = vmatpush1.xpose.msra.mxu0 0.0
        %691 = vmatprep.subr.mxu0 0.0
        %692 = vmatpush1.xpose.msra.mxu0 0.0
        %693 = vmatprep.subr.mxu0 0.0
        %694 = vmatpush1.xpose.msra.mxu0 0.0
        %695 = vmatprep.subr.mxu0 0.0
        %696 = vmatpush1.xpose.msra.mxu0 0.0
        %697 = vmatprep.subr.mxu0 0.0
        %698 = vmatpush1.xpose.msra.mxu0 0.0
        %699 = vmatprep.mubr.f32.mxu0 0.0
        %700 = vmatmul.mubr.f32.gmra.mrb[0].mxu0 %v631
        %v701 = vpop.f32.mrb[0].mxu0
        %v702 = vadd.f32 0.0, %v701
        %v703 = vpop.f32.mrb[0].mxu0
        %704 = vdwg.mxu0
        %v705 = vmul.f32 %v471, 0.35355338
        %v706 = vmul.f32 %v548, 0.35355338
        %v707 = vmul.f32 %v625, 0.35355338
        %v708 = vmul.f32 %v702, 0.35355338
        %v709 = vsel %vm399, %v705, -inf
        %710 = vmax.xlane.f32.xlu0 %v709
        %v711 = vpop.xlane.xlu0 %710
        %v712 = vsel %vm399, %v706, -inf
        %713 = vmax.xlane.f32.xlu0 %v712
        %v714 = vpop.xlane.xlu0 %713
        %v715 = vsel %vm399, %v707, -inf
        %716 = vmax.xlane.f32.xlu0 %v715
        %v717 = vpop.xlane.xlu0 %716
        %v718 = vsel %vm399, %v708, -inf
        %719 = vmax.xlane.f32.xlu0 %v718
        %v720 = vpop.xlane.xlu0 %719
        %v721 = vsub.f32 %v705, %v711
        %v722 = vsub.f32 %v706, %v714
        %v723 = vsub.f32 %v707, %v717
        %v724 = vsub.f32 %v708, %v720
        %v725 = vmul.f32 %v721, 1.442695
        %v726 = vpow.pop %v725
        %v727 = vmul.f32 %v722, 1.442695
        %v728 = vpow.pop %v727
        %v729 = vmul.f32 %v723, 1.442695
        %v730 = vpow.pop %v729
        %v731 = vmul.f32 %v724, 1.442695
        %v732 = vpow.pop %v731
        %v733 = vsel %vm391, 1, 0
        %vm734 = vcmp.eq.s32.totalorder %v733, 1
        %v735 = vsel %vm734, %v726, 0.0
        %v736 = vsel %vm734, %v728, 0.0
        %v737 = vsel %vm734, %v730, 0.0
        %v738 = vsel %vm734, %v732, 0.0
        %v739 = vsel %vm399, %v735, 0.0
        %740 = vadd.xlane.f32.xlu0 %v739
        %v741 = vpop.xlane.xlu0 %740
        %v742 = vsel %vm399, %v736, 0.0
        %743 = vadd.xlane.f32.xlu0 %v742
        %v744 = vpop.xlane.xlu0 %743
        %v745 = vsel %vm399, %v737, 0.0
        %746 = vadd.xlane.f32.xlu0 %v745
        %v747 = vpop.xlane.xlu0 %746
        %v748 = vsel %vm399, %v738, 0.0
        %749 = vadd.xlane.f32.xlu0 %v748
        %v750 = vpop.xlane.xlu0 %749
        %v751 = vrcp.pop %v741
        %v752 = vmul.f32 %v735, %v751
        %v753 = vrcp.pop %v744
        %v754 = vmul.f32 %v736, %v753
        %v755 = vrcp.pop %v747
        %v756 = vmul.f32 %v737, %v755
        %v757 = vrcp.pop %v750
        %v758 = vmul.f32 %v738, %v757
        %759 = vrot.lane.b32.xlu0 %v369, 64
        %v760 = vpop.permute.xlu0 %759
        %v763 = vsel %vm399, %v752, 0
        %765 = vmatprep.subr.mxu0 0.0
        %766 = vmatpush1.msra.mxu0 %v760
        %767 = vmatprep.subr.mxu0 0.0
        %768 = vmatpush1.msra.mxu0 0.0
        %769 = vmatprep.subr.mxu0 0.0
        %770 = vmatpush1.msra.mxu0 0.0
        %771 = vmatprep.subr.mxu0 0.0
        %772 = vmatpush1.msra.mxu0 0.0
        %773 = vmatprep.subr.mxu0 0.0
        %774 = vmatpush1.msra.mxu0 0.0
        %775 = vmatprep.subr.mxu0 0.0
        %776 = vmatpush1.msra.mxu0 0.0
        %777 = vmatprep.subr.mxu0 0.0
        %778 = vmatpush1.msra.mxu0 0.0
        %779 = vmatprep.subr.mxu0 0.0
        %780 = vmatpush1.msra.mxu0 0.0
        %781 = vmatprep.subr.mxu0 0.0
        %782 = vmatpush1.msra.mxu0 0.0
        %783 = vmatprep.subr.mxu0 0.0
        %784 = vmatpush1.msra.mxu0 0.0
        %785 = vmatprep.subr.mxu0 0.0
        %786 = vmatpush1.msra.mxu0 0.0
        %787 = vmatprep.subr.mxu0 0.0
        %788 = vmatpush1.msra.mxu0 0.0
        %789 = vmatprep.subr.mxu0 0.0
        %790 = vmatpush1.msra.mxu0 0.0
        %791 = vmatprep.subr.mxu0 0.0
        %792 = vmatpush1.msra.mxu0 0.0
        %793 = vmatprep.subr.mxu0 0.0
        %794 = vmatpush1.msra.mxu0 0.0
        %795 = vmatprep.subr.mxu0 0.0
        %796 = vmatpush1.msra.mxu0 0.0
        %797 = vmatprep.subr.mxu0 0.0
        %798 = vmatpush1.msra.mxu0 0.0
        %799 = vmatprep.subr.mxu0 0.0
        %800 = vmatpush1.msra.mxu0 0.0
        %801 = vmatprep.subr.mxu0 0.0
        %802 = vmatpush1.msra.mxu0 0.0
        %803 = vmatprep.subr.mxu0 0.0
        %804 = vmatpush1.msra.mxu0 0.0
        %805 = vmatprep.subr.mxu0 0.0
        %806 = vmatpush1.msra.mxu0 0.0
        %807 = vmatprep.subr.mxu0 0.0
        %808 = vmatpush1.msra.mxu0 0.0
        %809 = vmatprep.subr.mxu0 0.0
        %810 = vmatpush1.msra.mxu0 0.0
        %811 = vmatprep.subr.mxu0 0.0
        %812 = vmatpush1.msra.mxu0 0.0
        %813 = vmatprep.subr.mxu0 0.0
        %814 = vmatpush1.msra.mxu0 0.0
        %815 = vmatprep.subr.mxu0 0.0
        %816 = vmatpush1.msra.mxu0 0.0
        %817 = vmatprep.subr.mxu0 0.0
        %818 = vmatpush1.msra.mxu0 0.0
        %819 = vmatprep.subr.mxu0 0.0
        %820 = vmatpush1.msra.mxu0 0.0
        %821 = vmatprep.subr.mxu0 0.0
        %822 = vmatpush1.msra.mxu0 0.0
        %823 = vmatprep.subr.mxu0 0.0
        %824 = vmatpush1.msra.mxu0 0.0
        %825 = vmatprep.subr.mxu0 0.0
        %826 = vmatpush1.msra.mxu0 0.0
        %827 = vmatprep.subr.mxu0 0.0
        %828 = vmatpush1.msra.mxu0 0.0
        %829 = vmatprep.mubr.f32.mxu0 0.0
        %830 = vmatmul.mubr.f32.gmra.mrb[0].mxu0 %v763
        %v831 = vpop.f32.mrb[0].mxu0
        %v832 = vadd.f32 0.0, %v831
        %v833 = vpop.f32.mrb[0].mxu0
        %834 = vdwg.mxu0
        %835 = vrot.lane.b32.xlu0 %v374, 64
        %v836 = vpop.permute.xlu0 %835
        %v839 = vsel %vm399, %v754, 0
        %841 = vmatprep.subr.mxu0 0.0
        %842 = vmatpush1.msra.mxu0 %v836
        %843 = vmatprep.subr.mxu0 0.0
        %844 = vmatpush1.msra.mxu0 0.0
        %845 = vmatprep.subr.mxu0 0.0
        %846 = vmatpush1.msra.mxu0 0.0
        %847 = vmatprep.subr.mxu0 0.0
        %848 = vmatpush1.msra.mxu0 0.0
        %849 = vmatprep.subr.mxu0 0.0
        %850 = vmatpush1.msra.mxu0 0.0
        %851 = vmatprep.subr.mxu0 0.0
        %852 = vmatpush1.msra.mxu0 0.0
        %853 = vmatprep.subr.mxu0 0.0
        %854 = vmatpush1.msra.mxu0 0.0
        %855 = vmatprep.subr.mxu0 0.0
        %856 = vmatpush1.msra.mxu0 0.0
        %857 = vmatprep.subr.mxu0 0.0
        %858 = vmatpush1.msra.mxu0 0.0
        %859 = vmatprep.subr.mxu0 0.0
        %860 = vmatpush1.msra.mxu0 0.0
        %861 = vmatprep.subr.mxu0 0.0
        %862 = vmatpush1.msra.mxu0 0.0
        %863 = vmatprep.subr.mxu0 0.0
        %864 = vmatpush1.msra.mxu0 0.0
        %865 = vmatprep.subr.mxu0 0.0
        %866 = vmatpush1.msra.mxu0 0.0
        %867 = vmatprep.subr.mxu0 0.0
        %868 = vmatpush1.msra.mxu0 0.0
        %869 = vmatprep.subr.mxu0 0.0
        %870 = vmatpush1.msra.mxu0 0.0
        %871 = vmatprep.subr.mxu0 0.0
        %872 = vmatpush1.msra.mxu0 0.0
        %873 = vmatprep.subr.mxu0 0.0
        %874 = vmatpush1.msra.mxu0 0.0
        %875 = vmatprep.subr.mxu0 0.0
        %876 = vmatpush1.msra.mxu0 0.0
        %877 = vmatprep.subr.mxu0 0.0
        %878 = vmatpush1.msra.mxu0 0.0
        %879 = vmatprep.subr.mxu0 0.0
        %880 = vmatpush1.msra.mxu0 0.0
        %881 = vmatprep.subr.mxu0 0.0
        %882 = vmatpush1.msra.mxu0 0.0
        %883 = vmatprep.subr.mxu0 0.0
        %884 = vmatpush1.msra.mxu0 0.0
        %885 = vmatprep.subr.mxu0 0.0
        %886 = vmatpush1.msra.mxu0 0.0
        %887 = vmatprep.subr.mxu0 0.0
        %888 = vmatpush1.msra.mxu0 0.0
        %889 = vmatprep.subr.mxu0 0.0
        %890 = vmatpush1.msra.mxu0 0.0
        %891 = vmatprep.subr.mxu0 0.0
        %892 = vmatpush1.msra.mxu0 0.0
        %893 = vmatprep.subr.mxu0 0.0
        %894 = vmatpush1.msra.mxu0 0.0
        %895 = vmatprep.subr.mxu0 0.0
        %896 = vmatpush1.msra.mxu0 0.0
        %897 = vmatprep.subr.mxu0 0.0
        %898 = vmatpush1.msra.mxu0 0.0
        %899 = vmatprep.subr.mxu0 0.0
        %900 = vmatpush1.msra.mxu0 0.0
        %901 = vmatprep.subr.mxu0 0.0
        %902 = vmatpush1.msra.mxu0 0.0
        %903 = vmatprep.subr.mxu0 0.0
        %904 = vmatpush1.msra.mxu0 0.0
        %905 = vmatprep.mubr.f32.mxu0 0.0
        %906 = vmatmul.mubr.f32.gmra.mrb[0].mxu0 %v839
        %v907 = vpop.f32.mrb[0].mxu0
        %v908 = vadd.f32 0.0, %v907
        %v909 = vpop.f32.mrb[0].mxu0
        %910 = vdwg.mxu0
        %911 = vrot.lane.b32.xlu0 %v379, 64
        %v912 = vpop.permute.xlu0 %911
        %v915 = vsel %vm399, %v756, 0
        %917 = vmatprep.subr.mxu0 0.0
        %918 = vmatpush1.msra.mxu0 %v912
        %919 = vmatprep.subr.mxu0 0.0
        %920 = vmatpush1.msra.mxu0 0.0
        %921 = vmatprep.subr.mxu0 0.0
        %922 = vmatpush1.msra.mxu0 0.0
        %923 = vmatprep.subr.mxu0 0.0
        %924 = vmatpush1.msra.mxu0 0.0
        %925 = vmatprep.subr.mxu0 0.0
        %926 = vmatpush1.msra.mxu0 0.0
        %927 = vmatprep.subr.mxu0 0.0
        %928 = vmatpush1.msra.mxu0 0.0
        %929 = vmatprep.subr.mxu0 0.0
        %930 = vmatpush1.msra.mxu0 0.0
        %931 = vmatprep.subr.mxu0 0.0
        %932 = vmatpush1.msra.mxu0 0.0
        %933 = vmatprep.subr.mxu0 0.0
        %934 = vmatpush1.msra.mxu0 0.0
        %935 = vmatprep.subr.mxu0 0.0
        %936 = vmatpush1.msra.mxu0 0.0
        %937 = vmatprep.subr.mxu0 0.0
        %938 = vmatpush1.msra.mxu0 0.0
        %939 = vmatprep.subr.mxu0 0.0
        %940 = vmatpush1.msra.mxu0 0.0
        %941 = vmatprep.subr.mxu0 0.0
        %942 = vmatpush1.msra.mxu0 0.0
        %943 = vmatprep.subr.mxu0 0.0
        %944 = vmatpush1.msra.mxu0 0.0
        %945 = vmatprep.subr.mxu0 0.0
        %946 = vmatpush1.msra.mxu0 0.0
        %947 = vmatprep.subr.mxu0 0.0
        %948 = vmatpush1.msra.mxu0 0.0
        %949 = vmatprep.subr.mxu0 0.0
        %950 = vmatpush1.msra.mxu0 0.0
        %951 = vmatprep.subr.mxu0 0.0
        %952 = vmatpush1.msra.mxu0 0.0
        %953 = vmatprep.subr.mxu0 0.0
        %954 = vmatpush1.msra.mxu0 0.0
        %955 = vmatprep.subr.mxu0 0.0
        %956 = vmatpush1.msra.mxu0 0.0
        %957 = vmatprep.subr.mxu0 0.0
        %958 = vmatpush1.msra.mxu0 0.0
        %959 = vmatprep.subr.mxu0 0.0
        %960 = vmatpush1.msra.mxu0 0.0
        %961 = vmatprep.subr.mxu0 0.0
        %962 = vmatpush1.msra.mxu0 0.0
        %963 = vmatprep.subr.mxu0 0.0
        %964 = vmatpush1.msra.mxu0 0.0
        %965 = vmatprep.subr.mxu0 0.0
        %966 = vmatpush1.msra.mxu0 0.0
        %967 = vmatprep.subr.mxu0 0.0
        %968 = vmatpush1.msra.mxu0 0.0
        %969 = vmatprep.subr.mxu0 0.0
        %970 = vmatpush1.msra.mxu0 0.0
        %971 = vmatprep.subr.mxu0 0.0
        %972 = vmatpush1.msra.mxu0 0.0
        %973 = vmatprep.subr.mxu0 0.0
        %974 = vmatpush1.msra.mxu0 0.0
        %975 = vmatprep.subr.mxu0 0.0
        %976 = vmatpush1.msra.mxu0 0.0
        %977 = vmatprep.subr.mxu0 0.0
        %978 = vmatpush1.msra.mxu0 0.0
        %979 = vmatprep.subr.mxu0 0.0
        %980 = vmatpush1.msra.mxu0 0.0
        %981 = vmatprep.mubr.f32.mxu0 0.0
        %982 = vmatmul.mubr.f32.gmra.mrb[0].mxu0 %v915
        %v983 = vpop.f32.mrb[0].mxu0
        %v984 = vadd.f32 0.0, %v983
        %v985 = vpop.f32.mrb[0].mxu0
        %986 = vdwg.mxu0
        %987 = vrot.lane.b32.xlu0 %v384, 64
        %v988 = vpop.permute.xlu0 %987
        %v991 = vsel %vm399, %v758, 0
        %993 = vmatprep.subr.mxu0 0.0
        %994 = vmatpush1.msra.mxu0 %v988
        %995 = vmatprep.subr.mxu0 0.0
        %996 = vmatpush1.msra.mxu0 0.0
        %997 = vmatprep.subr.mxu0 0.0
        %998 = vmatpush1.msra.mxu0 0.0
        %999 = vmatprep.subr.mxu0 0.0
        %1000 = vmatpush1.msra.mxu0 0.0
        %1001 = vmatprep.subr.mxu0 0.0
        %1002 = vmatpush1.msra.mxu0 0.0
        %1003 = vmatprep.subr.mxu0 0.0
        %1004 = vmatpush1.msra.mxu0 0.0
        %1005 = vmatprep.subr.mxu0 0.0
        %1006 = vmatpush1.msra.mxu0 0.0
        %1007 = vmatprep.subr.mxu0 0.0
        %1008 = vmatpush1.msra.mxu0 0.0
        %1009 = vmatprep.subr.mxu0 0.0
        %1010 = vmatpush1.msra.mxu0 0.0
        %1011 = vmatprep.subr.mxu0 0.0
        %1012 = vmatpush1.msra.mxu0 0.0
        %1013 = vmatprep.subr.mxu0 0.0
        %1014 = vmatpush1.msra.mxu0 0.0
        %1015 = vmatprep.subr.mxu0 0.0
        %1016 = vmatpush1.msra.mxu0 0.0
        %1017 = vmatprep.subr.mxu0 0.0
        %1018 = vmatpush1.msra.mxu0 0.0
        %1019 = vmatprep.subr.mxu0 0.0
        %1020 = vmatpush1.msra.mxu0 0.0
        %1021 = vmatprep.subr.mxu0 0.0
        %1022 = vmatpush1.msra.mxu0 0.0
        %1023 = vmatprep.subr.mxu0 0.0
        %1024 = vmatpush1.msra.mxu0 0.0
        %1025 = vmatprep.subr.mxu0 0.0
        %1026 = vmatpush1.msra.mxu0 0.0
        %1027 = vmatprep.subr.mxu0 0.0
        %1028 = vmatpush1.msra.mxu0 0.0
        %1029 = vmatprep.subr.mxu0 0.0
        %1030 = vmatpush1.msra.mxu0 0.0
        %1031 = vmatprep.subr.mxu0 0.0
        %1032 = vmatpush1.msra.mxu0 0.0
        %1033 = vmatprep.subr.mxu0 0.0
        %1034 = vmatpush1.msra.mxu0 0.0
        %1035 = vmatprep.subr.mxu0 0.0
        %1036 = vmatpush1.msra.mxu0 0.0
        %1037 = vmatprep.subr.mxu0 0.0
        %1038 = vmatpush1.msra.mxu0 0.0
        %1039 = vmatprep.subr.mxu0 0.0
        %1040 = vmatpush1.msra.mxu0 0.0
        %1041 = vmatprep.subr.mxu0 0.0
        %1042 = vmatpush1.msra.mxu0 0.0
        %1043 = vmatprep.subr.mxu0 0.0
        %1044 = vmatpush1.msra.mxu0 0.0
        %1045 = vmatprep.subr.mxu0 0.0
        %1046 = vmatpush1.msra.mxu0 0.0
        %1047 = vmatprep.subr.mxu0 0.0
        %1048 = vmatpush1.msra.mxu0 0.0
        %1049 = vmatprep.subr.mxu0 0.0
        %1050 = vmatpush1.msra.mxu0 0.0
        %1051 = vmatprep.subr.mxu0 0.0
        %1052 = vmatpush1.msra.mxu0 0.0
        %1053 = vmatprep.subr.mxu0 0.0
        %1054 = vmatpush1.msra.mxu0 0.0
        %1055 = vmatprep.subr.mxu0 0.0
        %1056 = vmatpush1.msra.mxu0 0.0
        %1057 = vmatprep.mubr.f32.mxu0 0.0
        %1058 = vmatmul.mubr.f32.gmra.mrb[0].mxu0 %v991
        %v1059 = vpop.f32.mrb[0].mxu0
        %v1060 = vadd.f32 0.0, %v1059
        %v1061 = vpop.f32.mrb[0].mxu0
        %1062 = vdwg.mxu0
        %1063 = vrot.lane.b32.xlu0 %v369, 120
        %v1064 = vpop.permute.xlu0 %1063
        %1065 = vrot.lane.b32.xlu0 %v369, 88
        %v1066 = vpop.permute.xlu0 %1065
        %v1067 = vsel %vm399, %v1064, 0
        %v1069 = vsel %vm399, %v1066, 0
        %1071 = vmatprep.subr.mxu0 0.0
        %1072 = vmatpush1.xpose.msra.mxu0 %v1069
        %1073 = vmatprep.subr.mxu0 0.0
        %1074 = vmatpush1.xpose.msra.mxu0 0.0
        %1075 = vmatprep.subr.mxu0 0.0
        %1076 = vmatpush1.xpose.msra.mxu0 0.0
        %1077 = vmatprep.subr.mxu0 0.0
        %1078 = vmatpush1.xpose.msra.mxu0 0.0
        %1079 = vmatprep.subr.mxu0 0.0
        %1080 = vmatpush1.xpose.msra.mxu0 0.0
        %1081 = vmatprep.subr.mxu0 0.0
        %1082 = vmatpush1.xpose.msra.mxu0 0.0
        %1083 = vmatprep.subr.mxu0 0.0
        %1084 = vmatpush1.xpose.msra.mxu0 0.0
        %1085 = vmatprep.subr.mxu0 0.0
        %1086 = vmatpush1.xpose.msra.mxu0 0.0
        %1087 = vmatprep.subr.mxu0 0.0
        %1088 = vmatpush1.xpose.msra.mxu0 0.0
        %1089 = vmatprep.subr.mxu0 0.0
        %1090 = vmatpush1.xpose.msra.mxu0 0.0
        %1091 = vmatprep.subr.mxu0 0.0
        %1092 = vmatpush1.xpose.msra.mxu0 0.0
        %1093 = vmatprep.subr.mxu0 0.0
        %1094 = vmatpush1.xpose.msra.mxu0 0.0
        %1095 = vmatprep.subr.mxu0 0.0
        %1096 = vmatpush1.xpose.msra.mxu0 0.0
        %1097 = vmatprep.subr.mxu0 0.0
        %1098 = vmatpush1.xpose.msra.mxu0 0.0
        %1099 = vmatprep.subr.mxu0 0.0
        %1100 = vmatpush1.xpose.msra.mxu0 0.0
        %1101 = vmatprep.subr.mxu0 0.0
        %1102 = vmatpush1.xpose.msra.mxu0 0.0
        %1103 = vmatprep.subr.mxu0 0.0
        %1104 = vmatpush1.xpose.msra.mxu0 0.0
        %1105 = vmatprep.subr.mxu0 0.0
        %1106 = vmatpush1.xpose.msra.mxu0 0.0
        %1107 = vmatprep.subr.mxu0 0.0
        %1108 = vmatpush1.xpose.msra.mxu0 0.0
        %1109 = vmatprep.subr.mxu0 0.0
        %1110 = vmatpush1.xpose.msra.mxu0 0.0
        %1111 = vmatprep.subr.mxu0 0.0
        %1112 = vmatpush1.xpose.msra.mxu0 0.0
        %1113 = vmatprep.subr.mxu0 0.0
        %1114 = vmatpush1.xpose.msra.mxu0 0.0
        %1115 = vmatprep.subr.mxu0 0.0
        %1116 = vmatpush1.xpose.msra.mxu0 0.0
        %1117 = vmatprep.subr.mxu0 0.0
        %1118 = vmatpush1.xpose.msra.mxu0 0.0
        %1119 = vmatprep.subr.mxu0 0.0
        %1120 = vmatpush1.xpose.msra.mxu0 0.0
        %1121 = vmatprep.subr.mxu0 0.0
        %1122 = vmatpush1.xpose.msra.mxu0 0.0
        %1123 = vmatprep.subr.mxu0 0.0
        %1124 = vmatpush1.xpose.msra.mxu0 0.0
        %1125 = vmatprep.subr.mxu0 0.0
        %1126 = vmatpush1.xpose.msra.mxu0 0.0
        %1127 = vmatprep.subr.mxu0 0.0
        %1128 = vmatpush1.xpose.msra.mxu0 0.0
        %1129 = vmatprep.subr.mxu0 0.0
        %1130 = vmatpush1.xpose.msra.mxu0 0.0
        %1131 = vmatprep.subr.mxu0 0.0
        %1132 = vmatpush1.xpose.msra.mxu0 0.0
        %1133 = vmatprep.subr.mxu0 0.0
        %1134 = vmatpush1.xpose.msra.mxu0 0.0
        %1135 = vmatprep.mubr.f32.mxu0 0.0
        %1136 = vmatmul.mubr.f32.gmra.mrb[0].mxu0 %v1067
        %v1137 = vpop.f32.mrb[0].mxu0
        %v1138 = vadd.f32 0.0, %v1137
        %v1139 = vpop.f32.mrb[0].mxu0
        %1140 = vdwg.mxu0
        %1141 = vrot.lane.b32.xlu0 %v374, 120
        %v1142 = vpop.permute.xlu0 %1141
        %1143 = vrot.lane.b32.xlu0 %v374, 88
        %v1144 = vpop.permute.xlu0 %1143
        %v1145 = vsel %vm399, %v1142, 0
        %v1147 = vsel %vm399, %v1144, 0
        %1149 = vmatprep.subr.mxu0 0.0
        %1150 = vmatpush1.xpose.msra.mxu0 %v1147
        %1151 = vmatprep.subr.mxu0 0.0
        %1152 = vmatpush1.xpose.msra.mxu0 0.0
        %1153 = vmatprep.subr.mxu0 0.0
        %1154 = vmatpush1.xpose.msra.mxu0 0.0
        %1155 = vmatprep.subr.mxu0 0.0
        %1156 = vmatpush1.xpose.msra.mxu0 0.0
        %1157 = vmatprep.subr.mxu0 0.0
        %1158 = vmatpush1.xpose.msra.mxu0 0.0
        %1159 = vmatprep.subr.mxu0 0.0
        %1160 = vmatpush1.xpose.msra.mxu0 0.0
        %1161 = vmatprep.subr.mxu0 0.0
        %1162 = vmatpush1.xpose.msra.mxu0 0.0
        %1163 = vmatprep.subr.mxu0 0.0
        %1164 = vmatpush1.xpose.msra.mxu0 0.0
        %1165 = vmatprep.subr.mxu0 0.0
        %1166 = vmatpush1.xpose.msra.mxu0 0.0
        %1167 = vmatprep.subr.mxu0 0.0
        %1168 = vmatpush1.xpose.msra.mxu0 0.0
        %1169 = vmatprep.subr.mxu0 0.0
        %1170 = vmatpush1.xpose.msra.mxu0 0.0
        %1171 = vmatprep.subr.mxu0 0.0
        %1172 = vmatpush1.xpose.msra.mxu0 0.0
        %1173 = vmatprep.subr.mxu0 0.0
        %1174 = vmatpush1.xpose.msra.mxu0 0.0
        %1175 = vmatprep.subr.mxu0 0.0
        %1176 = vmatpush1.xpose.msra.mxu0 0.0
        %1177 = vmatprep.subr.mxu0 0.0
        %1178 = vmatpush1.xpose.msra.mxu0 0.0
        %1179 = vmatprep.subr.mxu0 0.0
        %1180 = vmatpush1.xpose.msra.mxu0 0.0
        %1181 = vmatprep.subr.mxu0 0.0
        %1182 = vmatpush1.xpose.msra.mxu0 0.0
        %1183 = vmatprep.subr.mxu0 0.0
        %1184 = vmatpush1.xpose.msra.mxu0 0.0
        %1185 = vmatprep.subr.mxu0 0.0
        %1186 = vmatpush1.xpose.msra.mxu0 0.0
        %1187 = vmatprep.subr.mxu0 0.0
        %1188 = vmatpush1.xpose.msra.mxu0 0.0
        %1189 = vmatprep.subr.mxu0 0.0
        %1190 = vmatpush1.xpose.msra.mxu0 0.0
        %1191 = vmatprep.subr.mxu0 0.0
        %1192 = vmatpush1.xpose.msra.mxu0 0.0
        %1193 = vmatprep.subr.mxu0 0.0
        %1194 = vmatpush1.xpose.msra.mxu0 0.0
        %1195 = vmatprep.subr.mxu0 0.0
        %1196 = vmatpush1.xpose.msra.mxu0 0.0
        %1197 = vmatprep.subr.mxu0 0.0
        %1198 = vmatpush1.xpose.msra.mxu0 0.0
        %1199 = vmatprep.subr.mxu0 0.0
        %1200 = vmatpush1.xpose.msra.mxu0 0.0
        %1201 = vmatprep.subr.mxu0 0.0
        %1202 = vmatpush1.xpose.msra.mxu0 0.0
        %1203 = vmatprep.subr.mxu0 0.0
        %1204 = vmatpush1.xpose.msra.mxu0 0.0
        %1205 = vmatprep.subr.mxu0 0.0
        %1206 = vmatpush1.xpose.msra.mxu0 0.0
        %1207 = vmatprep.subr.mxu0 0.0
        %1208 = vmatpush1.xpose.msra.mxu0 0.0
        %1209 = vmatprep.subr.mxu0 0.0
        %1210 = vmatpush1.xpose.msra.mxu0 0.0
        %1211 = vmatprep.subr.mxu0 0.0
        %1212 = vmatpush1.xpose.msra.mxu0 0.0
        %1213 = vmatprep.mubr.f32.mxu0 0.0
        %1214 = vmatmul.mubr.f32.gmra.mrb[0].mxu0 %v1145
        %v1215 = vpop.f32.mrb[0].mxu0
        %v1216 = vadd.f32 0.0, %v1215
        %v1217 = vpop.f32.mrb[0].mxu0
        %1218 = vdwg.mxu0
        %1219 = vrot.lane.b32.xlu0 %v379, 120
        %v1220 = vpop.permute.xlu0 %1219
        %1221 = vrot.lane.b32.xlu0 %v379, 88
        %v1222 = vpop.permute.xlu0 %1221
        %v1223 = vsel %vm399, %v1220, 0
        %v1225 = vsel %vm399, %v1222, 0
        %1227 = vmatprep.subr.mxu0 0.0
        %1228 = vmatpush1.xpose.msra.mxu0 %v1225
        %1229 = vmatprep.subr.mxu0 0.0
        %1230 = vmatpush1.xpose.msra.mxu0 0.0
        %1231 = vmatprep.subr.mxu0 0.0
        %1232 = vmatpush1.xpose.msra.mxu0 0.0
        %1233 = vmatprep.subr.mxu0 0.0
        %1234 = vmatpush1.xpose.msra.mxu0 0.0
        %1235 = vmatprep.subr.mxu0 0.0
        %1236 = vmatpush1.xpose.msra.mxu0 0.0
        %1237 = vmatprep.subr.mxu0 0.0
        %1238 = vmatpush1.xpose.msra.mxu0 0.0
        %1239 = vmatprep.subr.mxu0 0.0
        %1240 = vmatpush1.xpose.msra.mxu0 0.0
        %1241 = vmatprep.subr.mxu0 0.0
        %1242 = vmatpush1.xpose.msra.mxu0 0.0
        %1243 = vmatprep.subr.mxu0 0.0
        %1244 = vmatpush1.xpose.msra.mxu0 0.0
        %1245 = vmatprep.subr.mxu0 0.0
        %1246 = vmatpush1.xpose.msra.mxu0 0.0
        %1247 = vmatprep.subr.mxu0 0.0
        %1248 = vmatpush1.xpose.msra.mxu0 0.0
        %1249 = vmatprep.subr.mxu0 0.0
        %1250 = vmatpush1.xpose.msra.mxu0 0.0
        %1251 = vmatprep.subr.mxu0 0.0
        %1252 = vmatpush1.xpose.msra.mxu0 0.0
        %1253 = vmatprep.subr.mxu0 0.0
        %1254 = vmatpush1.xpose.msra.mxu0 0.0
        %1255 = vmatprep.subr.mxu0 0.0
        %1256 = vmatpush1.xpose.msra.mxu0 0.0
        %1257 = vmatprep.subr.mxu0 0.0
        %1258 = vmatpush1.xpose.msra.mxu0 0.0
        %1259 = vmatprep.subr.mxu0 0.0
        %1260 = vmatpush1.xpose.msra.mxu0 0.0
        %1261 = vmatprep.subr.mxu0 0.0
        %1262 = vmatpush1.xpose.msra.mxu0 0.0
        %1263 = vmatprep.subr.mxu0 0.0
        %1264 = vmatpush1.xpose.msra.mxu0 0.0
        %1265 = vmatprep.subr.mxu0 0.0
        %1266 = vmatpush1.xpose.msra.mxu0 0.0
        %1267 = vmatprep.subr.mxu0 0.0
        %1268 = vmatpush1.xpose.msra.mxu0 0.0
        %1269 = vmatprep.subr.mxu0 0.0
        %1270 = vmatpush1.xpose.msra.mxu0 0.0
        %1271 = vmatprep.subr.mxu0 0.0
        %1272 = vmatpush1.xpose.msra.mxu0 0.0
        %1273 = vmatprep.subr.mxu0 0.0
        %1274 = vmatpush1.xpose.msra.mxu0 0.0
        %1275 = vmatprep.subr.mxu0 0.0
        %1276 = vmatpush1.xpose.msra.mxu0 0.0
        %1277 = vmatprep.subr.mxu0 0.0
        %1278 = vmatpush1.xpose.msra.mxu0 0.0
        %1279 = vmatprep.subr.mxu0 0.0
        %1280 = vmatpush1.xpose.msra.mxu0 0.0
        %1281 = vmatprep.subr.mxu0 0.0
        %1282 = vmatpush1.xpose.msra.mxu0 0.0
        %1283 = vmatprep.subr.mxu0 0.0
        %1284 = vmatpush1.xpose.msra.mxu0 0.0
        %1285 = vmatprep.subr.mxu0 0.0
        %1286 = vmatpush1.xpose.msra.mxu0 0.0
        %1287 = vmatprep.subr.mxu0 0.0
        %1288 = vmatpush1.xpose.msra.mxu0 0.0
        %1289 = vmatprep.subr.mxu0 0.0
        %1290 = vmatpush1.xpose.msra.mxu0 0.0
        %1291 = vmatprep.mubr.f32.mxu0 0.0
        %1292 = vmatmul.mubr.f32.gmra.mrb[0].mxu0 %v1223
        %v1293 = vpop.f32.mrb[0].mxu0
        %v1294 = vadd.f32 0.0, %v1293
        %v1295 = vpop.f32.mrb[0].mxu0
        %1296 = vdwg.mxu0
        %1297 = vrot.lane.b32.xlu0 %v384, 120
        %v1298 = vpop.permute.xlu0 %1297
        %1299 = vrot.lane.b32.xlu0 %v384, 88
        %v1300 = vpop.permute.xlu0 %1299
        %v1301 = vsel %vm399, %v1298, 0
        %v1303 = vsel %vm399, %v1300, 0
        %1305 = vmatprep.subr.mxu0 0.0
        %1306 = vmatpush1.xpose.msra.mxu0 %v1303
        %1307 = vmatprep.subr.mxu0 0.0
        %1308 = vmatpush1.xpose.msra.mxu0 0.0
        %1309 = vmatprep.subr.mxu0 0.0
        %1310 = vmatpush1.xpose.msra.mxu0 0.0
        %1311 = vmatprep.subr.mxu0 0.0
        %1312 = vmatpush1.xpose.msra.mxu0 0.0
        %1313 = vmatprep.subr.mxu0 0.0
        %1314 = vmatpush1.xpose.msra.mxu0 0.0
        %1315 = vmatprep.subr.mxu0 0.0
        %1316 = vmatpush1.xpose.msra.mxu0 0.0
        %1317 = vmatprep.subr.mxu0 0.0
        %1318 = vmatpush1.xpose.msra.mxu0 0.0
        %1319 = vmatprep.subr.mxu0 0.0
        %1320 = vmatpush1.xpose.msra.mxu0 0.0
        %1321 = vmatprep.subr.mxu0 0.0
        %1322 = vmatpush1.xpose.msra.mxu0 0.0
        %1323 = vmatprep.subr.mxu0 0.0
        %1324 = vmatpush1.xpose.msra.mxu0 0.0
        %1325 = vmatprep.subr.mxu0 0.0
        %1326 = vmatpush1.xpose.msra.mxu0 0.0
        %1327 = vmatprep.subr.mxu0 0.0
        %1328 = vmatpush1.xpose.msra.mxu0 0.0
        %1329 = vmatprep.subr.mxu0 0.0
        %1330 = vmatpush1.xpose.msra.mxu0 0.0
        %1331 = vmatprep.subr.mxu0 0.0
        %1332 = vmatpush1.xpose.msra.mxu0 0.0
        %1333 = vmatprep.subr.mxu0 0.0
        %1334 = vmatpush1.xpose.msra.mxu0 0.0
        %1335 = vmatprep.subr.mxu0 0.0
        %1336 = vmatpush1.xpose.msra.mxu0 0.0
        %1337 = vmatprep.subr.mxu0 0.0
        %1338 = vmatpush1.xpose.msra.mxu0 0.0
        %1339 = vmatprep.subr.mxu0 0.0
        %1340 = vmatpush1.xpose.msra.mxu0 0.0
        %1341 = vmatprep.subr.mxu0 0.0
        %1342 = vmatpush1.xpose.msra.mxu0 0.0
        %1343 = vmatprep.subr.mxu0 0.0
        %1344 = vmatpush1.xpose.msra.mxu0 0.0
        %1345 = vmatprep.subr.mxu0 0.0
        %1346 = vmatpush1.xpose.msra.mxu0 0.0
        %1347 = vmatprep.subr.mxu0 0.0
        %1348 = vmatpush1.xpose.msra.mxu0 0.0
        %1349 = vmatprep.subr.mxu0 0.0
        %1350 = vmatpush1.xpose.msra.mxu0 0.0
        %1351 = vmatprep.subr.mxu0 0.0
        %1352 = vmatpush1.xpose.msra.mxu0 0.0
        %1353 = vmatprep.subr.mxu0 0.0
        %1354 = vmatpush1.xpose.msra.mxu0 0.0
        %1355 = vmatprep.subr.mxu0 0.0
        %1356 = vmatpush1.xpose.msra.mxu0 0.0
        %1357 = vmatprep.subr.mxu0 0.0
        %1358 = vmatpush1.xpose.msra.mxu0 0.0
        %1359 = vmatprep.subr.mxu0 0.0
        %1360 = vmatpush1.xpose.msra.mxu0 0.0
        %1361 = vmatprep.subr.mxu0 0.0
        %1362 = vmatpush1.xpose.msra.mxu0 0.0
        %1363 = vmatprep.subr.mxu0 0.0
        %1364 = vmatpush1.xpose.msra.mxu0 0.0
        %1365 = vmatprep.subr.mxu0 0.0
        %1366 = vmatpush1.xpose.msra.mxu0 0.0
        %1367 = vmatprep.subr.mxu0 0.0
        %1368 = vmatpush1.xpose.msra.mxu0 0.0
        %1369 = vmatprep.mubr.f32.mxu0 0.0
        %1370 = vmatmul.mubr.f32.gmra.mrb[0].mxu0 %v1301
        %v1371 = vpop.f32.mrb[0].mxu0
        %v1372 = vadd.f32 0.0, %v1371
        %v1373 = vpop.f32.mrb[0].mxu0
        %1374 = vdwg.mxu0
        %v1375 = vmul.f32 %v1138, 0.35355338
        %v1376 = vmul.f32 %v1216, 0.35355338
        %v1377 = vmul.f32 %v1294, 0.35355338
        %v1378 = vmul.f32 %v1372, 0.35355338
        %v1379 = vsel %vm399, %v1375, -inf
        %1380 = vmax.xlane.f32.xlu0 %v1379
        %v1381 = vpop.xlane.xlu0 %1380
        %v1382 = vsel %vm399, %v1376, -inf
        %1383 = vmax.xlane.f32.xlu0 %v1382
        %v1384 = vpop.xlane.xlu0 %1383
        %v1385 = vsel %vm399, %v1377, -inf
        %1386 = vmax.xlane.f32.xlu0 %v1385
        %v1387 = vpop.xlane.xlu0 %1386
        %v1388 = vsel %vm399, %v1378, -inf
        %1389 = vmax.xlane.f32.xlu0 %v1388
        %v1390 = vpop.xlane.xlu0 %1389
        %v1391 = vsub.f32 %v1375, %v1381
        %v1392 = vsub.f32 %v1376, %v1384
        %v1393 = vsub.f32 %v1377, %v1387
        %v1394 = vsub.f32 %v1378, %v1390
        %v1395 = vmul.f32 %v1391, 1.442695
        %v1396 = vpow.pop %v1395
        %v1397 = vmul.f32 %v1392, 1.442695
        %v1398 = vpow.pop %v1397
        %v1399 = vmul.f32 %v1393, 1.442695
        %v1400 = vpow.pop %v1399
        %v1401 = vmul.f32 %v1394, 1.442695
        %v1402 = vpow.pop %v1401
        %v1403 = vsel %vm734, %v1396, 0.0
        %v1404 = vsel %vm734, %v1398, 0.0
        %v1405 = vsel %vm734, %v1400, 0.0
        %v1406 = vsel %vm734, %v1402, 0.0
        %v1407 = vsel %vm399, %v1403, 0.0
        %1408 = vadd.xlane.f32.xlu0 %v1407
        %v1409 = vpop.xlane.xlu0 %1408
        %v1410 = vsel %vm399, %v1404, 0.0
        %1411 = vadd.xlane.f32.xlu0 %v1410
        %v1412 = vpop.xlane.xlu0 %1411
        %v1413 = vsel %vm399, %v1405, 0.0
        %1414 = vadd.xlane.f32.xlu0 %v1413
        %v1415 = vpop.xlane.xlu0 %1414
        %v1416 = vsel %vm399, %v1406, 0.0
        %1417 = vadd.xlane.f32.xlu0 %v1416
        %v1418 = vpop.xlane.xlu0 %1417
        %v1419 = vrcp.pop %v1409
        %v1420 = vmul.f32 %v1403, %v1419
        %v1421 = vrcp.pop %v1412
        %v1422 = vmul.f32 %v1404, %v1421
        %v1423 = vrcp.pop %v1415
        %v1424 = vmul.f32 %v1405, %v1423
        %v1425 = vrcp.pop %v1418
        %v1426 = vmul.f32 %v1406, %v1425
        %1427 = vrot.lane.b32.xlu0 %v369, 56
        %v1428 = vpop.permute.xlu0 %1427
        %v1431 = vsel %vm399, %v1420, 0
        %1433 = vmatprep.subr.mxu0 0.0
        %1434 = vmatpush1.msra.mxu0 %v1428
        %1435 = vmatprep.subr.mxu0 0.0
        %1436 = vmatpush1.msra.mxu0 0.0
        %1437 = vmatprep.subr.mxu0 0.0
        %1438 = vmatpush1.msra.mxu0 0.0
        %1439 = vmatprep.subr.mxu0 0.0
        %1440 = vmatpush1.msra.mxu0 0.0
        %1441 = vmatprep.subr.mxu0 0.0
        %1442 = vmatpush1.msra.mxu0 0.0
        %1443 = vmatprep.subr.mxu0 0.0
        %1444 = vmatpush1.msra.mxu0 0.0
        %1445 = vmatprep.subr.mxu0 0.0
        %1446 = vmatpush1.msra.mxu0 0.0
        %1447 = vmatprep.subr.mxu0 0.0
        %1448 = vmatpush1.msra.mxu0 0.0
        %1449 = vmatprep.subr.mxu0 0.0
        %1450 = vmatpush1.msra.mxu0 0.0
        %1451 = vmatprep.subr.mxu0 0.0
        %1452 = vmatpush1.msra.mxu0 0.0
        %1453 = vmatprep.subr.mxu0 0.0
        %1454 = vmatpush1.msra.mxu0 0.0
        %1455 = vmatprep.subr.mxu0 0.0
        %1456 = vmatpush1.msra.mxu0 0.0
        %1457 = vmatprep.subr.mxu0 0.0
        %1458 = vmatpush1.msra.mxu0 0.0
        %1459 = vmatprep.subr.mxu0 0.0
        %1460 = vmatpush1.msra.mxu0 0.0
        %1461 = vmatprep.subr.mxu0 0.0
        %1462 = vmatpush1.msra.mxu0 0.0
        %1463 = vmatprep.subr.mxu0 0.0
        %1464 = vmatpush1.msra.mxu0 0.0
        %1465 = vmatprep.subr.mxu0 0.0
        %1466 = vmatpush1.msra.mxu0 0.0
        %1467 = vmatprep.subr.mxu0 0.0
        %1468 = vmatpush1.msra.mxu0 0.0
        %1469 = vmatprep.subr.mxu0 0.0
        %1470 = vmatpush1.msra.mxu0 0.0
        %1471 = vmatprep.subr.mxu0 0.0
        %1472 = vmatpush1.msra.mxu0 0.0
        %1473 = vmatprep.subr.mxu0 0.0
        %1474 = vmatpush1.msra.mxu0 0.0
        %1475 = vmatprep.subr.mxu0 0.0
        %1476 = vmatpush1.msra.mxu0 0.0
        %1477 = vmatprep.subr.mxu0 0.0
        %1478 = vmatpush1.msra.mxu0 0.0
        %1479 = vmatprep.subr.mxu0 0.0
        %1480 = vmatpush1.msra.mxu0 0.0
        %1481 = vmatprep.subr.mxu0 0.0
        %1482 = vmatpush1.msra.mxu0 0.0
        %1483 = vmatprep.subr.mxu0 0.0
        %1484 = vmatpush1.msra.mxu0 0.0
        %1485 = vmatprep.subr.mxu0 0.0
        %1486 = vmatpush1.msra.mxu0 0.0
        %1487 = vmatprep.subr.mxu0 0.0
        %1488 = vmatpush1.msra.mxu0 0.0
        %1489 = vmatprep.subr.mxu0 0.0
        %1490 = vmatpush1.msra.mxu0 0.0
        %1491 = vmatprep.subr.mxu0 0.0
        %1492 = vmatpush1.msra.mxu0 0.0
        %1493 = vmatprep.subr.mxu0 0.0
        %1494 = vmatpush1.msra.mxu0 0.0
        %1495 = vmatprep.subr.mxu0 0.0
        %1496 = vmatpush1.msra.mxu0 0.0
        %1497 = vmatprep.mubr.f32.mxu0 0.0
        %1498 = vmatmul.mubr.f32.gmra.mrb[0].mxu0 %v1431
        %v1499 = vpop.f32.mrb[0].mxu0
        %v1500 = vadd.f32 0.0, %v1499
        %v1501 = vpop.f32.mrb[0].mxu0
        %1502 = vdwg.mxu0
        %1503 = vrot.lane.b32.xlu0 %v374, 56
        %v1504 = vpop.permute.xlu0 %1503
        %v1507 = vsel %vm399, %v1422, 0
        %1509 = vmatprep.subr.mxu0 0.0
        %1510 = vmatpush1.msra.mxu0 %v1504
        %1511 = vmatprep.subr.mxu0 0.0
        %1512 = vmatpush1.msra.mxu0 0.0
        %1513 = vmatprep.subr.mxu0 0.0
        %1514 = vmatpush1.msra.mxu0 0.0
        %1515 = vmatprep.subr.mxu0 0.0
        %1516 = vmatpush1.msra.mxu0 0.0
        %1517 = vmatprep.subr.mxu0 0.0
        %1518 = vmatpush1.msra.mxu0 0.0
        %1519 = vmatprep.subr.mxu0 0.0
        %1520 = vmatpush1.msra.mxu0 0.0
        %1521 = vmatprep.subr.mxu0 0.0
        %1522 = vmatpush1.msra.mxu0 0.0
        %1523 = vmatprep.subr.mxu0 0.0
        %1524 = vmatpush1.msra.mxu0 0.0
        %1525 = vmatprep.subr.mxu0 0.0
        %1526 = vmatpush1.msra.mxu0 0.0
        %1527 = vmatprep.subr.mxu0 0.0
        %1528 = vmatpush1.msra.mxu0 0.0
        %1529 = vmatprep.subr.mxu0 0.0
        %1530 = vmatpush1.msra.mxu0 0.0
        %1531 = vmatprep.subr.mxu0 0.0
        %1532 = vmatpush1.msra.mxu0 0.0
        %1533 = vmatprep.subr.mxu0 0.0
        %1534 = vmatpush1.msra.mxu0 0.0
        %1535 = vmatprep.subr.mxu0 0.0
        %1536 = vmatpush1.msra.mxu0 0.0
        %1537 = vmatprep.subr.mxu0 0.0
        %1538 = vmatpush1.msra.mxu0 0.0
        %1539 = vmatprep.subr.mxu0 0.0
        %1540 = vmatpush1.msra.mxu0 0.0
        %1541 = vmatprep.subr.mxu0 0.0
        %1542 = vmatpush1.msra.mxu0 0.0
        %1543 = vmatprep.subr.mxu0 0.0
        %1544 = vmatpush1.msra.mxu0 0.0
        %1545 = vmatprep.subr.mxu0 0.0
        %1546 = vmatpush1.msra.mxu0 0.0
        %1547 = vmatprep.subr.mxu0 0.0
        %1548 = vmatpush1.msra.mxu0 0.0
        %1549 = vmatprep.subr.mxu0 0.0
        %1550 = vmatpush1.msra.mxu0 0.0
        %1551 = vmatprep.subr.mxu0 0.0
        %1552 = vmatpush1.msra.mxu0 0.0
        %1553 = vmatprep.subr.mxu0 0.0
        %1554 = vmatpush1.msra.mxu0 0.0
        %1555 = vmatprep.subr.mxu0 0.0
        %1556 = vmatpush1.msra.mxu0 0.0
        %1557 = vmatprep.subr.mxu0 0.0
        %1558 = vmatpush1.msra.mxu0 0.0
        %1559 = vmatprep.subr.mxu0 0.0
        %1560 = vmatpush1.msra.mxu0 0.0
        %1561 = vmatprep.subr.mxu0 0.0
        %1562 = vmatpush1.msra.mxu0 0.0
        %1563 = vmatprep.subr.mxu0 0.0
        %1564 = vmatpush1.msra.mxu0 0.0
        %1565 = vmatprep.subr.mxu0 0.0
        %1566 = vmatpush1.msra.mxu0 0.0
        %1567 = vmatprep.subr.mxu0 0.0
        %1568 = vmatpush1.msra.mxu0 0.0
        %1569 = vmatprep.subr.mxu0 0.0
        %1570 = vmatpush1.msra.mxu0 0.0
        %1571 = vmatprep.subr.mxu0 0.0
        %1572 = vmatpush1.msra.mxu0 0.0
        %1573 = vmatprep.mubr.f32.mxu0 0.0
        %1574 = vmatmul.mubr.f32.gmra.mrb[0].mxu0 %v1507
        %v1575 = vpop.f32.mrb[0].mxu0
        %v1576 = vadd.f32 0.0, %v1575
        %v1577 = vpop.f32.mrb[0].mxu0
        %1578 = vdwg.mxu0
        %1579 = vrot.lane.b32.xlu0 %v379, 56
        %v1580 = vpop.permute.xlu0 %1579
        %v1583 = vsel %vm399, %v1424, 0
        %1585 = vmatprep.subr.mxu0 0.0
        %1586 = vmatpush1.msra.mxu0 %v1580
        %1587 = vmatprep.subr.mxu0 0.0
        %1588 = vmatpush1.msra.mxu0 0.0
        %1589 = vmatprep.subr.mxu0 0.0
        %1590 = vmatpush1.msra.mxu0 0.0
        %1591 = vmatprep.subr.mxu0 0.0
        %1592 = vmatpush1.msra.mxu0 0.0
        %1593 = vmatprep.subr.mxu0 0.0
        %1594 = vmatpush1.msra.mxu0 0.0
        %1595 = vmatprep.subr.mxu0 0.0
        %1596 = vmatpush1.msra.mxu0 0.0
        %1597 = vmatprep.subr.mxu0 0.0
        %1598 = vmatpush1.msra.mxu0 0.0
        %1599 = vmatprep.subr.mxu0 0.0
        %1600 = vmatpush1.msra.mxu0 0.0
        %1601 = vmatprep.subr.mxu0 0.0
        %1602 = vmatpush1.msra.mxu0 0.0
        %1603 = vmatprep.subr.mxu0 0.0
        %1604 = vmatpush1.msra.mxu0 0.0
        %1605 = vmatprep.subr.mxu0 0.0
        %1606 = vmatpush1.msra.mxu0 0.0
        %1607 = vmatprep.subr.mxu0 0.0
        %1608 = vmatpush1.msra.mxu0 0.0
        %1609 = vmatprep.subr.mxu0 0.0
        %1610 = vmatpush1.msra.mxu0 0.0
        %1611 = vmatprep.subr.mxu0 0.0
        %1612 = vmatpush1.msra.mxu0 0.0
        %1613 = vmatprep.subr.mxu0 0.0
        %1614 = vmatpush1.msra.mxu0 0.0
        %1615 = vmatprep.subr.mxu0 0.0
        %1616 = vmatpush1.msra.mxu0 0.0
        %1617 = vmatprep.subr.mxu0 0.0
        %1618 = vmatpush1.msra.mxu0 0.0
        %1619 = vmatprep.subr.mxu0 0.0
        %1620 = vmatpush1.msra.mxu0 0.0
        %1621 = vmatprep.subr.mxu0 0.0
        %1622 = vmatpush1.msra.mxu0 0.0
        %1623 = vmatprep.subr.mxu0 0.0
        %1624 = vmatpush1.msra.mxu0 0.0
        %1625 = vmatprep.subr.mxu0 0.0
        %1626 = vmatpush1.msra.mxu0 0.0
        %1627 = vmatprep.subr.mxu0 0.0
        %1628 = vmatpush1.msra.mxu0 0.0
        %1629 = vmatprep.subr.mxu0 0.0
        %1630 = vmatpush1.msra.mxu0 0.0
        %1631 = vmatprep.subr.mxu0 0.0
        %1632 = vmatpush1.msra.mxu0 0.0
        %1633 = vmatprep.subr.mxu0 0.0
        %1634 = vmatpush1.msra.mxu0 0.0
        %1635 = vmatprep.subr.mxu0 0.0
        %1636 = vmatpush1.msra.mxu0 0.0
        %1637 = vmatprep.subr.mxu0 0.0
        %1638 = vmatpush1.msra.mxu0 0.0
        %1639 = vmatprep.subr.mxu0 0.0
        %1640 = vmatpush1.msra.mxu0 0.0
        %1641 = vmatprep.subr.mxu0 0.0
        %1642 = vmatpush1.msra.mxu0 0.0
        %1643 = vmatprep.subr.mxu0 0.0
        %1644 = vmatpush1.msra.mxu0 0.0
        %1645 = vmatprep.subr.mxu0 0.0
        %1646 = vmatpush1.msra.mxu0 0.0
        %1647 = vmatprep.subr.mxu0 0.0
        %1648 = vmatpush1.msra.mxu0 0.0
        %1649 = vmatprep.mubr.f32.mxu0 0.0
        %1650 = vmatmul.mubr.f32.gmra.mrb[0].mxu0 %v1583
        %v1651 = vpop.f32.mrb[0].mxu0
        %v1652 = vadd.f32 0.0, %v1651
        %v1653 = vpop.f32.mrb[0].mxu0
        %1654 = vdwg.mxu0
        %1655 = vrot.lane.b32.xlu0 %v384, 56
        %v1656 = vpop.permute.xlu0 %1655
        %v1659 = vsel %vm399, %v1426, 0
        %1661 = vmatprep.subr.mxu0 0.0
        %1662 = vmatpush1.msra.mxu0 %v1656
        %1663 = vmatprep.subr.mxu0 0.0
        %1664 = vmatpush1.msra.mxu0 0.0
        %1665 = vmatprep.subr.mxu0 0.0
        %1666 = vmatpush1.msra.mxu0 0.0
        %1667 = vmatprep.subr.mxu0 0.0
        %1668 = vmatpush1.msra.mxu0 0.0
        %1669 = vmatprep.subr.mxu0 0.0
        %1670 = vmatpush1.msra.mxu0 0.0
        %1671 = vmatprep.subr.mxu0 0.0
        %1672 = vmatpush1.msra.mxu0 0.0
        %1673 = vmatprep.subr.mxu0 0.0
        %1674 = vmatpush1.msra.mxu0 0.0
        %1675 = vmatprep.subr.mxu0 0.0
        %1676 = vmatpush1.msra.mxu0 0.0
        %1677 = vmatprep.subr.mxu0 0.0
        %1678 = vmatpush1.msra.mxu0 0.0
        %1679 = vmatprep.subr.mxu0 0.0
        %1680 = vmatpush1.msra.mxu0 0.0
        %1681 = vmatprep.subr.mxu0 0.0
        %1682 = vmatpush1.msra.mxu0 0.0
        %1683 = vmatprep.subr.mxu0 0.0
        %1684 = vmatpush1.msra.mxu0 0.0
        %1685 = vmatprep.subr.mxu0 0.0
        %1686 = vmatpush1.msra.mxu0 0.0
        %1687 = vmatprep.subr.mxu0 0.0
        %1688 = vmatpush1.msra.mxu0 0.0
        %1689 = vmatprep.subr.mxu0 0.0
        %1690 = vmatpush1.msra.mxu0 0.0
        %1691 = vmatprep.subr.mxu0 0.0
        %1692 = vmatpush1.msra.mxu0 0.0
        %1693 = vmatprep.subr.mxu0 0.0
        %1694 = vmatpush1.msra.mxu0 0.0
        %1695 = vmatprep.subr.mxu0 0.0
        %1696 = vmatpush1.msra.mxu0 0.0
        %1697 = vmatprep.subr.mxu0 0.0
        %1698 = vmatpush1.msra.mxu0 0.0
        %1699 = vmatprep.subr.mxu0 0.0
        %1700 = vmatpush1.msra.mxu0 0.0
        %1701 = vmatprep.subr.mxu0 0.0
        %1702 = vmatpush1.msra.mxu0 0.0
        %1703 = vmatprep.subr.mxu0 0.0
        %1704 = vmatpush1.msra.mxu0 0.0
        %1705 = vmatprep.subr.mxu0 0.0
        %1706 = vmatpush1.msra.mxu0 0.0
        %1707 = vmatprep.subr.mxu0 0.0
        %1708 = vmatpush1.msra.mxu0 0.0
        %1709 = vmatprep.subr.mxu0 0.0
        %1710 = vmatpush1.msra.mxu0 0.0
        %1711 = vmatprep.subr.mxu0 0.0
        %1712 = vmatpush1.msra.mxu0 0.0
        %1713 = vmatprep.subr.mxu0 0.0
        %1714 = vmatpush1.msra.mxu0 0.0
        %1715 = vmatprep.subr.mxu0 0.0
        %1716 = vmatpush1.msra.mxu0 0.0
        %1717 = vmatprep.subr.mxu0 0.0
        %1718 = vmatpush1.msra.mxu0 0.0
        %1719 = vmatprep.subr.mxu0 0.0
        %1720 = vmatpush1.msra.mxu0 0.0
        %1721 = vmatprep.subr.mxu0 0.0
        %1722 = vmatpush1.msra.mxu0 0.0
        %1723 = vmatprep.subr.mxu0 0.0
        %1724 = vmatpush1.msra.mxu0 0.0
        %1725 = vmatprep.mubr.f32.mxu0 0.0
        %1726 = vmatmul.mubr.f32.gmra.mrb[0].mxu0 %v1659
        %v1727 = vpop.f32.mrb[0].mxu0
        %v1728 = vadd.f32 0.0, %v1727
        %v1729 = vpop.f32.mrb[0].mxu0
        %1730 = vdwg.mxu0
        %v1732 = vsel %vm399, %v1500, 0
        %v1735 = vsel %vm399, %v1576, 0
        %v1738 = vsel %vm399, %v1652, 0
        %v1741 = vsel %vm399, %v1728, 0
        %1743 = vmatprep.subr.mxu0 0.0
        %1744 = vmatpush1.msra.mxu0 %v393
        %1745 = vmatprep.subr.mxu0 0.0
        %1746 = vmatpush1.msra.mxu0 0.0
        %1747 = vmatprep.subr.mxu0 0.0
        %1748 = vmatpush1.msra.mxu0 0.0
        %1749 = vmatprep.subr.mxu0 0.0
        %1750 = vmatpush1.msra.mxu0 0.0
        %1751 = vmatprep.subr.mxu0 0.0
        %1752 = vmatpush1.msra.mxu0 0.0
        %1753 = vmatprep.subr.mxu0 0.0
        %1754 = vmatpush1.msra.mxu0 0.0
        %1755 = vmatprep.subr.mxu0 0.0
        %1756 = vmatpush1.msra.mxu0 0.0
        %1757 = vmatprep.subr.mxu0 0.0
        %1758 = vmatpush1.msra.mxu0 0.0
        %1759 = vmatprep.subr.mxu0 0.0
        %1760 = vmatpush1.msra.mxu0 0.0
        %1761 = vmatprep.subr.mxu0 0.0
        %1762 = vmatpush1.msra.mxu0 0.0
        %1763 = vmatprep.subr.mxu0 0.0
        %1764 = vmatpush1.msra.mxu0 0.0
        %1765 = vmatprep.subr.mxu0 0.0
        %1766 = vmatpush1.msra.mxu0 0.0
        %1767 = vmatprep.subr.mxu0 0.0
        %1768 = vmatpush1.msra.mxu0 0.0
        %1769 = vmatprep.subr.mxu0 0.0
        %1770 = vmatpush1.msra.mxu0 0.0
        %1771 = vmatprep.subr.mxu0 0.0
        %1772 = vmatpush1.msra.mxu0 0.0
        %1773 = vmatprep.subr.mxu0 0.0
        %1774 = vmatpush1.msra.mxu0 0.0
        %1775 = vmatprep.subr.mxu0 0.0
        %1776 = vmatpush1.msra.mxu0 0.0
        %1777 = vmatprep.subr.mxu0 0.0
        %1778 = vmatpush1.msra.mxu0 0.0
        %1779 = vmatprep.subr.mxu0 0.0
        %1780 = vmatpush1.msra.mxu0 0.0
        %1781 = vmatprep.subr.mxu0 0.0
        %1782 = vmatpush1.msra.mxu0 0.0
        %1783 = vmatprep.subr.mxu0 0.0
        %1784 = vmatpush1.msra.mxu0 0.0
        %1785 = vmatprep.subr.mxu0 0.0
        %1786 = vmatpush1.msra.mxu0 0.0
        %1787 = vmatprep.subr.mxu0 0.0
        %1788 = vmatpush1.msra.mxu0 0.0
        %1789 = vmatprep.subr.mxu0 0.0
        %1790 = vmatpush1.msra.mxu0 0.0
        %1791 = vmatprep.subr.mxu0 0.0
        %1792 = vmatpush1.msra.mxu0 0.0
        %1793 = vmatprep.subr.mxu0 0.0
        %1794 = vmatpush1.msra.mxu0 0.0
        %1795 = vmatprep.subr.mxu0 0.0
        %1796 = vmatpush1.msra.mxu0 0.0
        %1797 = vmatprep.subr.mxu0 0.0
        %1798 = vmatpush1.msra.mxu0 0.0
        %1799 = vmatprep.subr.mxu0 0.0
        %1800 = vmatpush1.msra.mxu0 0.0
        %1801 = vmatprep.subr.mxu0 0.0
        %1802 = vmatpush1.msra.mxu0 0.0
        %1803 = vmatprep.subr.mxu0 0.0
        %1804 = vmatpush1.msra.mxu0 0.0
        %1805 = vmatprep.subr.mxu0 0.0
        %1806 = vmatpush1.msra.mxu0 0.0
        %1807 = vmatprep.mubr.f32.mxu0 0.0
        %1808 = vmatmul.mubr.f32.gmra.mrb[0].mxu0 %v1732
        %v1809 = vpop.f32.mrb[0].mxu0
        %v1810 = vadd.f32 0.0, %v1809
        %v1811 = vpop.f32.mrb[0].mxu0
        %1812 = vmatprep.mubr.f32.mxu0 0.0
        %1813 = vmatmul.mubr.f32.gmra.mrb[0].mxu0 %v1735
        %v1814 = vpop.f32.mrb[0].mxu0
        %v1815 = vadd.f32 0.0, %v1814
        %v1816 = vpop.f32.mrb[0].mxu0
        %1817 = vmatprep.mubr.f32.mxu0 0.0
        %1818 = vmatmul.mubr.f32.gmra.mrb[0].mxu0 %v1738
        %v1819 = vpop.f32.mrb[0].mxu0
        %v1820 = vadd.f32 0.0, %v1819
        %v1821 = vpop.f32.mrb[0].mxu0
        %1822 = vmatprep.mubr.f32.mxu0 0.0
        %1823 = vmatmul.mubr.f32.gmra.mrb[0].mxu0 %v1741
        %v1824 = vpop.f32.mrb[0].mxu0
        %v1825 = vadd.f32 0.0, %v1824
        %v1826 = vpop.f32.mrb[0].mxu0
        %1827 = vdwg.mxu0
        %v1829 = vsel %vm399, %v832, 0
        %v1832 = vsel %vm399, %v908, 0
        %v1835 = vsel %vm399, %v984, 0
        %v1838 = vsel %vm399, %v1060, 0
        %1840 = vmatprep.subr.mxu0 0.0
        %1841 = vmatpush1.msra.mxu0 %v392
        %1842 = vmatprep.subr.mxu0 0.0
        %1843 = vmatpush1.msra.mxu0 0.0
        %1844 = vmatprep.subr.mxu0 0.0
        %1845 = vmatpush1.msra.mxu0 0.0
        %1846 = vmatprep.subr.mxu0 0.0
        %1847 = vmatpush1.msra.mxu0 0.0
        %1848 = vmatprep.subr.mxu0 0.0
        %1849 = vmatpush1.msra.mxu0 0.0
        %1850 = vmatprep.subr.mxu0 0.0
        %1851 = vmatpush1.msra.mxu0 0.0
        %1852 = vmatprep.subr.mxu0 0.0
        %1853 = vmatpush1.msra.mxu0 0.0
        %1854 = vmatprep.subr.mxu0 0.0
        %1855 = vmatpush1.msra.mxu0 0.0
        %1856 = vmatprep.subr.mxu0 0.0
        %1857 = vmatpush1.msra.mxu0 0.0
        %1858 = vmatprep.subr.mxu0 0.0
        %1859 = vmatpush1.msra.mxu0 0.0
        %1860 = vmatprep.subr.mxu0 0.0
        %1861 = vmatpush1.msra.mxu0 0.0
        %1862 = vmatprep.subr.mxu0 0.0
        %1863 = vmatpush1.msra.mxu0 0.0
        %1864 = vmatprep.subr.mxu0 0.0
        %1865 = vmatpush1.msra.mxu0 0.0
        %1866 = vmatprep.subr.mxu0 0.0
        %1867 = vmatpush1.msra.mxu0 0.0
        %1868 = vmatprep.subr.mxu0 0.0
        %1869 = vmatpush1.msra.mxu0 0.0
        %1870 = vmatprep.subr.mxu0 0.0
        %1871 = vmatpush1.msra.mxu0 0.0
        %1872 = vmatprep.subr.mxu0 0.0
        %1873 = vmatpush1.msra.mxu0 0.0
        %1874 = vmatprep.subr.mxu0 0.0
        %1875 = vmatpush1.msra.mxu0 0.0
        %1876 = vmatprep.subr.mxu0 0.0
        %1877 = vmatpush1.msra.mxu0 0.0
        %1878 = vmatprep.subr.mxu0 0.0
        %1879 = vmatpush1.msra.mxu0 0.0
        %1880 = vmatprep.subr.mxu0 0.0
        %1881 = vmatpush1.msra.mxu0 0.0
        %1882 = vmatprep.subr.mxu0 0.0
        %1883 = vmatpush1.msra.mxu0 0.0
        %1884 = vmatprep.subr.mxu0 0.0
        %1885 = vmatpush1.msra.mxu0 0.0
        %1886 = vmatprep.subr.mxu0 0.0
        %1887 = vmatpush1.msra.mxu0 0.0
        %1888 = vmatprep.subr.mxu0 0.0
        %1889 = vmatpush1.msra.mxu0 0.0
        %1890 = vmatprep.subr.mxu0 0.0
        %1891 = vmatpush1.msra.mxu0 0.0
        %1892 = vmatprep.subr.mxu0 0.0
        %1893 = vmatpush1.msra.mxu0 0.0
        %1894 = vmatprep.subr.mxu0 0.0
        %1895 = vmatpush1.msra.mxu0 0.0
        %1896 = vmatprep.subr.mxu0 0.0
        %1897 = vmatpush1.msra.mxu0 0.0
        %1898 = vmatprep.subr.mxu0 0.0
        %1899 = vmatpush1.msra.mxu0 0.0
        %1900 = vmatprep.subr.mxu0 0.0
        %1901 = vmatpush1.msra.mxu0 0.0
        %1902 = vmatprep.subr.mxu0 0.0
        %1903 = vmatpush1.msra.mxu0 0.0
        %1904 = vmatprep.mubr.f32.mxu0 0.0
        %1905 = vmatmul.mubr.f32.gmra.mrb[0].mxu0 %v1829
        %v1906 = vpop.f32.mrb[0].mxu0
        %v1907 = vadd.f32 %v1810, %v1906
        %v1908 = vpop.f32.mrb[0].mxu0
        %1909 = vmatprep.mubr.f32.mxu0 0.0
        %1910 = vmatmul.mubr.f32.gmra.mrb[0].mxu0 %v1832
        %v1911 = vpop.f32.mrb[0].mxu0
        %v1912 = vadd.f32 %v1815, %v1911
        %v1913 = vpop.f32.mrb[0].mxu0
        %1914 = vmatprep.mubr.f32.mxu0 0.0
        %1915 = vmatmul.mubr.f32.gmra.mrb[0].mxu0 %v1835
        %v1916 = vpop.f32.mrb[0].mxu0
        %v1917 = vadd.f32 %v1820, %v1916
        %v1918 = vpop.f32.mrb[0].mxu0
        %1919 = vmatprep.mubr.f32.mxu0 0.0
        %1920 = vmatmul.mubr.f32.gmra.mrb[0].mxu0 %v1838
        %v1921 = vpop.f32.mrb[0].mxu0
        %v1922 = vadd.f32 %v1825, %v1921
        %v1923 = vpop.f32.mrb[0].mxu0
        %1924 = vdwg.mxu0
        %1925 = vrot.lane.b32.xlu0 %v369, 112
        %v1926 = vpop.permute.xlu0 %1925
        %1927 = vrot.lane.b32.xlu0 %v369, 80
        %v1928 = vpop.permute.xlu0 %1927
        %v1929 = vsel %vm399, %v1926, 0
        %v1931 = vsel %vm399, %v1928, 0
        %1933 = vmatprep.subr.mxu0 0.0
        %1934 = vmatpush1.xpose.msra.mxu0 %v1931
        %1935 = vmatprep.subr.mxu0 0.0
        %1936 = vmatpush1.xpose.msra.mxu0 0.0
        %1937 = vmatprep.subr.mxu0 0.0
        %1938 = vmatpush1.xpose.msra.mxu0 0.0
        %1939 = vmatprep.subr.mxu0 0.0
        %1940 = vmatpush1.xpose.msra.mxu0 0.0
        %1941 = vmatprep.subr.mxu0 0.0
        %1942 = vmatpush1.xpose.msra.mxu0 0.0
        %1943 = vmatprep.subr.mxu0 0.0
        %1944 = vmatpush1.xpose.msra.mxu0 0.0
        %1945 = vmatprep.subr.mxu0 0.0
        %1946 = vmatpush1.xpose.msra.mxu0 0.0
        %1947 = vmatprep.subr.mxu0 0.0
        %1948 = vmatpush1.xpose.msra.mxu0 0.0
        %1949 = vmatprep.subr.mxu0 0.0
        %1950 = vmatpush1.xpose.msra.mxu0 0.0
        %1951 = vmatprep.subr.mxu0 0.0
        %1952 = vmatpush1.xpose.msra.mxu0 0.0
        %1953 = vmatprep.subr.mxu0 0.0
        %1954 = vmatpush1.xpose.msra.mxu0 0.0
        %1955 = vmatprep.subr.mxu0 0.0
        %1956 = vmatpush1.xpose.msra.mxu0 0.0
        %1957 = vmatprep.subr.mxu0 0.0
        %1958 = vmatpush1.xpose.msra.mxu0 0.0
        %1959 = vmatprep.subr.mxu0 0.0
        %1960 = vmatpush1.xpose.msra.mxu0 0.0
        %1961 = vmatprep.subr.mxu0 0.0
        %1962 = vmatpush1.xpose.msra.mxu0 0.0
        %1963 = vmatprep.subr.mxu0 0.0
        %1964 = vmatpush1.xpose.msra.mxu0 0.0
        %1965 = vmatprep.subr.mxu0 0.0
        %1966 = vmatpush1.xpose.msra.mxu0 0.0
        %1967 = vmatprep.subr.mxu0 0.0
        %1968 = vmatpush1.xpose.msra.mxu0 0.0
        %1969 = vmatprep.subr.mxu0 0.0
        %1970 = vmatpush1.xpose.msra.mxu0 0.0
        %1971 = vmatprep.subr.mxu0 0.0
        %1972 = vmatpush1.xpose.msra.mxu0 0.0
        %1973 = vmatprep.subr.mxu0 0.0
        %1974 = vmatpush1.xpose.msra.mxu0 0.0
        %1975 = vmatprep.subr.mxu0 0.0
        %1976 = vmatpush1.xpose.msra.mxu0 0.0
        %1977 = vmatprep.subr.mxu0 0.0
        %1978 = vmatpush1.xpose.msra.mxu0 0.0
        %1979 = vmatprep.subr.mxu0 0.0
        %1980 = vmatpush1.xpose.msra.mxu0 0.0
        %1981 = vmatprep.subr.mxu0 0.0
        %1982 = vmatpush1.xpose.msra.mxu0 0.0
        %1983 = vmatprep.subr.mxu0 0.0
        %1984 = vmatpush1.xpose.msra.mxu0 0.0
        %1985 = vmatprep.subr.mxu0 0.0
        %1986 = vmatpush1.xpose.msra.mxu0 0.0
        %1987 = vmatprep.subr.mxu0 0.0
        %1988 = vmatpush1.xpose.msra.mxu0 0.0
        %1989 = vmatprep.subr.mxu0 0.0
        %1990 = vmatpush1.xpose.msra.mxu0 0.0
        %1991 = vmatprep.subr.mxu0 0.0
        %1992 = vmatpush1.xpose.msra.mxu0 0.0
        %1993 = vmatprep.subr.mxu0 0.0
        %1994 = vmatpush1.xpose.msra.mxu0 0.0
        %1995 = vmatprep.subr.mxu0 0.0
        %1996 = vmatpush1.xpose.msra.mxu0 0.0
        %1997 = vmatprep.mubr.f32.mxu0 0.0
        %1998 = vmatmul.mubr.f32.gmra.mrb[0].mxu0 %v1929
        %v1999 = vpop.f32.mrb[0].mxu0
        %v2000 = vadd.f32 0.0, %v1999
        %v2001 = vpop.f32.mrb[0].mxu0
        %2002 = vdwg.mxu0
        %2003 = vrot.lane.b32.xlu0 %v374, 112
        %v2004 = vpop.permute.xlu0 %2003
        %2005 = vrot.lane.b32.xlu0 %v374, 80
        %v2006 = vpop.permute.xlu0 %2005
        %v2007 = vsel %vm399, %v2004, 0
        %v2009 = vsel %vm399, %v2006, 0
        %2011 = vmatprep.subr.mxu0 0.0
        %2012 = vmatpush1.xpose.msra.mxu0 %v2009
        %2013 = vmatprep.subr.mxu0 0.0
        %2014 = vmatpush1.xpose.msra.mxu0 0.0
        %2015 = vmatprep.subr.mxu0 0.0
        %2016 = vmatpush1.xpose.msra.mxu0 0.0
        %2017 = vmatprep.subr.mxu0 0.0
        %2018 = vmatpush1.xpose.msra.mxu0 0.0
        %2019 = vmatprep.subr.mxu0 0.0
        %2020 = vmatpush1.xpose.msra.mxu0 0.0
        %2021 = vmatprep.subr.mxu0 0.0
        %2022 = vmatpush1.xpose.msra.mxu0 0.0
        %2023 = vmatprep.subr.mxu0 0.0
        %2024 = vmatpush1.xpose.msra.mxu0 0.0
        %2025 = vmatprep.subr.mxu0 0.0
        %2026 = vmatpush1.xpose.msra.mxu0 0.0
        %2027 = vmatprep.subr.mxu0 0.0
        %2028 = vmatpush1.xpose.msra.mxu0 0.0
        %2029 = vmatprep.subr.mxu0 0.0
        %2030 = vmatpush1.xpose.msra.mxu0 0.0
        %2031 = vmatprep.subr.mxu0 0.0
        %2032 = vmatpush1.xpose.msra.mxu0 0.0
        %2033 = vmatprep.subr.mxu0 0.0
        %2034 = vmatpush1.xpose.msra.mxu0 0.0
        %2035 = vmatprep.subr.mxu0 0.0
        %2036 = vmatpush1.xpose.msra.mxu0 0.0
        %2037 = vmatprep.subr.mxu0 0.0
        %2038 = vmatpush1.xpose.msra.mxu0 0.0
        %2039 = vmatprep.subr.mxu0 0.0
        %2040 = vmatpush1.xpose.msra.mxu0 0.0
        %2041 = vmatprep.subr.mxu0 0.0
        %2042 = vmatpush1.xpose.msra.mxu0 0.0
        %2043 = vmatprep.subr.mxu0 0.0
        %2044 = vmatpush1.xpose.msra.mxu0 0.0
        %2045 = vmatprep.subr.mxu0 0.0
        %2046 = vmatpush1.xpose.msra.mxu0 0.0
        %2047 = vmatprep.subr.mxu0 0.0
        %2048 = vmatpush1.xpose.msra.mxu0 0.0
        %2049 = vmatprep.subr.mxu0 0.0
        %2050 = vmatpush1.xpose.msra.mxu0 0.0
        %2051 = vmatprep.subr.mxu0 0.0
        %2052 = vmatpush1.xpose.msra.mxu0 0.0
        %2053 = vmatprep.subr.mxu0 0.0
        %2054 = vmatpush1.xpose.msra.mxu0 0.0
        %2055 = vmatprep.subr.mxu0 0.0
        %2056 = vmatpush1.xpose.msra.mxu0 0.0
        %2057 = vmatprep.subr.mxu0 0.0
        %2058 = vmatpush1.xpose.msra.mxu0 0.0
        %2059 = vmatprep.subr.mxu0 0.0
        %2060 = vmatpush1.xpose.msra.mxu0 0.0
        %2061 = vmatprep.subr.mxu0 0.0
        %2062 = vmatpush1.xpose.msra.mxu0 0.0
        %2063 = vmatprep.subr.mxu0 0.0
        %2064 = vmatpush1.xpose.msra.mxu0 0.0
        %2065 = vmatprep.subr.mxu0 0.0
        %2066 = vmatpush1.xpose.msra.mxu0 0.0
        %2067 = vmatprep.subr.mxu0 0.0
        %2068 = vmatpush1.xpose.msra.mxu0 0.0
        %2069 = vmatprep.subr.mxu0 0.0
        %2070 = vmatpush1.xpose.msra.mxu0 0.0
        %2071 = vmatprep.subr.mxu0 0.0
        %2072 = vmatpush1.xpose.msra.mxu0 0.0
        %2073 = vmatprep.subr.mxu0 0.0
        %2074 = vmatpush1.xpose.msra.mxu0 0.0
        %2075 = vmatprep.mubr.f32.mxu0 0.0
        %2076 = vmatmul.mubr.f32.gmra.mrb[0].mxu0 %v2007
        %v2077 = vpop.f32.mrb[0].mxu0
        %v2078 = vadd.f32 0.0, %v2077
        %v2079 = vpop.f32.mrb[0].mxu0
        %2080 = vdwg.mxu0
        %2081 = vrot.lane.b32.xlu0 %v379, 112
        %v2082 = vpop.permute.xlu0 %2081
        %2083 = vrot.lane.b32.xlu0 %v379, 80
        %v2084 = vpop.permute.xlu0 %2083
        %v2085 = vsel %vm399, %v2082, 0
        %v2087 = vsel %vm399, %v2084, 0
        %2089 = vmatprep.subr.mxu0 0.0
        %2090 = vmatpush1.xpose.msra.mxu0 %v2087
        %2091 = vmatprep.subr.mxu0 0.0
        %2092 = vmatpush1.xpose.msra.mxu0 0.0
        %2093 = vmatprep.subr.mxu0 0.0
        %2094 = vmatpush1.xpose.msra.mxu0 0.0
        %2095 = vmatprep.subr.mxu0 0.0
        %2096 = vmatpush1.xpose.msra.mxu0 0.0
        %2097 = vmatprep.subr.mxu0 0.0
        %2098 = vmatpush1.xpose.msra.mxu0 0.0
        %2099 = vmatprep.subr.mxu0 0.0
        %2100 = vmatpush1.xpose.msra.mxu0 0.0
        %2101 = vmatprep.subr.mxu0 0.0
        %2102 = vmatpush1.xpose.msra.mxu0 0.0
        %2103 = vmatprep.subr.mxu0 0.0
        %2104 = vmatpush1.xpose.msra.mxu0 0.0
        %2105 = vmatprep.subr.mxu0 0.0
        %2106 = vmatpush1.xpose.msra.mxu0 0.0
        %2107 = vmatprep.subr.mxu0 0.0
        %2108 = vmatpush1.xpose.msra.mxu0 0.0
        %2109 = vmatprep.subr.mxu0 0.0
        %2110 = vmatpush1.xpose.msra.mxu0 0.0
        %2111 = vmatprep.subr.mxu0 0.0
        %2112 = vmatpush1.xpose.msra.mxu0 0.0
        %2113 = vmatprep.subr.mxu0 0.0
        %2114 = vmatpush1.xpose.msra.mxu0 0.0
        %2115 = vmatprep.subr.mxu0 0.0
        %2116 = vmatpush1.xpose.msra.mxu0 0.0
        %2117 = vmatprep.subr.mxu0 0.0
        %2118 = vmatpush1.xpose.msra.mxu0 0.0
        %2119 = vmatprep.subr.mxu0 0.0
        %2120 = vmatpush1.xpose.msra.mxu0 0.0
        %2121 = vmatprep.subr.mxu0 0.0
        %2122 = vmatpush1.xpose.msra.mxu0 0.0
        %2123 = vmatprep.subr.mxu0 0.0
        %2124 = vmatpush1.xpose.msra.mxu0 0.0
        %2125 = vmatprep.subr.mxu0 0.0
        %2126 = vmatpush1.xpose.msra.mxu0 0.0
        %2127 = vmatprep.subr.mxu0 0.0
        %2128 = vmatpush1.xpose.msra.mxu0 0.0
        %2129 = vmatprep.subr.mxu0 0.0
        %2130 = vmatpush1.xpose.msra.mxu0 0.0
        %2131 = vmatprep.subr.mxu0 0.0
        %2132 = vmatpush1.xpose.msra.mxu0 0.0
        %2133 = vmatprep.subr.mxu0 0.0
        %2134 = vmatpush1.xpose.msra.mxu0 0.0
        %2135 = vmatprep.subr.mxu0 0.0
        %2136 = vmatpush1.xpose.msra.mxu0 0.0
        %2137 = vmatprep.subr.mxu0 0.0
        %2138 = vmatpush1.xpose.msra.mxu0 0.0
        %2139 = vmatprep.subr.mxu0 0.0
        %2140 = vmatpush1.xpose.msra.mxu0 0.0
        %2141 = vmatprep.subr.mxu0 0.0
        %2142 = vmatpush1.xpose.msra.mxu0 0.0
        %2143 = vmatprep.subr.mxu0 0.0
        %2144 = vmatpush1.xpose.msra.mxu0 0.0
        %2145 = vmatprep.subr.mxu0 0.0
        %2146 = vmatpush1.xpose.msra.mxu0 0.0
        %2147 = vmatprep.subr.mxu0 0.0
        %2148 = vmatpush1.xpose.msra.mxu0 0.0
        %2149 = vmatprep.subr.mxu0 0.0
        %2150 = vmatpush1.xpose.msra.mxu0 0.0
        %2151 = vmatprep.subr.mxu0 0.0
        %2152 = vmatpush1.xpose.msra.mxu0 0.0
        %2153 = vmatprep.mubr.f32.mxu0 0.0
        %2154 = vmatmul.mubr.f32.gmra.mrb[0].mxu0 %v2085
        %v2155 = vpop.f32.mrb[0].mxu0
        %v2156 = vadd.f32 0.0, %v2155
        %v2157 = vpop.f32.mrb[0].mxu0
        %2158 = vdwg.mxu0
        %2159 = vrot.lane.b32.xlu0 %v384, 112
        %v2160 = vpop.permute.xlu0 %2159
        %2161 = vrot.lane.b32.xlu0 %v384, 80
        %v2162 = vpop.permute.xlu0 %2161
        %v2163 = vsel %vm399, %v2160, 0
        %v2165 = vsel %vm399, %v2162, 0
        %2167 = vmatprep.subr.mxu0 0.0
        %2168 = vmatpush1.xpose.msra.mxu0 %v2165
        %2169 = vmatprep.subr.mxu0 0.0
        %2170 = vmatpush1.xpose.msra.mxu0 0.0
        %2171 = vmatprep.subr.mxu0 0.0
        %2172 = vmatpush1.xpose.msra.mxu0 0.0
        %2173 = vmatprep.subr.mxu0 0.0
        %2174 = vmatpush1.xpose.msra.mxu0 0.0
        %2175 = vmatprep.subr.mxu0 0.0
        %2176 = vmatpush1.xpose.msra.mxu0 0.0
        %2177 = vmatprep.subr.mxu0 0.0
        %2178 = vmatpush1.xpose.msra.mxu0 0.0
        %2179 = vmatprep.subr.mxu0 0.0
        %2180 = vmatpush1.xpose.msra.mxu0 0.0
        %2181 = vmatprep.subr.mxu0 0.0
        %2182 = vmatpush1.xpose.msra.mxu0 0.0
        %2183 = vmatprep.subr.mxu0 0.0
        %2184 = vmatpush1.xpose.msra.mxu0 0.0
        %2185 = vmatprep.subr.mxu0 0.0
        %2186 = vmatpush1.xpose.msra.mxu0 0.0
        %2187 = vmatprep.subr.mxu0 0.0
        %2188 = vmatpush1.xpose.msra.mxu0 0.0
        %2189 = vmatprep.subr.mxu0 0.0
        %2190 = vmatpush1.xpose.msra.mxu0 0.0
        %2191 = vmatprep.subr.mxu0 0.0
        %2192 = vmatpush1.xpose.msra.mxu0 0.0
        %2193 = vmatprep.subr.mxu0 0.0
        %2194 = vmatpush1.xpose.msra.mxu0 0.0
        %2195 = vmatprep.subr.mxu0 0.0
        %2196 = vmatpush1.xpose.msra.mxu0 0.0
        %2197 = vmatprep.subr.mxu0 0.0
        %2198 = vmatpush1.xpose.msra.mxu0 0.0
        %2199 = vmatprep.subr.mxu0 0.0
        %2200 = vmatpush1.xpose.msra.mxu0 0.0
        %2201 = vmatprep.subr.mxu0 0.0
        %2202 = vmatpush1.xpose.msra.mxu0 0.0
        %2203 = vmatprep.subr.mxu0 0.0
        %2204 = vmatpush1.xpose.msra.mxu0 0.0
        %2205 = vmatprep.subr.mxu0 0.0
        %2206 = vmatpush1.xpose.msra.mxu0 0.0
        %2207 = vmatprep.subr.mxu0 0.0
        %2208 = vmatpush1.xpose.msra.mxu0 0.0
        %2209 = vmatprep.subr.mxu0 0.0
        %2210 = vmatpush1.xpose.msra.mxu0 0.0
        %2211 = vmatprep.subr.mxu0 0.0
        %2212 = vmatpush1.xpose.msra.mxu0 0.0
        %2213 = vmatprep.subr.mxu0 0.0
        %2214 = vmatpush1.xpose.msra.mxu0 0.0
        %2215 = vmatprep.subr.mxu0 0.0
        %2216 = vmatpush1.xpose.msra.mxu0 0.0
        %2217 = vmatprep.subr.mxu0 0.0
        %2218 = vmatpush1.xpose.msra.mxu0 0.0
        %2219 = vmatprep.subr.mxu0 0.0
        %2220 = vmatpush1.xpose.msra.mxu0 0.0
        %2221 = vmatprep.subr.mxu0 0.0
        %2222 = vmatpush1.xpose.msra.mxu0 0.0
        %2223 = vmatprep.subr.mxu0 0.0
        %2224 = vmatpush1.xpose.msra.mxu0 0.0
        %2225 = vmatprep.subr.mxu0 0.0
        %2226 = vmatpush1.xpose.msra.mxu0 0.0
        %2227 = vmatprep.subr.mxu0 0.0
        %2228 = vmatpush1.xpose.msra.mxu0 0.0
        %2229 = vmatprep.subr.mxu0 0.0
        %2230 = vmatpush1.xpose.msra.mxu0 0.0
        %2231 = vmatprep.mubr.f32.mxu0 0.0
        %2232 = vmatmul.mubr.f32.gmra.mrb[0].mxu0 %v2163
        %v2233 = vpop.f32.mrb[0].mxu0
        %v2234 = vadd.f32 0.0, %v2233
        %v2235 = vpop.f32.mrb[0].mxu0
        %2236 = vdwg.mxu0
        %v2237 = vmul.f32 %v2000, 0.35355338
        %v2238 = vmul.f32 %v2078, 0.35355338
        %v2239 = vmul.f32 %v2156, 0.35355338
        %v2240 = vmul.f32 %v2234, 0.35355338
        %v2241 = vsel %vm399, %v2237, -inf
        %2242 = vmax.xlane.f32.xlu0 %v2241
        %v2243 = vpop.xlane.xlu0 %2242
        %v2244 = vsel %vm399, %v2238, -inf
        %2245 = vmax.xlane.f32.xlu0 %v2244
        %v2246 = vpop.xlane.xlu0 %2245
        %v2247 = vsel %vm399, %v2239, -inf
        %2248 = vmax.xlane.f32.xlu0 %v2247
        %v2249 = vpop.xlane.xlu0 %2248
        %v2250 = vsel %vm399, %v2240, -inf
        %2251 = vmax.xlane.f32.xlu0 %v2250
        %v2252 = vpop.xlane.xlu0 %2251
        %v2253 = vsub.f32 %v2237, %v2243
        %v2254 = vsub.f32 %v2238, %v2246
        %v2255 = vsub.f32 %v2239, %v2249
        %v2256 = vsub.f32 %v2240, %v2252
        %v2257 = vmul.f32 %v2253, 1.442695
        %v2258 = vpow.pop %v2257
        %v2259 = vmul.f32 %v2254, 1.442695
        %v2260 = vpow.pop %v2259
        %v2261 = vmul.f32 %v2255, 1.442695
        %v2262 = vpow.pop %v2261
        %v2263 = vmul.f32 %v2256, 1.442695
        %v2264 = vpow.pop %v2263
        %v2265 = vsel %vm734, %v2258, 0.0
        %v2266 = vsel %vm734, %v2260, 0.0
        %v2267 = vsel %vm734, %v2262, 0.0
        %v2268 = vsel %vm734, %v2264, 0.0
        %v2269 = vsel %vm399, %v2265, 0.0
        %2270 = vadd.xlane.f32.xlu0 %v2269
        %v2271 = vpop.xlane.xlu0 %2270
        %v2272 = vsel %vm399, %v2266, 0.0
        %2273 = vadd.xlane.f32.xlu0 %v2272
        %v2274 = vpop.xlane.xlu0 %2273
        %v2275 = vsel %vm399, %v2267, 0.0
        %2276 = vadd.xlane.f32.xlu0 %v2275
        %v2277 = vpop.xlane.xlu0 %2276
        %v2278 = vsel %vm399, %v2268, 0.0
        %2279 = vadd.xlane.f32.xlu0 %v2278
        %v2280 = vpop.xlane.xlu0 %2279
        %v2281 = vrcp.pop %v2271
        %v2282 = vmul.f32 %v2265, %v2281
        %v2283 = vrcp.pop %v2274
        %v2284 = vmul.f32 %v2266, %v2283
        %v2285 = vrcp.pop %v2277
        %v2286 = vmul.f32 %v2267, %v2285
        %v2287 = vrcp.pop %v2280
        %v2288 = vmul.f32 %v2268, %v2287
        %2289 = vrot.lane.b32.xlu0 %v369, 48
        %v2290 = vpop.permute.xlu0 %2289
        %v2293 = vsel %vm399, %v2282, 0
        %2295 = vmatprep.subr.mxu0 0.0
        %2296 = vmatpush1.msra.mxu0 %v2290
        %2297 = vmatprep.subr.mxu0 0.0
        %2298 = vmatpush1.msra.mxu0 0.0
        %2299 = vmatprep.subr.mxu0 0.0
        %2300 = vmatpush1.msra.mxu0 0.0
        %2301 = vmatprep.subr.mxu0 0.0
        %2302 = vmatpush1.msra.mxu0 0.0
        %2303 = vmatprep.subr.mxu0 0.0
        %2304 = vmatpush1.msra.mxu0 0.0
        %2305 = vmatprep.subr.mxu0 0.0
        %2306 = vmatpush1.msra.mxu0 0.0
        %2307 = vmatprep.subr.mxu0 0.0
        %2308 = vmatpush1.msra.mxu0 0.0
        %2309 = vmatprep.subr.mxu0 0.0
        %2310 = vmatpush1.msra.mxu0 0.0
        %2311 = vmatprep.subr.mxu0 0.0
        %2312 = vmatpush1.msra.mxu0 0.0
        %2313 = vmatprep.subr.mxu0 0.0
        %2314 = vmatpush1.msra.mxu0 0.0
        %2315 = vmatprep.subr.mxu0 0.0
        %2316 = vmatpush1.msra.mxu0 0.0
        %2317 = vmatprep.subr.mxu0 0.0
        %2318 = vmatpush1.msra.mxu0 0.0
        %2319 = vmatprep.subr.mxu0 0.0
        %2320 = vmatpush1.msra.mxu0 0.0
        %2321 = vmatprep.subr.mxu0 0.0
        %2322 = vmatpush1.msra.mxu0 0.0
        %2323 = vmatprep.subr.mxu0 0.0
        %2324 = vmatpush1.msra.mxu0 0.0
        %2325 = vmatprep.subr.mxu0 0.0
        %2326 = vmatpush1.msra.mxu0 0.0
        %2327 = vmatprep.subr.mxu0 0.0
        %2328 = vmatpush1.msra.mxu0 0.0
        %2329 = vmatprep.subr.mxu0 0.0
        %2330 = vmatpush1.msra.mxu0 0.0
        %2331 = vmatprep.subr.mxu0 0.0
        %2332 = vmatpush1.msra.mxu0 0.0
        %2333 = vmatprep.subr.mxu0 0.0
        %2334 = vmatpush1.msra.mxu0 0.0
        %2335 = vmatprep.subr.mxu0 0.0
        %2336 = vmatpush1.msra.mxu0 0.0
        %2337 = vmatprep.subr.mxu0 0.0
        %2338 = vmatpush1.msra.mxu0 0.0
        %2339 = vmatprep.subr.mxu0 0.0
        %2340 = vmatpush1.msra.mxu0 0.0
        %2341 = vmatprep.subr.mxu0 0.0
        %2342 = vmatpush1.msra.mxu0 0.0
        %2343 = vmatprep.subr.mxu0 0.0
        %2344 = vmatpush1.msra.mxu0 0.0
        %2345 = vmatprep.subr.mxu0 0.0
        %2346 = vmatpush1.msra.mxu0 0.0
        %2347 = vmatprep.subr.mxu0 0.0
        %2348 = vmatpush1.msra.mxu0 0.0
        %2349 = vmatprep.subr.mxu0 0.0
        %2350 = vmatpush1.msra.mxu0 0.0
        %2351 = vmatprep.subr.mxu0 0.0
        %2352 = vmatpush1.msra.mxu0 0.0
        %2353 = vmatprep.subr.mxu0 0.0
        %2354 = vmatpush1.msra.mxu0 0.0
        %2355 = vmatprep.subr.mxu0 0.0
        %2356 = vmatpush1.msra.mxu0 0.0
        %2357 = vmatprep.subr.mxu0 0.0
        %2358 = vmatpush1.msra.mxu0 0.0
        %2359 = vmatprep.mubr.f32.mxu0 0.0
        %2360 = vmatmul.mubr.f32.gmra.mrb[0].mxu0 %v2293
        %v2361 = vpop.f32.mrb[0].mxu0
        %v2362 = vadd.f32 0.0, %v2361
        %v2363 = vpop.f32.mrb[0].mxu0
        %2364 = vdwg.mxu0
        %2365 = vrot.lane.b32.xlu0 %v374, 48
        %v2366 = vpop.permute.xlu0 %2365
        %v2369 = vsel %vm399, %v2284, 0
        %2371 = vmatprep.subr.mxu0 0.0
        %2372 = vmatpush1.msra.mxu0 %v2366
        %2373 = vmatprep.subr.mxu0 0.0
        %2374 = vmatpush1.msra.mxu0 0.0
        %2375 = vmatprep.subr.mxu0 0.0
        %2376 = vmatpush1.msra.mxu0 0.0
        %2377 = vmatprep.subr.mxu0 0.0
        %2378 = vmatpush1.msra.mxu0 0.0
        %2379 = vmatprep.subr.mxu0 0.0
        %2380 = vmatpush1.msra.mxu0 0.0
        %2381 = vmatprep.subr.mxu0 0.0
        %2382 = vmatpush1.msra.mxu0 0.0
        %2383 = vmatprep.subr.mxu0 0.0
        %2384 = vmatpush1.msra.mxu0 0.0
        %2385 = vmatprep.subr.mxu0 0.0
        %2386 = vmatpush1.msra.mxu0 0.0
        %2387 = vmatprep.subr.mxu0 0.0
        %2388 = vmatpush1.msra.mxu0 0.0
        %2389 = vmatprep.subr.mxu0 0.0
        %2390 = vmatpush1.msra.mxu0 0.0
        %2391 = vmatprep.subr.mxu0 0.0
        %2392 = vmatpush1.msra.mxu0 0.0
        %2393 = vmatprep.subr.mxu0 0.0
        %2394 = vmatpush1.msra.mxu0 0.0
        %2395 = vmatprep.subr.mxu0 0.0
        %2396 = vmatpush1.msra.mxu0 0.0
        %2397 = vmatprep.subr.mxu0 0.0
        %2398 = vmatpush1.msra.mxu0 0.0
        %2399 = vmatprep.subr.mxu0 0.0
        %2400 = vmatpush1.msra.mxu0 0.0
        %2401 = vmatprep.subr.mxu0 0.0
        %2402 = vmatpush1.msra.mxu0 0.0
        %2403 = vmatprep.subr.mxu0 0.0
        %2404 = vmatpush1.msra.mxu0 0.0
        %2405 = vmatprep.subr.mxu0 0.0
        %2406 = vmatpush1.msra.mxu0 0.0
        %2407 = vmatprep.subr.mxu0 0.0
        %2408 = vmatpush1.msra.mxu0 0.0
        %2409 = vmatprep.subr.mxu0 0.0
        %2410 = vmatpush1.msra.mxu0 0.0
        %2411 = vmatprep.subr.mxu0 0.0
        %2412 = vmatpush1.msra.mxu0 0.0
        %2413 = vmatprep.subr.mxu0 0.0
        %2414 = vmatpush1.msra.mxu0 0.0
        %2415 = vmatprep.subr.mxu0 0.0
        %2416 = vmatpush1.msra.mxu0 0.0
        %2417 = vmatprep.subr.mxu0 0.0
        %2418 = vmatpush1.msra.mxu0 0.0
        %2419 = vmatprep.subr.mxu0 0.0
        %2420 = vmatpush1.msra.mxu0 0.0
        %2421 = vmatprep.subr.mxu0 0.0
        %2422 = vmatpush1.msra.mxu0 0.0
        %2423 = vmatprep.subr.mxu0 0.0
        %2424 = vmatpush1.msra.mxu0 0.0
        %2425 = vmatprep.subr.mxu0 0.0
        %2426 = vmatpush1.msra.mxu0 0.0
        %2427 = vmatprep.subr.mxu0 0.0
        %2428 = vmatpush1.msra.mxu0 0.0
        %2429 = vmatprep.subr.mxu0 0.0
        %2430 = vmatpush1.msra.mxu0 0.0
        %2431 = vmatprep.subr.mxu0 0.0
        %2432 = vmatpush1.msra.mxu0 0.0
        %2433 = vmatprep.subr.mxu0 0.0
        %2434 = vmatpush1.msra.mxu0 0.0
        %2435 = vmatprep.mubr.f32.mxu0 0.0
        %2436 = vmatmul.mubr.f32.gmra.mrb[0].mxu0 %v2369
        %v2437 = vpop.f32.mrb[0].mxu0
        %v2438 = vadd.f32 0.0, %v2437
        %v2439 = vpop.f32.mrb[0].mxu0
        %2440 = vdwg.mxu0
        %2441 = vrot.lane.b32.xlu0 %v379, 48
        %v2442 = vpop.permute.xlu0 %2441
        %v2445 = vsel %vm399, %v2286, 0
        %2447 = vmatprep.subr.mxu0 0.0
        %2448 = vmatpush1.msra.mxu0 %v2442
        %2449 = vmatprep.subr.mxu0 0.0
        %2450 = vmatpush1.msra.mxu0 0.0
        %2451 = vmatprep.subr.mxu0 0.0
        %2452 = vmatpush1.msra.mxu0 0.0
        %2453 = vmatprep.subr.mxu0 0.0
        %2454 = vmatpush1.msra.mxu0 0.0
        %2455 = vmatprep.subr.mxu0 0.0
        %2456 = vmatpush1.msra.mxu0 0.0
        %2457 = vmatprep.subr.mxu0 0.0
        %2458 = vmatpush1.msra.mxu0 0.0
        %2459 = vmatprep.subr.mxu0 0.0
        %2460 = vmatpush1.msra.mxu0 0.0
        %2461 = vmatprep.subr.mxu0 0.0
        %2462 = vmatpush1.msra.mxu0 0.0
        %2463 = vmatprep.subr.mxu0 0.0
        %2464 = vmatpush1.msra.mxu0 0.0
        %2465 = vmatprep.subr.mxu0 0.0
        %2466 = vmatpush1.msra.mxu0 0.0
        %2467 = vmatprep.subr.mxu0 0.0
        %2468 = vmatpush1.msra.mxu0 0.0
        %2469 = vmatprep.subr.mxu0 0.0
        %2470 = vmatpush1.msra.mxu0 0.0
        %2471 = vmatprep.subr.mxu0 0.0
        %2472 = vmatpush1.msra.mxu0 0.0
        %2473 = vmatprep.subr.mxu0 0.0
        %2474 = vmatpush1.msra.mxu0 0.0
        %2475 = vmatprep.subr.mxu0 0.0
        %2476 = vmatpush1.msra.mxu0 0.0
        %2477 = vmatprep.subr.mxu0 0.0
        %2478 = vmatpush1.msra.mxu0 0.0
        %2479 = vmatprep.subr.mxu0 0.0
        %2480 = vmatpush1.msra.mxu0 0.0
        %2481 = vmatprep.subr.mxu0 0.0
        %2482 = vmatpush1.msra.mxu0 0.0
        %2483 = vmatprep.subr.mxu0 0.0
        %2484 = vmatpush1.msra.mxu0 0.0
        %2485 = vmatprep.subr.mxu0 0.0
        %2486 = vmatpush1.msra.mxu0 0.0
        %2487 = vmatprep.subr.mxu0 0.0
        %2488 = vmatpush1.msra.mxu0 0.0
        %2489 = vmatprep.subr.mxu0 0.0
        %2490 = vmatpush1.msra.mxu0 0.0
        %2491 = vmatprep.subr.mxu0 0.0
        %2492 = vmatpush1.msra.mxu0 0.0
        %2493 = vmatprep.subr.mxu0 0.0
        %2494 = vmatpush1.msra.mxu0 0.0
        %2495 = vmatprep.subr.mxu0 0.0
        %2496 = vmatpush1.msra.mxu0 0.0
        %2497 = vmatprep.subr.mxu0 0.0
        %2498 = vmatpush1.msra.mxu0 0.0
        %2499 = vmatprep.subr.mxu0 0.0
        %2500 = vmatpush1.msra.mxu0 0.0
        %2501 = vmatprep.subr.mxu0 0.0
        %2502 = vmatpush1.msra.mxu0 0.0
        %2503 = vmatprep.subr.mxu0 0.0
        %2504 = vmatpush1.msra.mxu0 0.0
        %2505 = vmatprep.subr.mxu0 0.0
        %2506 = vmatpush1.msra.mxu0 0.0
        %2507 = vmatprep.subr.mxu0 0.0
        %2508 = vmatpush1.msra.mxu0 0.0
        %2509 = vmatprep.subr.mxu0 0.0
        %2510 = vmatpush1.msra.mxu0 0.0
        %2511 = vmatprep.mubr.f32.mxu0 0.0
        %2512 = vmatmul.mubr.f32.gmra.mrb[0].mxu0 %v2445
        %v2513 = vpop.f32.mrb[0].mxu0
        %v2514 = vadd.f32 0.0, %v2513
        %v2515 = vpop.f32.mrb[0].mxu0
        %2516 = vdwg.mxu0
        %2517 = vrot.lane.b32.xlu0 %v384, 48
        %v2518 = vpop.permute.xlu0 %2517
        %v2521 = vsel %vm399, %v2288, 0
        %2523 = vmatprep.subr.mxu0 0.0
        %2524 = vmatpush1.msra.mxu0 %v2518
        %2525 = vmatprep.subr.mxu0 0.0
        %2526 = vmatpush1.msra.mxu0 0.0
        %2527 = vmatprep.subr.mxu0 0.0
        %2528 = vmatpush1.msra.mxu0 0.0
        %2529 = vmatprep.subr.mxu0 0.0
        %2530 = vmatpush1.msra.mxu0 0.0
        %2531 = vmatprep.subr.mxu0 0.0
        %2532 = vmatpush1.msra.mxu0 0.0
        %2533 = vmatprep.subr.mxu0 0.0
        %2534 = vmatpush1.msra.mxu0 0.0
        %2535 = vmatprep.subr.mxu0 0.0
        %2536 = vmatpush1.msra.mxu0 0.0
        %2537 = vmatprep.subr.mxu0 0.0
        %2538 = vmatpush1.msra.mxu0 0.0
        %2539 = vmatprep.subr.mxu0 0.0
        %2540 = vmatpush1.msra.mxu0 0.0
        %2541 = vmatprep.subr.mxu0 0.0
        %2542 = vmatpush1.msra.mxu0 0.0
        %2543 = vmatprep.subr.mxu0 0.0
        %2544 = vmatpush1.msra.mxu0 0.0
        %2545 = vmatprep.subr.mxu0 0.0
        %2546 = vmatpush1.msra.mxu0 0.0
        %2547 = vmatprep.subr.mxu0 0.0
        %2548 = vmatpush1.msra.mxu0 0.0
        %2549 = vmatprep.subr.mxu0 0.0
        %2550 = vmatpush1.msra.mxu0 0.0
        %2551 = vmatprep.subr.mxu0 0.0
        %2552 = vmatpush1.msra.mxu0 0.0
        %2553 = vmatprep.subr.mxu0 0.0
        %2554 = vmatpush1.msra.mxu0 0.0
        %2555 = vmatprep.subr.mxu0 0.0
        %2556 = vmatpush1.msra.mxu0 0.0
        %2557 = vmatprep.subr.mxu0 0.0
        %2558 = vmatpush1.msra.mxu0 0.0
        %2559 = vmatprep.subr.mxu0 0.0
        %2560 = vmatpush1.msra.mxu0 0.0
        %2561 = vmatprep.subr.mxu0 0.0
        %2562 = vmatpush1.msra.mxu0 0.0
        %2563 = vmatprep.subr.mxu0 0.0
        %2564 = vmatpush1.msra.mxu0 0.0
        %2565 = vmatprep.subr.mxu0 0.0
        %2566 = vmatpush1.msra.mxu0 0.0
        %2567 = vmatprep.subr.mxu0 0.0
        %2568 = vmatpush1.msra.mxu0 0.0
        %2569 = vmatprep.subr.mxu0 0.0
        %2570 = vmatpush1.msra.mxu0 0.0
        %2571 = vmatprep.subr.mxu0 0.0
        %2572 = vmatpush1.msra.mxu0 0.0
        %2573 = vmatprep.subr.mxu0 0.0
        %2574 = vmatpush1.msra.mxu0 0.0
        %2575 = vmatprep.subr.mxu0 0.0
        %2576 = vmatpush1.msra.mxu0 0.0
        %2577 = vmatprep.subr.mxu0 0.0
        %2578 = vmatpush1.msra.mxu0 0.0
        %2579 = vmatprep.subr.mxu0 0.0
        %2580 = vmatpush1.msra.mxu0 0.0
        %2581 = vmatprep.subr.mxu0 0.0
        %2582 = vmatpush1.msra.mxu0 0.0
        %2583 = vmatprep.subr.mxu0 0.0
        %2584 = vmatpush1.msra.mxu0 0.0
        %2585 = vmatprep.subr.mxu0 0.0
        %2586 = vmatpush1.msra.mxu0 0.0
        %2587 = vmatprep.mubr.f32.mxu0 0.0
        %2588 = vmatmul.mubr.f32.gmra.mrb[0].mxu0 %v2521
        %v2589 = vpop.f32.mrb[0].mxu0
        %v2590 = vadd.f32 0.0, %v2589
        %v2591 = vpop.f32.mrb[0].mxu0
        %2592 = vdwg.mxu0
        %v2594 = vsel %vm399, %v2362, 0
        %v2597 = vsel %vm399, %v2438, 0
        %v2600 = vsel %vm399, %v2514, 0
        %v2603 = vsel %vm399, %v2590, 0
        %2605 = vmatprep.subr.mxu0 0.0
        %2606 = vmatpush1.msra.mxu0 %v394
        %2607 = vmatprep.subr.mxu0 0.0
        %2608 = vmatpush1.msra.mxu0 0.0
        %2609 = vmatprep.subr.mxu0 0.0
        %2610 = vmatpush1.msra.mxu0 0.0
        %2611 = vmatprep.subr.mxu0 0.0
        %2612 = vmatpush1.msra.mxu0 0.0
        %2613 = vmatprep.subr.mxu0 0.0
        %2614 = vmatpush1.msra.mxu0 0.0
        %2615 = vmatprep.subr.mxu0 0.0
        %2616 = vmatpush1.msra.mxu0 0.0
        %2617 = vmatprep.subr.mxu0 0.0
        %2618 = vmatpush1.msra.mxu0 0.0
        %2619 = vmatprep.subr.mxu0 0.0
        %2620 = vmatpush1.msra.mxu0 0.0
        %2621 = vmatprep.subr.mxu0 0.0
        %2622 = vmatpush1.msra.mxu0 0.0
        %2623 = vmatprep.subr.mxu0 0.0
        %2624 = vmatpush1.msra.mxu0 0.0
        %2625 = vmatprep.subr.mxu0 0.0
        %2626 = vmatpush1.msra.mxu0 0.0
        %2627 = vmatprep.subr.mxu0 0.0
        %2628 = vmatpush1.msra.mxu0 0.0
        %2629 = vmatprep.subr.mxu0 0.0
        %2630 = vmatpush1.msra.mxu0 0.0
        %2631 = vmatprep.subr.mxu0 0.0
        %2632 = vmatpush1.msra.mxu0 0.0
        %2633 = vmatprep.subr.mxu0 0.0
        %2634 = vmatpush1.msra.mxu0 0.0
        %2635 = vmatprep.subr.mxu0 0.0
        %2636 = vmatpush1.msra.mxu0 0.0
        %2637 = vmatprep.subr.mxu0 0.0
        %2638 = vmatpush1.msra.mxu0 0.0
        %2639 = vmatprep.subr.mxu0 0.0
        %2640 = vmatpush1.msra.mxu0 0.0
        %2641 = vmatprep.subr.mxu0 0.0
        %2642 = vmatpush1.msra.mxu0 0.0
        %2643 = vmatprep.subr.mxu0 0.0
        %2644 = vmatpush1.msra.mxu0 0.0
        %2645 = vmatprep.subr.mxu0 0.0
        %2646 = vmatpush1.msra.mxu0 0.0
        %2647 = vmatprep.subr.mxu0 0.0
        %2648 = vmatpush1.msra.mxu0 0.0
        %2649 = vmatprep.subr.mxu0 0.0
        %2650 = vmatpush1.msra.mxu0 0.0
        %2651 = vmatprep.subr.mxu0 0.0
        %2652 = vmatpush1.msra.mxu0 0.0
        %2653 = vmatprep.subr.mxu0 0.0
        %2654 = vmatpush1.msra.mxu0 0.0
        %2655 = vmatprep.subr.mxu0 0.0
        %2656 = vmatpush1.msra.mxu0 0.0
        %2657 = vmatprep.subr.mxu0 0.0
        %2658 = vmatpush1.msra.mxu0 0.0
        %2659 = vmatprep.subr.mxu0 0.0
        %2660 = vmatpush1.msra.mxu0 0.0
        %2661 = vmatprep.subr.mxu0 0.0
        %2662 = vmatpush1.msra.mxu0 0.0
        %2663 = vmatprep.subr.mxu0 0.0
        %2664 = vmatpush1.msra.mxu0 0.0
        %2665 = vmatprep.subr.mxu0 0.0
        %2666 = vmatpush1.msra.mxu0 0.0
        %2667 = vmatprep.subr.mxu0 0.0
        %2668 = vmatpush1.msra.mxu0 0.0
        %2669 = vmatprep.mubr.f32.mxu0 0.0
        %2670 = vmatmul.mubr.f32.gmra.mrb[0].mxu0 %v2594
        %v2671 = vpop.f32.mrb[0].mxu0
        %v2672 = vadd.f32 0.0, %v2671
        %v2673 = vpop.f32.mrb[0].mxu0
        %2674 = vmatprep.mubr.f32.mxu0 0.0
        %2675 = vmatmul.mubr.f32.gmra.mrb[0].mxu0 %v2597
        %v2676 = vpop.f32.mrb[0].mxu0
        %v2677 = vadd.f32 0.0, %v2676
        %v2678 = vpop.f32.mrb[0].mxu0
        %2679 = vmatprep.mubr.f32.mxu0 0.0
        %2680 = vmatmul.mubr.f32.gmra.mrb[0].mxu0 %v2600
        %v2681 = vpop.f32.mrb[0].mxu0
        %v2682 = vadd.f32 0.0, %v2681
        %v2683 = vpop.f32.mrb[0].mxu0
        %2684 = vmatprep.mubr.f32.mxu0 0.0
        %2685 = vmatmul.mubr.f32.gmra.mrb[0].mxu0 %v2603
        %v2686 = vpop.f32.mrb[0].mxu0
        %v2687 = vadd.f32 0.0, %v2686
        %v2688 = vpop.f32.mrb[0].mxu0
        %2689 = vdwg.mxu0
        %v2690 = vadd.f32 %v1907, %v2672
        %v2691 = vadd.f32 %v1912, %v2677
        %v2692 = vadd.f32 %v1917, %v2682
        %v2693 = vadd.f32 %v1922, %v2687
        %2694 = vrot.lane.b32.xlu0 %v369, 104
        %v2695 = vpop.permute.xlu0 %2694
        %2696 = vrot.lane.b32.xlu0 %v369, 72
        %v2697 = vpop.permute.xlu0 %2696
        %v2698 = vsel %vm399, %v2695, 0
        %v2700 = vsel %vm399, %v2697, 0
        %2702 = vmatprep.subr.mxu0 0.0
        %2703 = vmatpush1.xpose.msra.mxu0 %v2700
        %2704 = vmatprep.subr.mxu0 0.0
        %2705 = vmatpush1.xpose.msra.mxu0 0.0
        %2706 = vmatprep.subr.mxu0 0.0
        %2707 = vmatpush1.xpose.msra.mxu0 0.0
        %2708 = vmatprep.subr.mxu0 0.0
        %2709 = vmatpush1.xpose.msra.mxu0 0.0
        %2710 = vmatprep.subr.mxu0 0.0
        %2711 = vmatpush1.xpose.msra.mxu0 0.0
        %2712 = vmatprep.subr.mxu0 0.0
        %2713 = vmatpush1.xpose.msra.mxu0 0.0
        %2714 = vmatprep.subr.mxu0 0.0
        %2715 = vmatpush1.xpose.msra.mxu0 0.0
        %2716 = vmatprep.subr.mxu0 0.0
        %2717 = vmatpush1.xpose.msra.mxu0 0.0
        %2718 = vmatprep.subr.mxu0 0.0
        %2719 = vmatpush1.xpose.msra.mxu0 0.0
        %2720 = vmatprep.subr.mxu0 0.0
        %2721 = vmatpush1.xpose.msra.mxu0 0.0
        %2722 = vmatprep.subr.mxu0 0.0
        %2723 = vmatpush1.xpose.msra.mxu0 0.0
        %2724 = vmatprep.subr.mxu0 0.0
        %2725 = vmatpush1.xpose.msra.mxu0 0.0
        %2726 = vmatprep.subr.mxu0 0.0
        %2727 = vmatpush1.xpose.msra.mxu0 0.0
        %2728 = vmatprep.subr.mxu0 0.0
        %2729 = vmatpush1.xpose.msra.mxu0 0.0
        %2730 = vmatprep.subr.mxu0 0.0
        %2731 = vmatpush1.xpose.msra.mxu0 0.0
        %2732 = vmatprep.subr.mxu0 0.0
        %2733 = vmatpush1.xpose.msra.mxu0 0.0
        %2734 = vmatprep.subr.mxu0 0.0
        %2735 = vmatpush1.xpose.msra.mxu0 0.0
        %2736 = vmatprep.subr.mxu0 0.0
        %2737 = vmatpush1.xpose.msra.mxu0 0.0
        %2738 = vmatprep.subr.mxu0 0.0
        %2739 = vmatpush1.xpose.msra.mxu0 0.0
        %2740 = vmatprep.subr.mxu0 0.0
        %2741 = vmatpush1.xpose.msra.mxu0 0.0
        %2742 = vmatprep.subr.mxu0 0.0
        %2743 = vmatpush1.xpose.msra.mxu0 0.0
        %2744 = vmatprep.subr.mxu0 0.0
        %2745 = vmatpush1.xpose.msra.mxu0 0.0
        %2746 = vmatprep.subr.mxu0 0.0
        %2747 = vmatpush1.xpose.msra.mxu0 0.0
        %2748 = vmatprep.subr.mxu0 0.0
        %2749 = vmatpush1.xpose.msra.mxu0 0.0
        %2750 = vmatprep.subr.mxu0 0.0
        %2751 = vmatpush1.xpose.msra.mxu0 0.0
        %2752 = vmatprep.subr.mxu0 0.0
        %2753 = vmatpush1.xpose.msra.mxu0 0.0
        %2754 = vmatprep.subr.mxu0 0.0
        %2755 = vmatpush1.xpose.msra.mxu0 0.0
        %2756 = vmatprep.subr.mxu0 0.0
        %2757 = vmatpush1.xpose.msra.mxu0 0.0
        %2758 = vmatprep.subr.mxu0 0.0
        %2759 = vmatpush1.xpose.msra.mxu0 0.0
        %2760 = vmatprep.subr.mxu0 0.0
        %2761 = vmatpush1.xpose.msra.mxu0 0.0
        %2762 = vmatprep.subr.mxu0 0.0
        %2763 = vmatpush1.xpose.msra.mxu0 0.0
        %2764 = vmatprep.subr.mxu0 0.0
        %2765 = vmatpush1.xpose.msra.mxu0 0.0
        %2766 = vmatprep.mubr.f32.mxu0 0.0
        %2767 = vmatmul.mubr.f32.gmra.mrb[0].mxu0 %v2698
        %v2768 = vpop.f32.mrb[0].mxu0
        %v2769 = vadd.f32 0.0, %v2768
        %v2770 = vpop.f32.mrb[0].mxu0
        %2771 = vdwg.mxu0
        %2772 = vrot.lane.b32.xlu0 %v374, 104
        %v2773 = vpop.permute.xlu0 %2772
        %2774 = vrot.lane.b32.xlu0 %v374, 72
        %v2775 = vpop.permute.xlu0 %2774
        %v2776 = vsel %vm399, %v2773, 0
        %v2778 = vsel %vm399, %v2775, 0
        %2780 = vmatprep.subr.mxu0 0.0
        %2781 = vmatpush1.xpose.msra.mxu0 %v2778
        %2782 = vmatprep.subr.mxu0 0.0
        %2783 = vmatpush1.xpose.msra.mxu0 0.0
        %2784 = vmatprep.subr.mxu0 0.0
        %2785 = vmatpush1.xpose.msra.mxu0 0.0
        %2786 = vmatprep.subr.mxu0 0.0
        %2787 = vmatpush1.xpose.msra.mxu0 0.0
        %2788 = vmatprep.subr.mxu0 0.0
        %2789 = vmatpush1.xpose.msra.mxu0 0.0
        %2790 = vmatprep.subr.mxu0 0.0
        %2791 = vmatpush1.xpose.msra.mxu0 0.0
        %2792 = vmatprep.subr.mxu0 0.0
        %2793 = vmatpush1.xpose.msra.mxu0 0.0
        %2794 = vmatprep.subr.mxu0 0.0
        %2795 = vmatpush1.xpose.msra.mxu0 0.0
        %2796 = vmatprep.subr.mxu0 0.0
        %2797 = vmatpush1.xpose.msra.mxu0 0.0
        %2798 = vmatprep.subr.mxu0 0.0
        %2799 = vmatpush1.xpose.msra.mxu0 0.0
        %2800 = vmatprep.subr.mxu0 0.0
        %2801 = vmatpush1.xpose.msra.mxu0 0.0
        %2802 = vmatprep.subr.mxu0 0.0
        %2803 = vmatpush1.xpose.msra.mxu0 0.0
        %2804 = vmatprep.subr.mxu0 0.0
        %2805 = vmatpush1.xpose.msra.mxu0 0.0
        %2806 = vmatprep.subr.mxu0 0.0
        %2807 = vmatpush1.xpose.msra.mxu0 0.0
        %2808 = vmatprep.subr.mxu0 0.0
        %2809 = vmatpush1.xpose.msra.mxu0 0.0
        %2810 = vmatprep.subr.mxu0 0.0
        %2811 = vmatpush1.xpose.msra.mxu0 0.0
        %2812 = vmatprep.subr.mxu0 0.0
        %2813 = vmatpush1.xpose.msra.mxu0 0.0
        %2814 = vmatprep.subr.mxu0 0.0
        %2815 = vmatpush1.xpose.msra.mxu0 0.0
        %2816 = vmatprep.subr.mxu0 0.0
        %2817 = vmatpush1.xpose.msra.mxu0 0.0
        %2818 = vmatprep.subr.mxu0 0.0
        %2819 = vmatpush1.xpose.msra.mxu0 0.0
        %2820 = vmatprep.subr.mxu0 0.0
        %2821 = vmatpush1.xpose.msra.mxu0 0.0
        %2822 = vmatprep.subr.mxu0 0.0
        %2823 = vmatpush1.xpose.msra.mxu0 0.0
        %2824 = vmatprep.subr.mxu0 0.0
        %2825 = vmatpush1.xpose.msra.mxu0 0.0
        %2826 = vmatprep.subr.mxu0 0.0
        %2827 = vmatpush1.xpose.msra.mxu0 0.0
        %2828 = vmatprep.subr.mxu0 0.0
        %2829 = vmatpush1.xpose.msra.mxu0 0.0
        %2830 = vmatprep.subr.mxu0 0.0
        %2831 = vmatpush1.xpose.msra.mxu0 0.0
        %2832 = vmatprep.subr.mxu0 0.0
        %2833 = vmatpush1.xpose.msra.mxu0 0.0
        %2834 = vmatprep.subr.mxu0 0.0
        %2835 = vmatpush1.xpose.msra.mxu0 0.0
        %2836 = vmatprep.subr.mxu0 0.0
        %2837 = vmatpush1.xpose.msra.mxu0 0.0
        %2838 = vmatprep.subr.mxu0 0.0
        %2839 = vmatpush1.xpose.msra.mxu0 0.0
        %2840 = vmatprep.subr.mxu0 0.0
        %2841 = vmatpush1.xpose.msra.mxu0 0.0
        %2842 = vmatprep.subr.mxu0 0.0
        %2843 = vmatpush1.xpose.msra.mxu0 0.0
        %2844 = vmatprep.mubr.f32.mxu0 0.0
        %2845 = vmatmul.mubr.f32.gmra.mrb[0].mxu0 %v2776
        %v2846 = vpop.f32.mrb[0].mxu0
        %v2847 = vadd.f32 0.0, %v2846
        %v2848 = vpop.f32.mrb[0].mxu0
        %2849 = vdwg.mxu0
        %2850 = vrot.lane.b32.xlu0 %v379, 104
        %v2851 = vpop.permute.xlu0 %2850
        %2852 = vrot.lane.b32.xlu0 %v379, 72
        %v2853 = vpop.permute.xlu0 %2852
        %v2854 = vsel %vm399, %v2851, 0
        %v2856 = vsel %vm399, %v2853, 0
        %2858 = vmatprep.subr.mxu0 0.0
        %2859 = vmatpush1.xpose.msra.mxu0 %v2856
        %2860 = vmatprep.subr.mxu0 0.0
        %2861 = vmatpush1.xpose.msra.mxu0 0.0
        %2862 = vmatprep.subr.mxu0 0.0
        %2863 = vmatpush1.xpose.msra.mxu0 0.0
        %2864 = vmatprep.subr.mxu0 0.0
        %2865 = vmatpush1.xpose.msra.mxu0 0.0
        %2866 = vmatprep.subr.mxu0 0.0
        %2867 = vmatpush1.xpose.msra.mxu0 0.0
        %2868 = vmatprep.subr.mxu0 0.0
        %2869 = vmatpush1.xpose.msra.mxu0 0.0
        %2870 = vmatprep.subr.mxu0 0.0
        %2871 = vmatpush1.xpose.msra.mxu0 0.0
        %2872 = vmatprep.subr.mxu0 0.0
        %2873 = vmatpush1.xpose.msra.mxu0 0.0
        %2874 = vmatprep.subr.mxu0 0.0
        %2875 = vmatpush1.xpose.msra.mxu0 0.0
        %2876 = vmatprep.subr.mxu0 0.0
        %2877 = vmatpush1.xpose.msra.mxu0 0.0
        %2878 = vmatprep.subr.mxu0 0.0
        %2879 = vmatpush1.xpose.msra.mxu0 0.0
        %2880 = vmatprep.subr.mxu0 0.0
        %2881 = vmatpush1.xpose.msra.mxu0 0.0
        %2882 = vmatprep.subr.mxu0 0.0
        %2883 = vmatpush1.xpose.msra.mxu0 0.0
        %2884 = vmatprep.subr.mxu0 0.0
        %2885 = vmatpush1.xpose.msra.mxu0 0.0
        %2886 = vmatprep.subr.mxu0 0.0
        %2887 = vmatpush1.xpose.msra.mxu0 0.0
        %2888 = vmatprep.subr.mxu0 0.0
        %2889 = vmatpush1.xpose.msra.mxu0 0.0
        %2890 = vmatprep.subr.mxu0 0.0
        %2891 = vmatpush1.xpose.msra.mxu0 0.0
        %2892 = vmatprep.subr.mxu0 0.0
        %2893 = vmatpush1.xpose.msra.mxu0 0.0
        %2894 = vmatprep.subr.mxu0 0.0
        %2895 = vmatpush1.xpose.msra.mxu0 0.0
        %2896 = vmatprep.subr.mxu0 0.0
        %2897 = vmatpush1.xpose.msra.mxu0 0.0
        %2898 = vmatprep.subr.mxu0 0.0
        %2899 = vmatpush1.xpose.msra.mxu0 0.0
        %2900 = vmatprep.subr.mxu0 0.0
        %2901 = vmatpush1.xpose.msra.mxu0 0.0
        %2902 = vmatprep.subr.mxu0 0.0
        %2903 = vmatpush1.xpose.msra.mxu0 0.0
        %2904 = vmatprep.subr.mxu0 0.0
        %2905 = vmatpush1.xpose.msra.mxu0 0.0
        %2906 = vmatprep.subr.mxu0 0.0
        %2907 = vmatpush1.xpose.msra.mxu0 0.0
        %2908 = vmatprep.subr.mxu0 0.0
        %2909 = vmatpush1.xpose.msra.mxu0 0.0
        %2910 = vmatprep.subr.mxu0 0.0
        %2911 = vmatpush1.xpose.msra.mxu0 0.0
        %2912 = vmatprep.subr.mxu0 0.0
        %2913 = vmatpush1.xpose.msra.mxu0 0.0
        %2914 = vmatprep.subr.mxu0 0.0
        %2915 = vmatpush1.xpose.msra.mxu0 0.0
        %2916 = vmatprep.subr.mxu0 0.0
        %2917 = vmatpush1.xpose.msra.mxu0 0.0
        %2918 = vmatprep.subr.mxu0 0.0
        %2919 = vmatpush1.xpose.msra.mxu0 0.0
        %2920 = vmatprep.subr.mxu0 0.0
        %2921 = vmatpush1.xpose.msra.mxu0 0.0
        %2922 = vmatprep.mubr.f32.mxu0 0.0
        %2923 = vmatmul.mubr.f32.gmra.mrb[0].mxu0 %v2854
        %v2924 = vpop.f32.mrb[0].mxu0
        %v2925 = vadd.f32 0.0, %v2924
        %v2926 = vpop.f32.mrb[0].mxu0
        %2927 = vdwg.mxu0
        %2928 = vrot.lane.b32.xlu0 %v384, 104
        %v2929 = vpop.permute.xlu0 %2928
        %2930 = vrot.lane.b32.xlu0 %v384, 72
        %v2931 = vpop.permute.xlu0 %2930
        %v2932 = vsel %vm399, %v2929, 0
        %v2934 = vsel %vm399, %v2931, 0
        %2936 = vmatprep.subr.mxu0 0.0
        %2937 = vmatpush1.xpose.msra.mxu0 %v2934
        %2938 = vmatprep.subr.mxu0 0.0
        %2939 = vmatpush1.xpose.msra.mxu0 0.0
        %2940 = vmatprep.subr.mxu0 0.0
        %2941 = vmatpush1.xpose.msra.mxu0 0.0
        %2942 = vmatprep.subr.mxu0 0.0
        %2943 = vmatpush1.xpose.msra.mxu0 0.0
        %2944 = vmatprep.subr.mxu0 0.0
        %2945 = vmatpush1.xpose.msra.mxu0 0.0
        %2946 = vmatprep.subr.mxu0 0.0
        %2947 = vmatpush1.xpose.msra.mxu0 0.0
        %2948 = vmatprep.subr.mxu0 0.0
        %2949 = vmatpush1.xpose.msra.mxu0 0.0
        %2950 = vmatprep.subr.mxu0 0.0
        %2951 = vmatpush1.xpose.msra.mxu0 0.0
        %2952 = vmatprep.subr.mxu0 0.0
        %2953 = vmatpush1.xpose.msra.mxu0 0.0
        %2954 = vmatprep.subr.mxu0 0.0
        %2955 = vmatpush1.xpose.msra.mxu0 0.0
        %2956 = vmatprep.subr.mxu0 0.0
        %2957 = vmatpush1.xpose.msra.mxu0 0.0
        %2958 = vmatprep.subr.mxu0 0.0
        %2959 = vmatpush1.xpose.msra.mxu0 0.0
        %2960 = vmatprep.subr.mxu0 0.0
        %2961 = vmatpush1.xpose.msra.mxu0 0.0
        %2962 = vmatprep.subr.mxu0 0.0
        %2963 = vmatpush1.xpose.msra.mxu0 0.0
        %2964 = vmatprep.subr.mxu0 0.0
        %2965 = vmatpush1.xpose.msra.mxu0 0.0
        %2966 = vmatprep.subr.mxu0 0.0
        %2967 = vmatpush1.xpose.msra.mxu0 0.0
        %2968 = vmatprep.subr.mxu0 0.0
        %2969 = vmatpush1.xpose.msra.mxu0 0.0
        %2970 = vmatprep.subr.mxu0 0.0
        %2971 = vmatpush1.xpose.msra.mxu0 0.0
        %2972 = vmatprep.subr.mxu0 0.0
        %2973 = vmatpush1.xpose.msra.mxu0 0.0
        %2974 = vmatprep.subr.mxu0 0.0
        %2975 = vmatpush1.xpose.msra.mxu0 0.0
        %2976 = vmatprep.subr.mxu0 0.0
        %2977 = vmatpush1.xpose.msra.mxu0 0.0
        %2978 = vmatprep.subr.mxu0 0.0
        %2979 = vmatpush1.xpose.msra.mxu0 0.0
        %2980 = vmatprep.subr.mxu0 0.0
        %2981 = vmatpush1.xpose.msra.mxu0 0.0
        %2982 = vmatprep.subr.mxu0 0.0
        %2983 = vmatpush1.xpose.msra.mxu0 0.0
        %2984 = vmatprep.subr.mxu0 0.0
        %2985 = vmatpush1.xpose.msra.mxu0 0.0
        %2986 = vmatprep.subr.mxu0 0.0
        %2987 = vmatpush1.xpose.msra.mxu0 0.0
        %2988 = vmatprep.subr.mxu0 0.0
        %2989 = vmatpush1.xpose.msra.mxu0 0.0
        %2990 = vmatprep.subr.mxu0 0.0
        %2991 = vmatpush1.xpose.msra.mxu0 0.0
        %2992 = vmatprep.subr.mxu0 0.0
        %2993 = vmatpush1.xpose.msra.mxu0 0.0
        %2994 = vmatprep.subr.mxu0 0.0
        %2995 = vmatpush1.xpose.msra.mxu0 0.0
        %2996 = vmatprep.subr.mxu0 0.0
        %2997 = vmatpush1.xpose.msra.mxu0 0.0
        %2998 = vmatprep.subr.mxu0 0.0
        %2999 = vmatpush1.xpose.msra.mxu0 0.0
        %3000 = vmatprep.mubr.f32.mxu0 0.0
        %3001 = vmatmul.mubr.f32.gmra.mrb[0].mxu0 %v2932
        %v3002 = vpop.f32.mrb[0].mxu0
        %v3003 = vadd.f32 0.0, %v3002
        %v3004 = vpop.f32.mrb[0].mxu0
        %3005 = vdwg.mxu0
        %v3006 = vmul.f32 %v2769, 0.35355338
        %v3007 = vmul.f32 %v2847, 0.35355338
        %v3008 = vmul.f32 %v2925, 0.35355338
        %v3009 = vmul.f32 %v3003, 0.35355338
        %v3010 = vsel %vm399, %v3006, -inf
        %3011 = vmax.xlane.f32.xlu0 %v3010
        %v3012 = vpop.xlane.xlu0 %3011
        %v3013 = vsel %vm399, %v3007, -inf
        %3014 = vmax.xlane.f32.xlu0 %v3013
        %v3015 = vpop.xlane.xlu0 %3014
        %v3016 = vsel %vm399, %v3008, -inf
        %3017 = vmax.xlane.f32.xlu0 %v3016
        %v3018 = vpop.xlane.xlu0 %3017
        %v3019 = vsel %vm399, %v3009, -inf
        %3020 = vmax.xlane.f32.xlu0 %v3019
        %v3021 = vpop.xlane.xlu0 %3020
        %v3022 = vsub.f32 %v3006, %v3012
        %v3023 = vsub.f32 %v3007, %v3015
        %v3024 = vsub.f32 %v3008, %v3018
        %v3025 = vsub.f32 %v3009, %v3021
        %v3026 = vmul.f32 %v3022, 1.442695
        %v3027 = vpow.pop %v3026
        %v3028 = vmul.f32 %v3023, 1.442695
        %v3029 = vpow.pop %v3028
        %v3030 = vmul.f32 %v3024, 1.442695
        %v3031 = vpow.pop %v3030
        %v3032 = vmul.f32 %v3025, 1.442695
        %v3033 = vpow.pop %v3032
        %v3034 = vsel %vm734, %v3027, 0.0
        %v3035 = vsel %vm734, %v3029, 0.0
        %v3036 = vsel %vm734, %v3031, 0.0
        %v3037 = vsel %vm734, %v3033, 0.0
        %v3038 = vsel %vm399, %v3034, 0.0
        %3039 = vadd.xlane.f32.xlu0 %v3038
        %v3040 = vpop.xlane.xlu0 %3039
        %v3041 = vsel %vm399, %v3035, 0.0
        %3042 = vadd.xlane.f32.xlu0 %v3041
        %v3043 = vpop.xlane.xlu0 %3042
        %v3044 = vsel %vm399, %v3036, 0.0
        %3045 = vadd.xlane.f32.xlu0 %v3044
        %v3046 = vpop.xlane.xlu0 %3045
        %v3047 = vsel %vm399, %v3037, 0.0
        %3048 = vadd.xlane.f32.xlu0 %v3047
        %v3049 = vpop.xlane.xlu0 %3048
        %v3050 = vrcp.pop %v3040
        %v3051 = vmul.f32 %v3034, %v3050
        %v3052 = vrcp.pop %v3043
        %v3053 = vmul.f32 %v3035, %v3052
        %v3054 = vrcp.pop %v3046
        %v3055 = vmul.f32 %v3036, %v3054
        %v3056 = vrcp.pop %v3049
        %v3057 = vmul.f32 %v3037, %v3056
        %3058 = vrot.lane.b32.xlu0 %v369, 40
        %v3059 = vpop.permute.xlu0 %3058
        %v3062 = vsel %vm399, %v3051, 0
        %3064 = vmatprep.subr.mxu0 0.0
        %3065 = vmatpush1.msra.mxu0 %v3059
        %3066 = vmatprep.subr.mxu0 0.0
        %3067 = vmatpush1.msra.mxu0 0.0
        %3068 = vmatprep.subr.mxu0 0.0
        %3069 = vmatpush1.msra.mxu0 0.0
        %3070 = vmatprep.subr.mxu0 0.0
        %3071 = vmatpush1.msra.mxu0 0.0
        %3072 = vmatprep.subr.mxu0 0.0
        %3073 = vmatpush1.msra.mxu0 0.0
        %3074 = vmatprep.subr.mxu0 0.0
        %3075 = vmatpush1.msra.mxu0 0.0
        %3076 = vmatprep.subr.mxu0 0.0
        %3077 = vmatpush1.msra.mxu0 0.0
        %3078 = vmatprep.subr.mxu0 0.0
        %3079 = vmatpush1.msra.mxu0 0.0
        %3080 = vmatprep.subr.mxu0 0.0
        %3081 = vmatpush1.msra.mxu0 0.0
        %3082 = vmatprep.subr.mxu0 0.0
        %3083 = vmatpush1.msra.mxu0 0.0
        %3084 = vmatprep.subr.mxu0 0.0
        %3085 = vmatpush1.msra.mxu0 0.0
        %3086 = vmatprep.subr.mxu0 0.0
        %3087 = vmatpush1.msra.mxu0 0.0
        %3088 = vmatprep.subr.mxu0 0.0
        %3089 = vmatpush1.msra.mxu0 0.0
        %3090 = vmatprep.subr.mxu0 0.0
        %3091 = vmatpush1.msra.mxu0 0.0
        %3092 = vmatprep.subr.mxu0 0.0
        %3093 = vmatpush1.msra.mxu0 0.0
        %3094 = vmatprep.subr.mxu0 0.0
        %3095 = vmatpush1.msra.mxu0 0.0
        %3096 = vmatprep.subr.mxu0 0.0
        %3097 = vmatpush1.msra.mxu0 0.0
        %3098 = vmatprep.subr.mxu0 0.0
        %3099 = vmatpush1.msra.mxu0 0.0
        %3100 = vmatprep.subr.mxu0 0.0
        %3101 = vmatpush1.msra.mxu0 0.0
        %3102 = vmatprep.subr.mxu0 0.0
        %3103 = vmatpush1.msra.mxu0 0.0
        %3104 = vmatprep.subr.mxu0 0.0
        %3105 = vmatpush1.msra.mxu0 0.0
        %3106 = vmatprep.subr.mxu0 0.0
        %3107 = vmatpush1.msra.mxu0 0.0
        %3108 = vmatprep.subr.mxu0 0.0
        %3109 = vmatpush1.msra.mxu0 0.0
        %3110 = vmatprep.subr.mxu0 0.0
        %3111 = vmatpush1.msra.mxu0 0.0
        %3112 = vmatprep.subr.mxu0 0.0
        %3113 = vmatpush1.msra.mxu0 0.0
        %3114 = vmatprep.subr.mxu0 0.0
        %3115 = vmatpush1.msra.mxu0 0.0
        %3116 = vmatprep.subr.mxu0 0.0
        %3117 = vmatpush1.msra.mxu0 0.0
        %3118 = vmatprep.subr.mxu0 0.0
        %3119 = vmatpush1.msra.mxu0 0.0
        %3120 = vmatprep.subr.mxu0 0.0
        %3121 = vmatpush1.msra.mxu0 0.0
        %3122 = vmatprep.subr.mxu0 0.0
        %3123 = vmatpush1.msra.mxu0 0.0
        %3124 = vmatprep.subr.mxu0 0.0
        %3125 = vmatpush1.msra.mxu0 0.0
        %3126 = vmatprep.subr.mxu0 0.0
        %3127 = vmatpush1.msra.mxu0 0.0
        %3128 = vmatprep.mubr.f32.mxu0 0.0
        %3129 = vmatmul.mubr.f32.gmra.mrb[0].mxu0 %v3062
        %v3130 = vpop.f32.mrb[0].mxu0
        %v3131 = vadd.f32 0.0, %v3130
        %v3132 = vpop.f32.mrb[0].mxu0
        %3133 = vdwg.mxu0
        %3134 = vrot.lane.b32.xlu0 %v374, 40
        %v3135 = vpop.permute.xlu0 %3134
        %v3138 = vsel %vm399, %v3053, 0
        %3140 = vmatprep.subr.mxu0 0.0
        %3141 = vmatpush1.msra.mxu0 %v3135
        %3142 = vmatprep.subr.mxu0 0.0
        %3143 = vmatpush1.msra.mxu0 0.0
        %3144 = vmatprep.subr.mxu0 0.0
        %3145 = vmatpush1.msra.mxu0 0.0
        %3146 = vmatprep.subr.mxu0 0.0
        %3147 = vmatpush1.msra.mxu0 0.0
        %3148 = vmatprep.subr.mxu0 0.0
        %3149 = vmatpush1.msra.mxu0 0.0
        %3150 = vmatprep.subr.mxu0 0.0
        %3151 = vmatpush1.msra.mxu0 0.0
        %3152 = vmatprep.subr.mxu0 0.0
        %3153 = vmatpush1.msra.mxu0 0.0
        %3154 = vmatprep.subr.mxu0 0.0
        %3155 = vmatpush1.msra.mxu0 0.0
        %3156 = vmatprep.subr.mxu0 0.0
        %3157 = vmatpush1.msra.mxu0 0.0
        %3158 = vmatprep.subr.mxu0 0.0
        %3159 = vmatpush1.msra.mxu0 0.0
        %3160 = vmatprep.subr.mxu0 0.0
        %3161 = vmatpush1.msra.mxu0 0.0
        %3162 = vmatprep.subr.mxu0 0.0
        %3163 = vmatpush1.msra.mxu0 0.0
        %3164 = vmatprep.subr.mxu0 0.0
        %3165 = vmatpush1.msra.mxu0 0.0
        %3166 = vmatprep.subr.mxu0 0.0
        %3167 = vmatpush1.msra.mxu0 0.0
        %3168 = vmatprep.subr.mxu0 0.0
        %3169 = vmatpush1.msra.mxu0 0.0
        %3170 = vmatprep.subr.mxu0 0.0
        %3171 = vmatpush1.msra.mxu0 0.0
        %3172 = vmatprep.subr.mxu0 0.0
        %3173 = vmatpush1.msra.mxu0 0.0
        %3174 = vmatprep.subr.mxu0 0.0
        %3175 = vmatpush1.msra.mxu0 0.0
        %3176 = vmatprep.subr.mxu0 0.0
        %3177 = vmatpush1.msra.mxu0 0.0
        %3178 = vmatprep.subr.mxu0 0.0
        %3179 = vmatpush1.msra.mxu0 0.0
        %3180 = vmatprep.subr.mxu0 0.0
        %3181 = vmatpush1.msra.mxu0 0.0
        %3182 = vmatprep.subr.mxu0 0.0
        %3183 = vmatpush1.msra.mxu0 0.0
        %3184 = vmatprep.subr.mxu0 0.0
        %3185 = vmatpush1.msra.mxu0 0.0
        %3186 = vmatprep.subr.mxu0 0.0
        %3187 = vmatpush1.msra.mxu0 0.0
        %3188 = vmatprep.subr.mxu0 0.0
        %3189 = vmatpush1.msra.mxu0 0.0
        %3190 = vmatprep.subr.mxu0 0.0
        %3191 = vmatpush1.msra.mxu0 0.0
        %3192 = vmatprep.subr.mxu0 0.0
        %3193 = vmatpush1.msra.mxu0 0.0
        %3194 = vmatprep.subr.mxu0 0.0
        %3195 = vmatpush1.msra.mxu0 0.0
        %3196 = vmatprep.subr.mxu0 0.0
        %3197 = vmatpush1.msra.mxu0 0.0
        %3198 = vmatprep.subr.mxu0 0.0
        %3199 = vmatpush1.msra.mxu0 0.0
        %3200 = vmatprep.subr.mxu0 0.0
        %3201 = vmatpush1.msra.mxu0 0.0
        %3202 = vmatprep.subr.mxu0 0.0
        %3203 = vmatpush1.msra.mxu0 0.0
        %3204 = vmatprep.mubr.f32.mxu0 0.0
        %3205 = vmatmul.mubr.f32.gmra.mrb[0].mxu0 %v3138
        %v3206 = vpop.f32.mrb[0].mxu0
        %v3207 = vadd.f32 0.0, %v3206
        %v3208 = vpop.f32.mrb[0].mxu0
        %3209 = vdwg.mxu0
        %3210 = vrot.lane.b32.xlu0 %v379, 40
        %v3211 = vpop.permute.xlu0 %3210
        %v3214 = vsel %vm399, %v3055, 0
        %3216 = vmatprep.subr.mxu0 0.0
        %3217 = vmatpush1.msra.mxu0 %v3211
        %3218 = vmatprep.subr.mxu0 0.0
        %3219 = vmatpush1.msra.mxu0 0.0
        %3220 = vmatprep.subr.mxu0 0.0
        %3221 = vmatpush1.msra.mxu0 0.0
        %3222 = vmatprep.subr.mxu0 0.0
        %3223 = vmatpush1.msra.mxu0 0.0
        %3224 = vmatprep.subr.mxu0 0.0
        %3225 = vmatpush1.msra.mxu0 0.0
        %3226 = vmatprep.subr.mxu0 0.0
        %3227 = vmatpush1.msra.mxu0 0.0
        %3228 = vmatprep.subr.mxu0 0.0
        %3229 = vmatpush1.msra.mxu0 0.0
        %3230 = vmatprep.subr.mxu0 0.0
        %3231 = vmatpush1.msra.mxu0 0.0
        %3232 = vmatprep.subr.mxu0 0.0
        %3233 = vmatpush1.msra.mxu0 0.0
        %3234 = vmatprep.subr.mxu0 0.0
        %3235 = vmatpush1.msra.mxu0 0.0
        %3236 = vmatprep.subr.mxu0 0.0
        %3237 = vmatpush1.msra.mxu0 0.0
        %3238 = vmatprep.subr.mxu0 0.0
        %3239 = vmatpush1.msra.mxu0 0.0
        %3240 = vmatprep.subr.mxu0 0.0
        %3241 = vmatpush1.msra.mxu0 0.0
        %3242 = vmatprep.subr.mxu0 0.0
        %3243 = vmatpush1.msra.mxu0 0.0
        %3244 = vmatprep.subr.mxu0 0.0
        %3245 = vmatpush1.msra.mxu0 0.0
        %3246 = vmatprep.subr.mxu0 0.0
        %3247 = vmatpush1.msra.mxu0 0.0
        %3248 = vmatprep.subr.mxu0 0.0
        %3249 = vmatpush1.msra.mxu0 0.0
        %3250 = vmatprep.subr.mxu0 0.0
        %3251 = vmatpush1.msra.mxu0 0.0
        %3252 = vmatprep.subr.mxu0 0.0
        %3253 = vmatpush1.msra.mxu0 0.0
        %3254 = vmatprep.subr.mxu0 0.0
        %3255 = vmatpush1.msra.mxu0 0.0
        %3256 = vmatprep.subr.mxu0 0.0
        %3257 = vmatpush1.msra.mxu0 0.0
        %3258 = vmatprep.subr.mxu0 0.0
        %3259 = vmatpush1.msra.mxu0 0.0
        %3260 = vmatprep.subr.mxu0 0.0
        %3261 = vmatpush1.msra.mxu0 0.0
        %3262 = vmatprep.subr.mxu0 0.0
        %3263 = vmatpush1.msra.mxu0 0.0
        %3264 = vmatprep.subr.mxu0 0.0
        %3265 = vmatpush1.msra.mxu0 0.0
        %3266 = vmatprep.subr.mxu0 0.0
        %3267 = vmatpush1.msra.mxu0 0.0
        %3268 = vmatprep.subr.mxu0 0.0
        %3269 = vmatpush1.msra.mxu0 0.0
        %3270 = vmatprep.subr.mxu0 0.0
        %3271 = vmatpush1.msra.mxu0 0.0
        %3272 = vmatprep.subr.mxu0 0.0
        %3273 = vmatpush1.msra.mxu0 0.0
        %3274 = vmatprep.subr.mxu0 0.0
        %3275 = vmatpush1.msra.mxu0 0.0
        %3276 = vmatprep.subr.mxu0 0.0
        %3277 = vmatpush1.msra.mxu0 0.0
        %3278 = vmatprep.subr.mxu0 0.0
        %3279 = vmatpush1.msra.mxu0 0.0
        %3280 = vmatprep.mubr.f32.mxu0 0.0
        %3281 = vmatmul.mubr.f32.gmra.mrb[0].mxu0 %v3214
        %v3282 = vpop.f32.mrb[0].mxu0
        %v3283 = vadd.f32 0.0, %v3282
        %v3284 = vpop.f32.mrb[0].mxu0
        %3285 = vdwg.mxu0
        %3286 = vrot.lane.b32.xlu0 %v384, 40
        %v3287 = vpop.permute.xlu0 %3286
        %v3290 = vsel %vm399, %v3057, 0
        %3292 = vmatprep.subr.mxu0 0.0
        %3293 = vmatpush1.msra.mxu0 %v3287
        %3294 = vmatprep.subr.mxu0 0.0
        %3295 = vmatpush1.msra.mxu0 0.0
        %3296 = vmatprep.subr.mxu0 0.0
        %3297 = vmatpush1.msra.mxu0 0.0
        %3298 = vmatprep.subr.mxu0 0.0
        %3299 = vmatpush1.msra.mxu0 0.0
        %3300 = vmatprep.subr.mxu0 0.0
        %3301 = vmatpush1.msra.mxu0 0.0
        %3302 = vmatprep.subr.mxu0 0.0
        %3303 = vmatpush1.msra.mxu0 0.0
        %3304 = vmatprep.subr.mxu0 0.0
        %3305 = vmatpush1.msra.mxu0 0.0
        %3306 = vmatprep.subr.mxu0 0.0
        %3307 = vmatpush1.msra.mxu0 0.0
        %3308 = vmatprep.subr.mxu0 0.0
        %3309 = vmatpush1.msra.mxu0 0.0
        %3310 = vmatprep.subr.mxu0 0.0
        %3311 = vmatpush1.msra.mxu0 0.0
        %3312 = vmatprep.subr.mxu0 0.0
        %3313 = vmatpush1.msra.mxu0 0.0
        %3314 = vmatprep.subr.mxu0 0.0
        %3315 = vmatpush1.msra.mxu0 0.0
        %3316 = vmatprep.subr.mxu0 0.0
        %3317 = vmatpush1.msra.mxu0 0.0
        %3318 = vmatprep.subr.mxu0 0.0
        %3319 = vmatpush1.msra.mxu0 0.0
        %3320 = vmatprep.subr.mxu0 0.0
        %3321 = vmatpush1.msra.mxu0 0.0
        %3322 = vmatprep.subr.mxu0 0.0
        %3323 = vmatpush1.msra.mxu0 0.0
        %3324 = vmatprep.subr.mxu0 0.0
        %3325 = vmatpush1.msra.mxu0 0.0
        %3326 = vmatprep.subr.mxu0 0.0
        %3327 = vmatpush1.msra.mxu0 0.0
        %3328 = vmatprep.subr.mxu0 0.0
        %3329 = vmatpush1.msra.mxu0 0.0
        %3330 = vmatprep.subr.mxu0 0.0
        %3331 = vmatpush1.msra.mxu0 0.0
        %3332 = vmatprep.subr.mxu0 0.0
        %3333 = vmatpush1.msra.mxu0 0.0
        %3334 = vmatprep.subr.mxu0 0.0
        %3335 = vmatpush1.msra.mxu0 0.0
        %3336 = vmatprep.subr.mxu0 0.0
        %3337 = vmatpush1.msra.mxu0 0.0
        %3338 = vmatprep.subr.mxu0 0.0
        %3339 = vmatpush1.msra.mxu0 0.0
        %3340 = vmatprep.subr.mxu0 0.0
        %3341 = vmatpush1.msra.mxu0 0.0
        %3342 = vmatprep.subr.mxu0 0.0
        %3343 = vmatpush1.msra.mxu0 0.0
        %3344 = vmatprep.subr.mxu0 0.0
        %3345 = vmatpush1.msra.mxu0 0.0
        %3346 = vmatprep.subr.mxu0 0.0
        %3347 = vmatpush1.msra.mxu0 0.0
        %3348 = vmatprep.subr.mxu0 0.0
        %3349 = vmatpush1.msra.mxu0 0.0
        %3350 = vmatprep.subr.mxu0 0.0
        %3351 = vmatpush1.msra.mxu0 0.0
        %3352 = vmatprep.subr.mxu0 0.0
        %3353 = vmatpush1.msra.mxu0 0.0
        %3354 = vmatprep.subr.mxu0 0.0
        %3355 = vmatpush1.msra.mxu0 0.0
        %3356 = vmatprep.mubr.f32.mxu0 0.0
        %3357 = vmatmul.mubr.f32.gmra.mrb[0].mxu0 %v3290
        %v3358 = vpop.f32.mrb[0].mxu0
        %v3359 = vadd.f32 0.0, %v3358
        %v3360 = vpop.f32.mrb[0].mxu0
        %3361 = vdwg.mxu0
        %v3363 = vsel %vm399, %v3131, 0
        %v3366 = vsel %vm399, %v3207, 0
        %v3369 = vsel %vm399, %v3283, 0
        %v3372 = vsel %vm399, %v3359, 0
        %3374 = vmatprep.subr.mxu0 0.0
        %3375 = vmatpush1.msra.mxu0 %v395
        %3376 = vmatprep.subr.mxu0 0.0
        %3377 = vmatpush1.msra.mxu0 0.0
        %3378 = vmatprep.subr.mxu0 0.0
        %3379 = vmatpush1.msra.mxu0 0.0
        %3380 = vmatprep.subr.mxu0 0.0
        %3381 = vmatpush1.msra.mxu0 0.0
        %3382 = vmatprep.subr.mxu0 0.0
        %3383 = vmatpush1.msra.mxu0 0.0
        %3384 = vmatprep.subr.mxu0 0.0
        %3385 = vmatpush1.msra.mxu0 0.0
        %3386 = vmatprep.subr.mxu0 0.0
        %3387 = vmatpush1.msra.mxu0 0.0
        %3388 = vmatprep.subr.mxu0 0.0
        %3389 = vmatpush1.msra.mxu0 0.0
        %3390 = vmatprep.subr.mxu0 0.0
        %3391 = vmatpush1.msra.mxu0 0.0
        %3392 = vmatprep.subr.mxu0 0.0
        %3393 = vmatpush1.msra.mxu0 0.0
        %3394 = vmatprep.subr.mxu0 0.0
        %3395 = vmatpush1.msra.mxu0 0.0
        %3396 = vmatprep.subr.mxu0 0.0
        %3397 = vmatpush1.msra.mxu0 0.0
        %3398 = vmatprep.subr.mxu0 0.0
        %3399 = vmatpush1.msra.mxu0 0.0
        %3400 = vmatprep.subr.mxu0 0.0
        %3401 = vmatpush1.msra.mxu0 0.0
        %3402 = vmatprep.subr.mxu0 0.0
        %3403 = vmatpush1.msra.mxu0 0.0
        %3404 = vmatprep.subr.mxu0 0.0
        %3405 = vmatpush1.msra.mxu0 0.0
        %3406 = vmatprep.subr.mxu0 0.0
        %3407 = vmatpush1.msra.mxu0 0.0
        %3408 = vmatprep.subr.mxu0 0.0
        %3409 = vmatpush1.msra.mxu0 0.0
        %3410 = vmatprep.subr.mxu0 0.0
        %3411 = vmatpush1.msra.mxu0 0.0
        %3412 = vmatprep.subr.mxu0 0.0
        %3413 = vmatpush1.msra.mxu0 0.0
        %3414 = vmatprep.subr.mxu0 0.0
        %3415 = vmatpush1.msra.mxu0 0.0
        %3416 = vmatprep.subr.mxu0 0.0
        %3417 = vmatpush1.msra.mxu0 0.0
        %3418 = vmatprep.subr.mxu0 0.0
        %3419 = vmatpush1.msra.mxu0 0.0
        %3420 = vmatprep.subr.mxu0 0.0
        %3421 = vmatpush1.msra.mxu0 0.0
        %3422 = vmatprep.subr.mxu0 0.0
        %3423 = vmatpush1.msra.mxu0 0.0
        %3424 = vmatprep.subr.mxu0 0.0
        %3425 = vmatpush1.msra.mxu0 0.0
        %3426 = vmatprep.subr.mxu0 0.0
        %3427 = vmatpush1.msra.mxu0 0.0
        %3428 = vmatprep.subr.mxu0 0.0
        %3429 = vmatpush1.msra.mxu0 0.0
        %3430 = vmatprep.subr.mxu0 0.0
        %3431 = vmatpush1.msra.mxu0 0.0
        %3432 = vmatprep.subr.mxu0 0.0
        %3433 = vmatpush1.msra.mxu0 0.0
        %3434 = vmatprep.subr.mxu0 0.0
        %3435 = vmatpush1.msra.mxu0 0.0
        %3436 = vmatprep.subr.mxu0 0.0
        %3437 = vmatpush1.msra.mxu0 0.0
        %3438 = vmatprep.mubr.f32.mxu0 0.0
        %3439 = vmatmul.mubr.f32.gmra.mrb[0].mxu0 %v3363
        %v3440 = vpop.f32.mrb[0].mxu0
        %v3441 = vadd.f32 0.0, %v3440
        %v3442 = vpop.f32.mrb[0].mxu0
        %3443 = vmatprep.mubr.f32.mxu0 0.0
        %3444 = vmatmul.mubr.f32.gmra.mrb[0].mxu0 %v3366
        %v3445 = vpop.f32.mrb[0].mxu0
        %v3446 = vadd.f32 0.0, %v3445
        %v3447 = vpop.f32.mrb[0].mxu0
        %3448 = vmatprep.mubr.f32.mxu0 0.0
        %3449 = vmatmul.mubr.f32.gmra.mrb[0].mxu0 %v3369
        %v3450 = vpop.f32.mrb[0].mxu0
        %v3451 = vadd.f32 0.0, %v3450
        %v3452 = vpop.f32.mrb[0].mxu0
        %3453 = vmatprep.mubr.f32.mxu0 0.0
        %3454 = vmatmul.mubr.f32.gmra.mrb[0].mxu0 %v3372
        %v3455 = vpop.f32.mrb[0].mxu0
        %v3456 = vadd.f32 0.0, %v3455
        %v3457 = vpop.f32.mrb[0].mxu0
        %3458 = vdwg.mxu0
        %v3459 = vadd.f32 %v2690, %v3441
        %v3460 = vadd.f32 %v2691, %v3446
        %v3461 = vadd.f32 %v2692, %v3451
        %v3462 = vadd.f32 %v2693, %v3456
        %v3463 = vld [vmem:[%s4] sm:$0x1]
        %v3465 = vlaneseq
        %v3466 = vshrl.u32 %v3465, 7
        %v3467 = vsub.s32 0, %v3466
        %v3468 = vrot.slane %v3463, %v3467
        %v3470 = vadd.f32 %v3459, %v3468
        %v3471 = vadd.f32 %v3460, %v3468
        %v3472 = vadd.f32 %v3461, %v3468
        %v3473 = vadd.f32 %v3462, %v3468
        %3474 = vst.msk [vmem:[%s271] sm:$0xff] %vm289, %v3470
        %3475 = vst.msk [vmem:[%s271 + $0x8] sm:$0xff] %vm289, %v3471
        %3476 = vst.msk [vmem:[%s271 + $0x10] sm:$0xff] %vm289, %v3472
        %3477 = vst.msk [vmem:[%s271 + $0x18] sm:$0xff] %vm289, %v3473
        %s3478 = sand.u32 %s141, 1
        %s3479 = scalar_lea.sflag [#allocation4], %s3478
        %s3480 = sand.u32 %s141, 1
        %s3481 = smul.addr %s3480, 32
        %s3482 = scalar_lea.vmem [#allocation8], %s3481
        // Predicated region
        $region53: #{tpu_custom_call.1} parent=39 // pred_check
          %p3483 = pneg %p151
        $region54: #{tpu_custom_call.1} parent=39 // pred_check_branch
          %3485 = sbr.rel (%p3483) target = $region56
        $region55: #{tpu_custom_call.1} parent=39 // pred_region
          %s3486 = smul.u32 4, %s23
          %s3488 = ssub.s32 512, 512
          %3489 = vsyncadd %s3479, %s3488
          %s3490 = smul.addr %s3486, 128
          %s3491 = scalar_lea.hbm %s5, %s3490
          %s3492 = sshll.u32 %s3482, 4
          %s3493 = int_to_ptr.vmem [resolvable:$true] %s3492
          %3498 = dma.vmem_to_hbm [thread:$0]  %s3493, 512, %s3491, %s3479, 128, 128, 8
        $region56: #{tpu_custom_call.1} parent=39 // pred_fallthru
          _
      $region40: #{tpu_custom_call.1} parent=5 // pred_fallthru
        _
      %p3499 = scmp.le.s32.totalorder 2, %s18
      // Predicated region
      $region57: #{tpu_custom_call.1} parent=5 // pred_check
        %p3500 = pneg %p3499
      $region58: #{tpu_custom_call.1} parent=5 // pred_check_branch
        %3502 = sbr.rel (%p3500) target = $region60
      $region59: #{tpu_custom_call.1} parent=5 // pred_region
        %s3503 = ssub.s32 %s18, 2
        // Predicated region
        $region61: #{tpu_custom_call.1} parent=59 // pred_check
          %p3504 = pneg %p157
        $region62: #{tpu_custom_call.1} parent=59 // pred_check_branch
          %3506 = sbr.rel (%p3504) target = $region64
        $region63: #{tpu_custom_call.1} parent=59 // pred_region
          %s3507 = sand.u32 %s142, 1
          %s3508 = scalar_lea.sflag [#allocation4], %s3507
          %s3509 = sand.u32 %s142, 1
          %s3510 = smul.addr %s3509, 32
          %s3511 = scalar_lea.vmem [#allocation8], %s3510
          %3512 = dma.done %s3508, 512
        $region64: #{tpu_custom_call.1} parent=59 // pred_fallthru
          _
      $region60: #{tpu_custom_call.1} parent=5 // pred_fallthru
        _
    $region6: #{tpu_custom_call.1} parent=1 // loop_footer
      %s22 = sadd.s32 1, %s18
    $region7: #{tpu_custom_call.1} parent=1 // loop_footer_branch
      %17 = sbr.rel target = $region3
    $region8: #{tpu_custom_call.1} parent=1 // loop_exit
      _
    %3513 = vsyncpa [#allocation3], 1
    %s3514 = scalar_lea.sflag [#allocation3], 1
    %3515 = vsyncpa %s3514, 1
    %3516 = vsyncpa [#allocation6], 1
    %3517 = vsyncpa [#allocation4], 1
    %s3518 = scalar_lea.sflag [#allocation4], 1
    %3519 = vsyncpa %s3518, 1

</llo_original>
